<compile_context>
chip_gen: v7x
topology: tpu7x:2x2x1
jax: 0.10.0
libtpu: 0.0.40
codegen_flags: <defaults>
</compile_context>

<pallas_src>
import functools

import jax
import jax.numpy as jnp
from jax import lax
from jax.experimental import pallas as pl
from jax.experimental.pallas import tpu as pltpu


def _round_up(x, m):
    return (x + m - 1) // m * m


# --------------------------------------------------------------------------
# Kernel 1: HW = relu((A @ X) @ W1) @ W2
#   Row-tiled over nodes (parallel), K-tiled over the node-contraction axis
#   (arbitrary). f32 accumulator scratch; layer transforms in the epilogue only.
# --------------------------------------------------------------------------
def hw_kernel(a_ref, x_ref, w1_ref, w2_ref, o_ref, acc_ref):
    k = pl.program_id(1)

    @pl.when(k == 0)
    def _():
        acc_ref[...] = jnp.zeros_like(acc_ref)

    # Accumulate the aggregation A_tile @ X_k over the node-contraction axis.
    acc_ref[...] += jnp.dot(
        a_ref[...], x_ref[...], preferred_element_type=jnp.float32
    )

    @pl.when(k == pl.num_programs(1) - 1)
    def _():
        ax = acc_ref[...].astype(w1_ref.dtype)              # bf16 for MXU throughput
        h = jnp.maximum(
            jnp.dot(ax, w1_ref[...], preferred_element_type=jnp.float32), 0.0
        )
        # TODO(synk): training-mode dropout on h; eval mode (training=False) is identity.
        o_ref[...] = jnp.dot(
            h.astype(w2_ref.dtype), w2_ref[...], preferred_element_type=jnp.float32
        ).astype(o_ref.dtype)


# --------------------------------------------------------------------------
# Kernel 2: OUT = softmax(A @ HW)   (same tiling; mask + softmax in the epilogue)
# --------------------------------------------------------------------------
def softmax_kernel(a_ref, hw_ref, o_ref, acc_ref, *, y_dim):
    k = pl.program_id(1)

    @pl.when(k == 0)
    def _():
        acc_ref[...] = jnp.zeros_like(acc_ref)

    acc_ref[...] += jnp.dot(
        a_ref[...], hw_ref[...], preferred_element_type=jnp.float32
    )

    @pl.when(k == pl.num_programs(1) - 1)
    def _():
        logits = acc_ref[...]
        class_ok = lax.broadcasted_iota(jnp.int32, logits.shape, 1) < y_dim
        logits = jnp.where(class_ok, logits, -1e30)          # mask padded class lanes
        m = jnp.max(logits, axis=-1, keepdims=True)
        e = jnp.exp(logits - m)                               # padded lanes underflow to 0
        denom = jnp.sum(e, axis=-1, keepdims=True)
        o_ref[...] = e / denom                                # exact divide, once per row tile


# --------------------------------------------------------------------------
# Forward pass (expects already padded, bf16 operands)
# --------------------------------------------------------------------------
def classifier_forward(a_hat, x, w1, w2, *, num_nodes, y_dim, tm=256, tk=256):
    n_pad = a_hat.shape[0]
    x_pad_dim = x.shape[1]
    h_pad_dim = w1.shape[1]
    y_pad_dim = w2.shape[1]
    assert n_pad % tm == 0 and n_pad % tk == 0, "pad node axis to a multiple of tm/tk"
    grid = (n_pad // tm, n_pad // tk)

    cparams = pltpu.CompilerParams(
        dimension_semantics=("parallel", "arbitrary"),
        vmem_limit_bytes=32 * 1024 * 1024,
    )

    # (1) HW = relu((A @ X) @ W1) @ W2
    hw = pl.pallas_call(
        hw_kernel,
        out_shape=jax.ShapeDtypeStruct((n_pad, y_pad_dim), jnp.bfloat16),
        grid_spec=pltpu.PrefetchScalarGridSpec(
            num_scalar_prefetch=0,
            grid=grid,
            in_specs=[
                pl.BlockSpec((tm, tk), lambda i, k: (i, k)),                  # A stream
                pl.BlockSpec((tk, x_pad_dim), lambda i, k: (k, 0)),           # X stream
                pl.BlockSpec((x_pad_dim, h_pad_dim), lambda i, k: (0, 0)),    # W1 (invariant)
                pl.BlockSpec((h_pad_dim, y_pad_dim), lambda i, k: (0, 0)),    # W2 (invariant)
            ],
            out_specs=pl.BlockSpec((tm, y_pad_dim), lambda i, k: (i, 0)),
            scratch_shapes=[pltpu.VMEM((tm, x_pad_dim), jnp.float32)],
        ),
        compiler_params=cparams,
    )(a_hat, x, w1, w2)

    # (2) OUT = softmax(A @ HW)   (needs full HW -> natural barrier between calls)
    out = pl.pallas_call(
        functools.partial(softmax_kernel, y_dim=y_dim),
        out_shape=jax.ShapeDtypeStruct((n_pad, y_pad_dim), jnp.float32),
        grid_spec=pltpu.PrefetchScalarGridSpec(
            num_scalar_prefetch=0,
            grid=grid,
            in_specs=[
                pl.BlockSpec((tm, tk), lambda i, k: (i, k)),                  # A stream
                pl.BlockSpec((tk, y_pad_dim), lambda i, k: (k, 0)),           # HW stream
            ],
            out_specs=pl.BlockSpec((tm, y_pad_dim), lambda i, k: (i, 0)),
            scratch_shapes=[pltpu.VMEM((tm, y_pad_dim), jnp.float32)],
        ),
        compiler_params=cparams,
    )(a_hat, hw)

    return out[:num_nodes, :y_dim]


# --------------------------------------------------------------------------
# One-time graph preprocessing (hoisted out of the forward hot path)
# --------------------------------------------------------------------------
def gcn_normalized_adjacency(edge_index, num_nodes):
    """Dense PyG-style gcn_norm adjacency: messages flow src->dst (A[dst, src]),
    self-loops added only where missing, A_hat = D^{-1/2} (A + I_missing) D^{-1/2}."""
    src, dst = edge_index[0], edge_index[1]
    a = jnp.zeros((num_nodes, num_nodes), jnp.float32).at[dst, src].add(1.0)
    diag = jnp.diag(a)
    a = a + jnp.diag(jnp.where(diag > 0, 0.0, 1.0))
    deg = jnp.sum(a, axis=1)
    dinv = jnp.where(deg > 0, 1.0 / jnp.sqrt(deg), 0.0)
    return dinv[:, None] * a * dinv[None, :]


def pad_cast(x, rows, cols, dtype):
    out = jnp.zeros((rows, cols), dtype)
    return out.at[: x.shape[0], : x.shape[1]].set(x.astype(dtype))


def glorot(key, shape):
    fan_in, fan_out = shape
    limit = jnp.sqrt(6.0 / (fan_in + fan_out))
    return jax.random.uniform(key, shape, jnp.float32, -limit, limit)


# --------------------------------------------------------------------------
if __name__ == "__main__":
    # dims = [x_dim, h_dim, y_dim]; bias=False; dropout is identity in eval mode.
    N, X_DIM, H_DIM, Y_DIM, E = 8, 16, 32, 8, 16

    TM = TK = 256                       # 256-wide MXU-filling tiles (v6e/v7x sweet spot)
    N_PAD = 2 * TM                      # 2x2 grid -> exercises parallel + arbitrary axes
    X_PAD = _round_up(X_DIM, 128)
    H_PAD = _round_up(H_DIM, 128)
    Y_PAD = _round_up(Y_DIM, 128)       # lane-dense output, sliced back to Y_DIM

    key = jax.random.PRNGKey(0)
    kx, ke1, ke2, kw1, kw2 = jax.random.split(key, 5)

    x = jax.random.normal(kx, (N, X_DIM), jnp.float32)
    src = jax.random.randint(ke1, (E,), 0, N, jnp.int32)
    dst = jax.random.randint(ke2, (E,), 0, N, jnp.int32)
    edge_index = jnp.stack([src, dst], axis=0)            # [2, E]

    w1 = glorot(kw1, (X_DIM, H_DIM))                      # GCNConv(x_dim, h_dim) weight
    w2 = glorot(kw2, (H_DIM, Y_DIM))                      # GCNConv(h_dim, y_dim) weight

    # Precompute / pad / cast once per graph (bf16 halves DMA bytes for A).
    a_norm = gcn_normalized_adjacency(edge_index, N)      # f32, unpadded (for reference)
    a_hat_p = pad_cast(a_norm, N_PAD, N_PAD, jnp.bfloat16)
    x_p = pad_cast(x, N_PAD, X_PAD, jnp.bfloat16)
    w1_p = pad_cast(w1, X_PAD, H_PAD, jnp.bfloat16)
    w2_p = pad_cast(w2, H_PAD, Y_PAD, jnp.bfloat16)

    fwd = jax.jit(
        functools.partial(classifier_forward, num_nodes=N, y_dim=Y_DIM, tm=TM, tk=TK)
    )
    out = jax.block_until_ready(fwd(a_hat_p, x_p, w1_p, w2_p))

    # Pure-JAX f32 reference of the original module's forward (eval mode).
    h_ref = jax.nn.relu(a_norm @ (x @ w1))
    ref = jax.nn.softmax(a_norm @ (h_ref @ w2), axis=-1)

    assert out.shape == (N, Y_DIM)
    assert jnp.allclose(jnp.sum(out, axis=-1), 1.0, atol=1e-3)   # exact divide in epilogue
    assert jnp.max(jnp.abs(out - ref)) < 0.05                    # bf16 operands tolerance
    print("KERNEL_OK")
</pallas_src>

<mosaic_0001>
module attributes {stable_mosaic.version = 11 : i64} {
  func.func @softmax_kernel(%arg0: i32, %arg1: i32, %arg2: memref<256x256xbf16, #tpu.memory_space<vmem>>, %arg3: memref<256x128xbf16, #tpu.memory_space<vmem>>, %arg4: memref<256x128xf32, #tpu.memory_space<vmem>>, %arg5: memref<256x128xf32, #tpu.memory_space<vmem>>) attributes {dimension_semantics = [#tpu.dimension_semantics<parallel>, #tpu.dimension_semantics<arbitrary>], iteration_bounds = array<i64: 2, 2>, scalar_prefetch = 0 : i64, scratch_operands = 1 : i64, tpu.core_type = #tpu.core_type<tc>, window_params = [{transform_indices = @transform_0, window_bounds = array<i64: 256, 256>}, {transform_indices = @transform_1, window_bounds = array<i64: 256, 128>}, {transform_indices = @transform_2, window_bounds = array<i64: 256, 128>}]} {
    %c0_i32 = arith.constant 0 : i32
    %0 = arith.cmpi eq, %arg1, %c0_i32 : i32
    %1 = arith.extui %0 : i1 to i32
    %c0_i32_0 = arith.constant 0 : i32
    %2 = arith.cmpi ne, %1, %c0_i32_0 : i32
    scf.if %2 {
      %cst_9 = arith.constant 0.000000e+00 : f32
      %12 = vector.broadcast %cst_9 : f32 to vector<256x128xf32>
      %c0_10 = arith.constant 0 : index
      %c0_11 = arith.constant 0 : index
      %13 = vector.load %arg5[%c0_10, %c0_11] : memref<256x128xf32, #tpu.memory_space<vmem>>, vector<256x128xf32>
      tpu.vector_store %arg5[%c0_10, %c0_11], %12 {strides = array<i32>} : memref<256x128xf32, #tpu.memory_space<vmem>>, vector<256x128xf32>,
    } else {
    }
    %c0 = arith.constant 0 : index
    %c0_1 = arith.constant 0 : index
    %3 = vector.load %arg5[%c0, %c0_1] : memref<256x128xf32, #tpu.memory_space<vmem>>, vector<256x128xf32>
    %c0_2 = arith.constant 0 : index
    %c0_3 = arith.constant 0 : index
    %4 = vector.load %arg2[%c0_2, %c0_3] : memref<256x256xbf16, #tpu.memory_space<vmem>>, vector<256x256xbf16>
    %c0_4 = arith.constant 0 : index
    %c0_5 = arith.constant 0 : index
    %5 = vector.load %arg3[%c0_4, %c0_5] : memref<256x128xbf16, #tpu.memory_space<vmem>>, vector<256x128xbf16>
    %cst = arith.constant dense<0.000000e+00> : vector<256x128xf32>
    %6 = tpu.matmul %4, %5, %cst {dimension_numbers = #tpu.dot_dimension_numbers<[1], [0], [0], [1], [0, 0, 1, 1], [], []>} : vector<256x256xbf16>, vector<256x128xbf16>, vector<256x128xf32> -> vector<256x128xf32>
    %7 = arith.addf %3, %6 : vector<256x128xf32>
    %c0_6 = arith.constant 0 : index
    %c0_7 = arith.constant 0 : index
    %8 = vector.load %arg5[%c0_6, %c0_7] : memref<256x128xf32, #tpu.memory_space<vmem>>, vector<256x128xf32>
    tpu.vector_store %arg5[%c0_6, %c0_7], %7 {strides = array<i32>} : memref<256x128xf32, #tpu.memory_space<vmem>>, vector<256x128xf32>,
    %c1_i32 = arith.constant 1 : i32
    %9 = arith.cmpi eq, %arg1, %c1_i32 : i32
    %10 = arith.extui %9 : i1 to i32
    %c0_i32_8 = arith.constant 0 : i32
    %11 = arith.cmpi ne, %10, %c0_i32_8 : i32
    scf.if %11 {
      %c0_9 = arith.constant 0 : index
      %c0_10 = arith.constant 0 : index
      %12 = vector.load %arg5[%c0_9, %c0_10] : memref<256x128xf32, #tpu.memory_space<vmem>>, vector<256x128xf32>
      %13 = tpu.iota {dimensions = array<i32: 1>} : vector<256x128xi32>
      %c8_i32 = arith.constant 8 : i32
      %14 = vector.broadcast %c8_i32 : i32 to vector<256x128xi32>
      %15 = arith.cmpi slt, %13, %14 : vector<256x128xi32>
      %cst_11 = arith.constant -1.000000e+30 : f32
      %16 = vector.broadcast %cst_11 : f32 to vector<256x128xf32>
      %17 = arith.select %15, %12, %16 : vector<256x128xi1>, vector<256x128xf32>
      %cst_12 = arith.constant dense<0xFF800000> : vector<256xf32>
      %18 = vector.multi_reduction <maximumf>, %17, %cst_12 [1] : vector<256x128xf32> to vector<256xf32>
      %19 = vector.shape_cast %18 : vector<256xf32> to vector<256x1xf32>
      %20 = vector.broadcast %19 : vector<256x1xf32> to vector<256x128xf32>
      %21 = arith.subf %17, %20 : vector<256x128xf32>
      %22 = math.exp %21 : vector<256x128xf32>
      %cst_13 = arith.constant dense<0.000000e+00> : vector<256xf32>
      %23 = vector.multi_reduction <add>, %22, %cst_13 [1] : vector<256x128xf32> to vector<256xf32>
      %24 = vector.shape_cast %23 : vector<256xf32> to vector<256x1xf32>
      %25 = vector.broadcast %24 : vector<256x1xf32> to vector<256x128xf32>
      %26 = arith.divf %22, %25 : vector<256x128xf32>
      %c0_14 = arith.constant 0 : index
      %c0_15 = arith.constant 0 : index
      %27 = vector.load %arg4[%c0_14, %c0_15] : memref<256x128xf32, #tpu.memory_space<vmem>>, vector<256x128xf32>
      tpu.vector_store %arg4[%c0_14, %c0_15], %26 {strides = array<i32>} : memref<256x128xf32, #tpu.memory_space<vmem>>, vector<256x128xf32>,
    } else {
    }
    return
  }
  func.func @transform_0(%arg0: i32, %arg1: i32) -> (i32, i32) {
    %c0_i32 = arith.constant 0 : i32
    return %arg0, %arg1 : i32, i32
  }
  func.func @transform_1(%arg0: i32, %arg1: i32) -> (i32, i32) {
    %c0_i32 = arith.constant 0 : i32
    %c0_i32_0 = arith.constant 0 : i32
    return %arg1, %c0_i32 : i32, i32
  }
  func.func @transform_2(%arg0: i32, %arg1: i32) -> (i32, i32) {
    %c0_i32 = arith.constant 0 : i32
    %c0_i32_0 = arith.constant 0 : i32
    return %arg0, %c0_i32 : i32, i32
  }
}

module attributes {stable_mosaic.version = 11 : i64} {
  func.func @hw_kernel(%arg0: i32, %arg1: i32, %arg2: memref<256x256xbf16, #tpu.memory_space<vmem>>, %arg3: memref<256x128xbf16, #tpu.memory_space<vmem>>, %arg4: memref<128x128xbf16, #tpu.memory_space<vmem>>, %arg5: memref<128x128xbf16, #tpu.memory_space<vmem>>, %arg6: memref<256x128xbf16, #tpu.memory_space<vmem>>, %arg7: memref<256x128xf32, #tpu.memory_space<vmem>>) attributes {dimension_semantics = [#tpu.dimension_semantics<parallel>, #tpu.dimension_semantics<arbitrary>], iteration_bounds = array<i64: 2, 2>, scalar_prefetch = 0 : i64, scratch_operands = 1 : i64, tpu.core_type = #tpu.core_type<tc>, window_params = [{transform_indices = @transform_0, window_bounds = array<i64: 256, 256>}, {transform_indices = @transform_1, window_bounds = array<i64: 256, 128>}, {pipeline_mode = #tpu.pipeline_mode<synchronous>, transform_indices = @transform_2, window_bounds = array<i64: 128, 128>}, {pipeline_mode = #tpu.pipeline_mode<synchronous>, transform_indices = @transform_3, window_bounds = array<i64: 128, 128>}, {transform_indices = @transform_4, window_bounds = array<i64: 256, 128>}]} {
    %c0_i32 = arith.constant 0 : i32
    %0 = arith.cmpi eq, %arg1, %c0_i32 : i32
    %1 = arith.extui %0 : i1 to i32
    %c0_i32_0 = arith.constant 0 : i32
    %2 = arith.cmpi ne, %1, %c0_i32_0 : i32
    scf.if %2 {
      %cst_9 = arith.constant 0.000000e+00 : f32
      %12 = vector.broadcast %cst_9 : f32 to vector<256x128xf32>
      %c0_10 = arith.constant 0 : index
      %c0_11 = arith.constant 0 : index
      %13 = vector.load %arg7[%c0_10, %c0_11] : memref<256x128xf32, #tpu.memory_space<vmem>>, vector<256x128xf32>
      tpu.vector_store %arg7[%c0_10, %c0_11], %12 {strides = array<i32>} : memref<256x128xf32, #tpu.memory_space<vmem>>, vector<256x128xf32>,
    } else {
    }
    %c0 = arith.constant 0 : index
    %c0_1 = arith.constant 0 : index
    %3 = vector.load %arg7[%c0, %c0_1] : memref<256x128xf32, #tpu.memory_space<vmem>>, vector<256x128xf32>
    %c0_2 = arith.constant 0 : index
    %c0_3 = arith.constant 0 : index
    %4 = vector.load %arg2[%c0_2, %c0_3] : memref<256x256xbf16, #tpu.memory_space<vmem>>, vector<256x256xbf16>
    %c0_4 = arith.constant 0 : index
    %c0_5 = arith.constant 0 : index
    %5 = vector.load %arg3[%c0_4, %c0_5] : memref<256x128xbf16, #tpu.memory_space<vmem>>, vector<256x128xbf16>
    %cst = arith.constant dense<0.000000e+00> : vector<256x128xf32>
    %6 = tpu.matmul %4, %5, %cst {dimension_numbers = #tpu.dot_dimension_numbers<[1], [0], [0], [1], [0, 0, 1, 1], [], []>} : vector<256x256xbf16>, vector<256x128xbf16>, vector<256x128xf32> -> vector<256x128xf32>
    %7 = arith.addf %3, %6 : vector<256x128xf32>
    %c0_6 = arith.constant 0 : index
    %c0_7 = arith.constant 0 : index
    %8 = vector.load %arg7[%c0_6, %c0_7] : memref<256x128xf32, #tpu.memory_space<vmem>>, vector<256x128xf32>
    tpu.vector_store %arg7[%c0_6, %c0_7], %7 {strides = array<i32>} : memref<256x128xf32, #tpu.memory_space<vmem>>, vector<256x128xf32>,
    %c1_i32 = arith.constant 1 : i32
    %9 = arith.cmpi eq, %arg1, %c1_i32 : i32
    %10 = arith.extui %9 : i1 to i32
    %c0_i32_8 = arith.constant 0 : i32
    %11 = arith.cmpi ne, %10, %c0_i32_8 : i32
    scf.if %11 {
      %c0_9 = arith.constant 0 : index
      %c0_10 = arith.constant 0 : index
      %12 = vector.load %arg7[%c0_9, %c0_10] : memref<256x128xf32, #tpu.memory_space<vmem>>, vector<256x128xf32>
      %13 = arith.truncf %12 : vector<256x128xf32> to vector<256x128xbf16>
      %c0_11 = arith.constant 0 : index
      %c0_12 = arith.constant 0 : index
      %14 = vector.load %arg4[%c0_11, %c0_12] : memref<128x128xbf16, #tpu.memory_space<vmem>>, vector<128x128xbf16>
      %cst_13 = arith.constant dense<0.000000e+00> : vector<256x128xf32>
      %15 = tpu.matmul %13, %14, %cst_13 {dimension_numbers = #tpu.dot_dimension_numbers<[1], [0], [0], [1], [0, 0, 1, 1], [], []>} : vector<256x128xbf16>, vector<128x128xbf16>, vector<256x128xf32> -> vector<256x128xf32>
      %cst_14 = arith.constant 0.000000e+00 : f32
      %16 = vector.broadcast %cst_14 : f32 to vector<256x128xf32>
      %17 = arith.maximumf %15, %16 : vector<256x128xf32>
      %18 = arith.truncf %17 : vector<256x128xf32> to vector<256x128xbf16>
      %c0_15 = arith.constant 0 : index
      %c0_16 = arith.constant 0 : index
      %19 = vector.load %arg5[%c0_15, %c0_16] : memref<128x128xbf16, #tpu.memory_space<vmem>>, vector<128x128xbf16>
      %cst_17 = arith.constant dense<0.000000e+00> : vector<256x128xf32>
      %20 = tpu.matmul %18, %19, %cst_17 {dimension_numbers = #tpu.dot_dimension_numbers<[1], [0], [0], [1], [0, 0, 1, 1], [], []>} : vector<256x128xbf16>, vector<128x128xbf16>, vector<256x128xf32> -> vector<256x128xf32>
      %21 = arith.truncf %20 : vector<256x128xf32> to vector<256x128xbf16>
      %c0_18 = arith.constant 0 : index
      %c0_19 = arith.constant 0 : index
      %22 = vector.load %arg6[%c0_18, %c0_19] : memref<256x128xbf16, #tpu.memory_space<vmem>>, vector<256x128xbf16>
      tpu.vector_store %arg6[%c0_18, %c0_19], %21 {strides = array<i32>} : memref<256x128xbf16, #tpu.memory_space<vmem>>, vector<256x128xbf16>,
    } else {
    }
    return
  }
  func.func @transform_0(%arg0: i32, %arg1: i32) -> (i32, i32) {
    %c0_i32 = arith.constant 0 : i32
    return %arg0, %arg1 : i32, i32
  }
  func.func @transform_1(%arg0: i32, %arg1: i32) -> (i32, i32) {
    %c0_i32 = arith.constant 0 : i32
    %c0_i32_0 = arith.constant 0 : i32
    return %arg1, %c0_i32 : i32, i32
  }
  func.func @transform_2(%arg0: i32, %arg1: i32) -> (i32, i32) {
    %c0_i32 = arith.constant 0 : i32
    %c0_i32_0 = arith.constant 0 : i32
    %c0_i32_1 = arith.constant 0 : i32
    return %c0_i32, %c0_i32_0 : i32, i32
  }
  func.func @transform_3(%arg0: i32, %arg1: i32) -> (i32, i32) {
    %c0_i32 = arith.constant 0 : i32
    %c0_i32_0 = arith.constant 0 : i32
    %c0_i32_1 = arith.constant 0 : i32
    return %c0_i32, %c0_i32_0 : i32, i32
  }
  func.func @transform_4(%arg0: i32, %arg1: i32) -> (i32, i32) {
    %c0_i32 = arith.constant 0 : i32
    %c0_i32_0 = arith.constant 0 : i32
    return %arg0, %c0_i32 : i32, i32
  }
}

</mosaic_0001>

<llo_original>
// kernel: classifier_forward.3
$region0: #{classifier_forward.3}
  #allocation0 [shape = 'u32[]', space=smem, size = 0x4, offset = 0x4, fixed_abs, tag = 'smem constant byte address 0x4 - core index']
  #allocation1 [shape = 'u32[144,128]{1,0:T(1,128)}', space=vmem, size = 0x12000, scoped, tag = 'internal scratch']
  #allocation2 [shape = 'f32[256,128]{1,0:T(8,128)}', space=vmem, size = 0x20000, scoped, tag = 'scratch operand']
  %s0 = inlined_call_operand.vmem [shape: bf16[512,512], index: 0, kind: input, shape index: {}]
  %s1 = inlined_call_operand.vmem [shape: bf16[512,128], index: 1, kind: input, shape index: {}]
  %s2 = inlined_call_operand.vmem [shape: f32[512,128], index: 2, kind: output, shape index: {}]
  %s3 = sld [smem:[#allocation0]]
  $region87: #{classifier_forward.3} parent=0
    _
  %s5 = ssub.s32 1, %s3
  %s6 = scalar_select 0, %s5, %s3
  $region1: #{classifier_forward.3} parent=0
    #allocation3 [shape = 'u8[262144]{0}', space=vmem, size = 0x40000, scoped, tag = 'input window, operand 0']
    loop: start=0, step=1, limit=6
    $region2: #{classifier_forward.3} parent=1 // loop_pre_header
      _
    $region3: #{classifier_forward.3} parent=1 // loop_header
      %s8 = sphi 0, %s12
      %p9 = scmp.ge.s32.totalorder %s8, 6
      %s15 = sphi 0, %s27
      %s16 = sphi 0, %s23
      %s17 = sphi 0, %s15
      %s18 = sphi 0, %s16
      %s19 = sphi 0, %s17
      %s20 = sphi 0, %s18
      %s32 = sphi 0, %s34
      %s35 = sphi 0, %s32
      %s36 = sphi 0, %s35
      %s52 = sphi 0, %s36
      %s58 = sphi 0, %s60
      %s61 = sphi 0, %s58
      %s62 = sphi 0, %s61
      %s78 = sphi 0, %s62
      %s84 = sphi 0, %s86
      %s87 = sphi 0, %s84
      %s88 = sphi 0, %s87
      %s104 = sphi 0, %s88
    $region4: #{classifier_forward.3} parent=1 // loop_header_branch
      %11 = sbr.rel (%p9) target = $region8
    $region5: #{classifier_forward.3} parent=1 // loop_body
      %s13 = ssub.s32 %s8, 1
      %s14 = ssub.s32 %s8, 2
      %s21 = sadd.s32 1, %s16
      %p22 = scmp.ge.s32.totalorder %s21, 2
      %s23 = scalar_select %p22, 0, %s21
      %s24 = sadd.s32 1, %s15
      %s25 = scalar_select %p22, %s24, %s15
      %p26 = scmp.ge.s32.totalorder %s25, 2
      %s27 = scalar_select %p26, 0, %s25
      %s28 = ssub.s32 %s15, %s27
      %s29 = ssub.s32 %s16, %s23
      %s30 = sor.u32 %s28, %s29
      %p31 = scmp.eq.s32.totalorder %s30, 0
      %s33 = sadd.s32 %s32, 1
      %s34 = scalar_select %p31, %s32, %s33
      %p37 = pneg %p31
      %p38 = scmp.eq.s32.totalorder %s8, 3
      %p39 = por %p37, %p38
      %p40 = scmp.ne.s32.totalorder %s32, %s35
      %p41 = scmp.eq.s32.totalorder %s8, 0
      %p42 = por %p40, %p41
      %p43 = scmp.ne.s32.totalorder %s32, %s35
      %p44 = scmp.eq.s32.totalorder %s13, 3
      %p45 = por %p43, %p44
      %p46 = scmp.ne.s32.totalorder %s35, %s36
      %p47 = scmp.eq.s32.totalorder %s13, 0
      %p48 = por %p46, %p47
      %p49 = scmp.ne.s32.totalorder %s35, %s36
      %p50 = scmp.eq.s32.totalorder %s14, 3
      %p51 = por %p49, %p50
      %p53 = scmp.ne.s32.totalorder %s36, %s52
      %p54 = scmp.eq.s32.totalorder %s14, 0
      %p55 = por %p53, %p54
      %s56 = ssub.s32 %s16, %s23
      %p57 = scmp.eq.s32.totalorder %s56, 0
      %s59 = sadd.s32 %s58, 1
      %s60 = scalar_select %p57, %s58, %s59
      %p63 = pneg %p57
      %p64 = scmp.eq.s32.totalorder %s8, 3
      %p65 = por %p63, %p64
      %p66 = scmp.ne.s32.totalorder %s58, %s61
      %p67 = scmp.eq.s32.totalorder %s8, 0
      %p68 = por %p66, %p67
      %p69 = scmp.ne.s32.totalorder %s58, %s61
      %p70 = scmp.eq.s32.totalorder %s13, 3
      %p71 = por %p69, %p70
      %p72 = scmp.ne.s32.totalorder %s61, %s62
      %p73 = scmp.eq.s32.totalorder %s13, 0
      %p74 = por %p72, %p73
      %p75 = scmp.ne.s32.totalorder %s61, %s62
      %p76 = scmp.eq.s32.totalorder %s14, 3
      %p77 = por %p75, %p76
      %p79 = scmp.ne.s32.totalorder %s62, %s78
      %p80 = scmp.eq.s32.totalorder %s14, 0
      %p81 = por %p79, %p80
      %s82 = ssub.s32 %s15, %s27
      %p83 = scmp.eq.s32.totalorder %s82, 0
      %s85 = sadd.s32 %s84, 1
      %s86 = scalar_select %p83, %s84, %s85
      %p89 = pneg %p83
      %p90 = scmp.eq.s32.totalorder %s8, 3
      %p91 = por %p89, %p90
      %p92 = scmp.ne.s32.totalorder %s84, %s87
      %p93 = scmp.eq.s32.totalorder %s8, 0
      %p94 = por %p92, %p93
      %p95 = scmp.ne.s32.totalorder %s84, %s87
      %p96 = scmp.eq.s32.totalorder %s13, 3
      %p97 = por %p95, %p96
      %p98 = scmp.ne.s32.totalorder %s87, %s88
      %p99 = scmp.eq.s32.totalorder %s13, 0
      %p100 = por %p98, %p99
      %p101 = scmp.ne.s32.totalorder %s87, %s88
      %p102 = scmp.eq.s32.totalorder %s14, 3
      %p103 = por %p101, %p102
      %p105 = scmp.ne.s32.totalorder %s88, %s104
      %p106 = scmp.eq.s32.totalorder %s14, 0
      %p107 = por %p105, %p106
      %p108 = scmp.le.s32.totalorder 1, %s8
      %p109 = scmp.lt.s32.totalorder %s8, 5
      %p110 = pnand %p108, %p109
      %p111 = pneg %p110
      // Predicated region
      $region9: #{classifier_forward.3} parent=5 // pred_check
        _
      $region10: #{classifier_forward.3} parent=5 // pred_check_branch
        %113 = sbr.rel (%p110) target = $region12
      $region11: #{classifier_forward.3} parent=5 // pred_region
        %s114 = ssub.s32 %s8, 1
      $region12: #{classifier_forward.3} parent=5 // pred_fallthru
        _
      %p115 = scmp.lt.s32.totalorder %s8, 4
      // Predicated region
      $region13: #{classifier_forward.3} parent=5 // pred_check
        %p116 = pneg %p115
      $region14: #{classifier_forward.3} parent=5 // pred_check_branch
        %118 = sbr.rel (%p116) target = $region16
      $region15: #{classifier_forward.3} parent=5 // pred_region
        // Predicated region
        $region17: #{classifier_forward.3} parent=15 // pred_check
          %p119 = pneg %p42
        $region18: #{classifier_forward.3} parent=15 // pred_check_branch
          %121 = sbr.rel (%p119) target = $region20
        $region19: #{classifier_forward.3} parent=15 // pred_region
          %s122 = sand.u32 %s32, 1
          %s123 = sand.u32 %s32, 1
          %s124 = smul.addr %s123, 256
          %s125 = scalar_lea.vmem [#allocation3], %s124
          %s126 = smul.u32 32, %s15
          %s127 = smul.u32 2, %s16
          %s128 = smul.addr %s126, 4
          %s129 = sadd.s32 %s127, %s128
          %s130 = smul.addr %s129, 4
          %s131 = scalar_lea.vmem %s0, %s130
          // Predicated region
          $region21: #{classifier_forward.3} parent=19 // pred_check
            _
          $region22: #{classifier_forward.3} parent=19 // pred_check_branch
            %133 = sbr.rel (0) target = $region24
          $region23: #{classifier_forward.3} parent=19 // pred_region
            // Predicated region
            $region25: #{classifier_forward.3} parent=23 // pred_check
              _
            $region26: #{classifier_forward.3} parent=23 // pred_check_branch
              %135 = sbr.rel (0) target = $region28
            $region27: #{classifier_forward.3} parent=23 // pred_region
              // Predicated region
              $region40: #{classifier_forward.3} parent=27 // pred_check
                _
              $region41: #{classifier_forward.3} parent=27 // pred_check_branch
                %212 = sbr.rel (0) target = $region43
              $region42: #{classifier_forward.3} parent=27 // pred_region
                loop: start=0, step=1, limit=1
                $region44: #{classifier_forward.3} parent=42 // loop_pre_header
                  _
                $region45: #{classifier_forward.3} parent=42 // loop_header
                  %s214 = sphi 0, %s218
                  %p215 = scmp.ge.s32.totalorder %s214, 1
                  %s219 = sphi %s131, %s131
                  %s220 = sphi %s125, %s125
                $region46: #{classifier_forward.3} parent=42 // loop_header_branch
                  %217 = sbr.rel (%p215) target = $region50
                $region47: #{classifier_forward.3} parent=42 // loop_body
                  %v221 = vld [vmem:[%s219] sm:$0xff]
                  %222 = vst [vmem:[%s220] sm:$0xff] %v221
                  %v223 = vld [vmem:[%s219 + $0x10] sm:$0xff]
                  %224 = vst [vmem:[%s220 + $0x8] sm:$0xff] %v223
                  %v225 = vld [vmem:[%s219 + $0x20] sm:$0xff]
                  %226 = vst [vmem:[%s220 + $0x10] sm:$0xff] %v225
                  %v227 = vld [vmem:[%s219 + $0x30] sm:$0xff]
                  %228 = vst [vmem:[%s220 + $0x18] sm:$0xff] %v227
                  %v229 = vld [vmem:[%s219 + $0x40] sm:$0xff]
                  %230 = vst [vmem:[%s220 + $0x20] sm:$0xff] %v229
                  %v231 = vld [vmem:[%s219 + $0x50] sm:$0xff]
                  %232 = vst [vmem:[%s220 + $0x28] sm:$0xff] %v231
                  %v233 = vld [vmem:[%s219 + $0x60] sm:$0xff]
                  %234 = vst [vmem:[%s220 + $0x30] sm:$0xff] %v233
                  %v235 = vld [vmem:[%s219 + $0x70] sm:$0xff]
                  %236 = vst [vmem:[%s220 + $0x38] sm:$0xff] %v235
                  %v237 = vld [vmem:[%s219 + $0x80] sm:$0xff]
                  %238 = vst [vmem:[%s220 + $0x40] sm:$0xff] %v237
                  %v239 = vld [vmem:[%s219 + $0x90] sm:$0xff]
                  %240 = vst [vmem:[%s220 + $0x48] sm:$0xff] %v239
                  %v241 = vld [vmem:[%s219 + $0xa0] sm:$0xff]
                  %242 = vst [vmem:[%s220 + $0x50] sm:$0xff] %v241
                  %v243 = vld [vmem:[%s219 + $0xb0] sm:$0xff]
                  %244 = vst [vmem:[%s220 + $0x58] sm:$0xff] %v243
                  %v245 = vld [vmem:[%s219 + $0xc0] sm:$0xff]
                  %246 = vst [vmem:[%s220 + $0x60] sm:$0xff] %v245
                  %v247 = vld [vmem:[%s219 + $0xd0] sm:$0xff]
                  %248 = vst [vmem:[%s220 + $0x68] sm:$0xff] %v247
                  %v249 = vld [vmem:[%s219 + $0xe0] sm:$0xff]
                  %250 = vst [vmem:[%s220 + $0x70] sm:$0xff] %v249
                  %v251 = vld [vmem:[%s219 + $0xf0] sm:$0xff]
                  %252 = vst [vmem:[%s220 + $0x78] sm:$0xff] %v251
                  %v253 = vld [vmem:[%s219 + $0x100] sm:$0xff]
                  %254 = vst [vmem:[%s220 + $0x80] sm:$0xff] %v253
                  %v255 = vld [vmem:[%s219 + $0x110] sm:$0xff]
                  %256 = vst [vmem:[%s220 + $0x88] sm:$0xff] %v255
                  %v257 = vld [vmem:[%s219 + $0x120] sm:$0xff]
                  %258 = vst [vmem:[%s220 + $0x90] sm:$0xff] %v257
                  %v259 = vld [vmem:[%s219 + $0x130] sm:$0xff]
                  %260 = vst [vmem:[%s220 + $0x98] sm:$0xff] %v259
                  %v261 = vld [vmem:[%s219 + $0x140] sm:$0xff]
                  %262 = vst [vmem:[%s220 + $0xa0] sm:$0xff] %v261
                  %v263 = vld [vmem:[%s219 + $0x150] sm:$0xff]
                  %264 = vst [vmem:[%s220 + $0xa8] sm:$0xff] %v263
                  %v265 = vld [vmem:[%s219 + $0x160] sm:$0xff]
                  %266 = vst [vmem:[%s220 + $0xb0] sm:$0xff] %v265
                  %v267 = vld [vmem:[%s219 + $0x170] sm:$0xff]
                  %268 = vst [vmem:[%s220 + $0xb8] sm:$0xff] %v267
                  %v269 = vld [vmem:[%s219 + $0x180] sm:$0xff]
                  %270 = vst [vmem:[%s220 + $0xc0] sm:$0xff] %v269
                  %v271 = vld [vmem:[%s219 + $0x190] sm:$0xff]
                  %272 = vst [vmem:[%s220 + $0xc8] sm:$0xff] %v271
                  %v273 = vld [vmem:[%s219 + $0x1a0] sm:$0xff]
                  %274 = vst [vmem:[%s220 + $0xd0] sm:$0xff] %v273
                  %v275 = vld [vmem:[%s219 + $0x1b0] sm:$0xff]
                  %276 = vst [vmem:[%s220 + $0xd8] sm:$0xff] %v275
                  %v277 = vld [vmem:[%s219 + $0x1c0] sm:$0xff]
                  %278 = vst [vmem:[%s220 + $0xe0] sm:$0xff] %v277
                  %v279 = vld [vmem:[%s219 + $0x1d0] sm:$0xff]
                  %280 = vst [vmem:[%s220 + $0xe8] sm:$0xff] %v279
                  %v281 = vld [vmem:[%s219 + $0x1e0] sm:$0xff]
                  %282 = vst [vmem:[%s220 + $0xf0] sm:$0xff] %v281
                  %v283 = vld [vmem:[%s219 + $0x1f0] sm:$0xff]
                  %284 = vst [vmem:[%s220 + $0xf8] sm:$0xff] %v283
                $region48: #{classifier_forward.3} parent=42 // loop_footer
                  %s218 = sadd.s32 1, %s214
                $region49: #{classifier_forward.3} parent=42 // loop_footer_branch
                  %213 = sbr.rel target = $region45
                $region50: #{classifier_forward.3} parent=42 // loop_exit
                  _
              $region43: #{classifier_forward.3} parent=27 // pred_fallthru
                _
              // Predicated region
              $region51: #{classifier_forward.3} parent=27 // pred_check
                _
              $region52: #{classifier_forward.3} parent=27 // pred_check_branch
                %286 = sbr.rel target = $region54
              $region53: #{classifier_forward.3} parent=27 // pred_region
                _
              $region54: #{classifier_forward.3} parent=27 // pred_fallthru
                _
            $region28: #{classifier_forward.3} parent=23 // pred_fallthru
              _
            // Predicated region
            $region29: #{classifier_forward.3} parent=23 // pred_check
              _
            $region30: #{classifier_forward.3} parent=23 // pred_check_branch
              %137 = sbr.rel target = $region32
            $region31: #{classifier_forward.3} parent=23 // pred_region
              loop: start=0, step=1, limit=1
              $region33: #{classifier_forward.3} parent=31 // loop_pre_header
                _
              $region34: #{classifier_forward.3} parent=31 // loop_header
                %s140 = sphi 0, %s144
                %p141 = scmp.ge.s32.totalorder %s140, 1
                %s145 = sphi %s131, %s131
                %s146 = sphi %s125, %s125
              $region35: #{classifier_forward.3} parent=31 // loop_header_branch
                %143 = sbr.rel (%p141) target = $region39
              $region36: #{classifier_forward.3} parent=31 // loop_body
                %v147 = vld [vmem:[%s145] sm:$0xff]
                %148 = vst [vmem:[%s146] sm:$0xff] %v147
                %v149 = vld [vmem:[%s145 + $0x10] sm:$0xff]
                %150 = vst [vmem:[%s146 + $0x8] sm:$0xff] %v149
                %v151 = vld [vmem:[%s145 + $0x20] sm:$0xff]
                %152 = vst [vmem:[%s146 + $0x10] sm:$0xff] %v151
                %v153 = vld [vmem:[%s145 + $0x30] sm:$0xff]
                %154 = vst [vmem:[%s146 + $0x18] sm:$0xff] %v153
                %v155 = vld [vmem:[%s145 + $0x40] sm:$0xff]
                %156 = vst [vmem:[%s146 + $0x20] sm:$0xff] %v155
                %v157 = vld [vmem:[%s145 + $0x50] sm:$0xff]
                %158 = vst [vmem:[%s146 + $0x28] sm:$0xff] %v157
                %v159 = vld [vmem:[%s145 + $0x60] sm:$0xff]
                %160 = vst [vmem:[%s146 + $0x30] sm:$0xff] %v159
                %v161 = vld [vmem:[%s145 + $0x70] sm:$0xff]
                %162 = vst [vmem:[%s146 + $0x38] sm:$0xff] %v161
                %v163 = vld [vmem:[%s145 + $0x80] sm:$0xff]
                %164 = vst [vmem:[%s146 + $0x40] sm:$0xff] %v163
                %v165 = vld [vmem:[%s145 + $0x90] sm:$0xff]
                %166 = vst [vmem:[%s146 + $0x48] sm:$0xff] %v165
                %v167 = vld [vmem:[%s145 + $0xa0] sm:$0xff]
                %168 = vst [vmem:[%s146 + $0x50] sm:$0xff] %v167
                %v169 = vld [vmem:[%s145 + $0xb0] sm:$0xff]
                %170 = vst [vmem:[%s146 + $0x58] sm:$0xff] %v169
                %v171 = vld [vmem:[%s145 + $0xc0] sm:$0xff]
                %172 = vst [vmem:[%s146 + $0x60] sm:$0xff] %v171
                %v173 = vld [vmem:[%s145 + $0xd0] sm:$0xff]
                %174 = vst [vmem:[%s146 + $0x68] sm:$0xff] %v173
                %v175 = vld [vmem:[%s145 + $0xe0] sm:$0xff]
                %176 = vst [vmem:[%s146 + $0x70] sm:$0xff] %v175
                %v177 = vld [vmem:[%s145 + $0xf0] sm:$0xff]
                %178 = vst [vmem:[%s146 + $0x78] sm:$0xff] %v177
                %v179 = vld [vmem:[%s145 + $0x100] sm:$0xff]
                %180 = vst [vmem:[%s146 + $0x80] sm:$0xff] %v179
                %v181 = vld [vmem:[%s145 + $0x110] sm:$0xff]
                %182 = vst [vmem:[%s146 + $0x88] sm:$0xff] %v181
                %v183 = vld [vmem:[%s145 + $0x120] sm:$0xff]
                %184 = vst [vmem:[%s146 + $0x90] sm:$0xff] %v183
                %v185 = vld [vmem:[%s145 + $0x130] sm:$0xff]
                %186 = vst [vmem:[%s146 + $0x98] sm:$0xff] %v185
                %v187 = vld [vmem:[%s145 + $0x140] sm:$0xff]
                %188 = vst [vmem:[%s146 + $0xa0] sm:$0xff] %v187
                %v189 = vld [vmem:[%s145 + $0x150] sm:$0xff]
                %190 = vst [vmem:[%s146 + $0xa8] sm:$0xff] %v189
                %v191 = vld [vmem:[%s145 + $0x160] sm:$0xff]
                %192 = vst [vmem:[%s146 + $0xb0] sm:$0xff] %v191
                %v193 = vld [vmem:[%s145 + $0x170] sm:$0xff]
                %194 = vst [vmem:[%s146 + $0xb8] sm:$0xff] %v193
                %v195 = vld [vmem:[%s145 + $0x180] sm:$0xff]
                %196 = vst [vmem:[%s146 + $0xc0] sm:$0xff] %v195
                %v197 = vld [vmem:[%s145 + $0x190] sm:$0xff]
                %198 = vst [vmem:[%s146 + $0xc8] sm:$0xff] %v197
                %v199 = vld [vmem:[%s145 + $0x1a0] sm:$0xff]
                %200 = vst [vmem:[%s146 + $0xd0] sm:$0xff] %v199
                %v201 = vld [vmem:[%s145 + $0x1b0] sm:$0xff]
                %202 = vst [vmem:[%s146 + $0xd8] sm:$0xff] %v201
                %v203 = vld [vmem:[%s145 + $0x1c0] sm:$0xff]
                %204 = vst [vmem:[%s146 + $0xe0] sm:$0xff] %v203
                %v205 = vld [vmem:[%s145 + $0x1d0] sm:$0xff]
                %206 = vst [vmem:[%s146 + $0xe8] sm:$0xff] %v205
                %v207 = vld [vmem:[%s145 + $0x1e0] sm:$0xff]
                %208 = vst [vmem:[%s146 + $0xf0] sm:$0xff] %v207
                %v209 = vld [vmem:[%s145 + $0x1f0] sm:$0xff]
                %210 = vst [vmem:[%s146 + $0xf8] sm:$0xff] %v209
              $region37: #{classifier_forward.3} parent=31 // loop_footer
                %s144 = sadd.s32 1, %s140
              $region38: #{classifier_forward.3} parent=31 // loop_footer_branch
                %139 = sbr.rel target = $region34
              $region39: #{classifier_forward.3} parent=31 // loop_exit
                _
            $region32: #{classifier_forward.3} parent=23 // pred_fallthru
              _
          $region24: #{classifier_forward.3} parent=19 // pred_fallthru
            _
          %287 = vnop
        $region20: #{classifier_forward.3} parent=15 // pred_fallthru
          _
        // Predicated region
        $region55: #{classifier_forward.3} parent=15 // pred_check
          %p288 = pneg %p68
        $region56: #{classifier_forward.3} parent=15 // pred_check_branch
          %290 = sbr.rel (%p288) target = $region58
        $region57: #{classifier_forward.3} parent=15 // pred_region
          %s291 = smul.u32 32, %s16
          %p292 = scmp.lt.s32.totalorder %s291, 63
          %s293 = scalar_select %p292, %s291, 63
          %s294 = smul.addr %s293, 4
          %s295 = scalar_lea.vmem %s1, %s294
          %s296 = smul.u32 32, %s16
        $region58: #{classifier_forward.3} parent=15 // pred_fallthru
          _
      $region16: #{classifier_forward.3} parent=5 // pred_fallthru
        _
      %p297 = scmp.le.s32.totalorder 1, %s8
      %p298 = scmp.lt.s32.totalorder %s8, 5
      %p299 = pnand %p297, %p298
      %p300 = pneg %p299
      // Predicated region
      $region59: #{classifier_forward.3} parent=5 // pred_check
        _
      $region60: #{classifier_forward.3} parent=5 // pred_check_branch
        %302 = sbr.rel (%p299) target = $region62
      $region61: #{classifier_forward.3} parent=5 // pred_region
        %s303 = ssub.s32 %s8, 1
        %s304 = sand.u32 %s35, 1
        %s305 = sand.u32 %s35, 1
        %s306 = smul.addr %s305, 256
        %s307 = scalar_lea.vmem [#allocation3], %s306
        // Predicated region
        $region63: #{classifier_forward.3} parent=61 // pred_check
          %p308 = pneg %p48
        $region64: #{classifier_forward.3} parent=61 // pred_check_branch
          %310 = sbr.rel (%p308) target = $region66
        $region65: #{classifier_forward.3} parent=61 // pred_region
          _
        $region66: #{classifier_forward.3} parent=61 // pred_fallthru
          _
        %s311 = sand.u32 %s35, 1
        %s312 = sand.u32 %s35, 1
        %s313 = smul.addr %s312, 256
        %s314 = scalar_lea.vmem [#allocation3], %s313
        %p315 = pneg %p48
        %p316 = pneg %p45
        %s317 = smul.u32 32, %s18
        %p318 = scmp.lt.s32.totalorder %s317, 63
        %s319 = scalar_select %p318, %s317, 63
        %s320 = smul.addr %s319, 4
        %s321 = scalar_lea.vmem %s1, %s320
        %p322 = pneg %p74
        %p323 = pneg %p71
        %p324 = pneg %p100
        %p325 = pneg %p97
        %s326 = smul.u32 32, %s17
        %p327 = scmp.lt.s32.totalorder %s326, 63
        %s328 = scalar_select %p327, %s326, 63
        %s329 = smul.addr %s328, 8
        %s330 = scalar_lea.vmem %s2, %s329
        %s331 = smul.u32 32, %s17
        %s332 = smul.u32 2, %s18
        %s333 = smul.u32 32, %s18
        %p334 = scmp.lt.s32.totalorder %s333, 63
        %s335 = scalar_select %p334, %s333, 63
        %s336 = smul.addr %s335, 4
        %s337 = scalar_lea.vmem %s1, %s336
        %s338 = smul.u32 32, %s18
        %s339 = smul.u32 32, %s17
        %p340 = scmp.lt.s32.totalorder %s339, 63
        %s341 = scalar_select %p340, %s339, 63
        %s342 = smul.addr %s341, 8
        %s343 = scalar_lea.vmem %s2, %s342
        %s344 = smul.u32 32, %s17
        %p346 = scmp.eq.s32.totalorder %s18, 0
        // Predicated region
        $region67: #{classifier_forward.3} parent=61 // pred_check
          %p347 = pneg %p346
        $region68: #{classifier_forward.3} parent=61 // pred_check_branch
          %349 = sbr.rel (%p347) target = $region70
        $region69: #{classifier_forward.3} parent=61 // pred_region
          %350 = vst [vmem:[#allocation2] sm:$0xff] 0.0
          %351 = vst [vmem:[#allocation2 + $0x8] sm:$0xff] 0.0
          %352 = vst [vmem:[#allocation2 + $0x10] sm:$0xff] 0.0
          %353 = vst [vmem:[#allocation2 + $0x18] sm:$0xff] 0.0
          %354 = vst [vmem:[#allocation2 + $0x20] sm:$0xff] 0.0
          %355 = vst [vmem:[#allocation2 + $0x28] sm:$0xff] 0.0
          %356 = vst [vmem:[#allocation2 + $0x30] sm:$0xff] 0.0
          %357 = vst [vmem:[#allocation2 + $0x38] sm:$0xff] 0.0
          %358 = vst [vmem:[#allocation2 + $0x40] sm:$0xff] 0.0
          %359 = vst [vmem:[#allocation2 + $0x48] sm:$0xff] 0.0
          %360 = vst [vmem:[#allocation2 + $0x50] sm:$0xff] 0.0
          %361 = vst [vmem:[#allocation2 + $0x58] sm:$0xff] 0.0
          %362 = vst [vmem:[#allocation2 + $0x60] sm:$0xff] 0.0
          %363 = vst [vmem:[#allocation2 + $0x68] sm:$0xff] 0.0
          %364 = vst [vmem:[#allocation2 + $0x70] sm:$0xff] 0.0
          %365 = vst [vmem:[#allocation2 + $0x78] sm:$0xff] 0.0
          %366 = vst [vmem:[#allocation2 + $0x80] sm:$0xff] 0.0
          %367 = vst [vmem:[#allocation2 + $0x88] sm:$0xff] 0.0
          %368 = vst [vmem:[#allocation2 + $0x90] sm:$0xff] 0.0
          %369 = vst [vmem:[#allocation2 + $0x98] sm:$0xff] 0.0
          %370 = vst [vmem:[#allocation2 + $0xa0] sm:$0xff] 0.0
          %371 = vst [vmem:[#allocation2 + $0xa8] sm:$0xff] 0.0
          %372 = vst [vmem:[#allocation2 + $0xb0] sm:$0xff] 0.0
          %373 = vst [vmem:[#allocation2 + $0xb8] sm:$0xff] 0.0
          %374 = vst [vmem:[#allocation2 + $0xc0] sm:$0xff] 0.0
          %375 = vst [vmem:[#allocation2 + $0xc8] sm:$0xff] 0.0
          %376 = vst [vmem:[#allocation2 + $0xd0] sm:$0xff] 0.0
          %377 = vst [vmem:[#allocation2 + $0xd8] sm:$0xff] 0.0
          %378 = vst [vmem:[#allocation2 + $0xe0] sm:$0xff] 0.0
          %379 = vst [vmem:[#allocation2 + $0xe8] sm:$0xff] 0.0
          %380 = vst [vmem:[#allocation2 + $0xf0] sm:$0xff] 0.0
          %381 = vst [vmem:[#allocation2 + $0xf8] sm:$0xff] 0.0
        $region70: #{classifier_forward.3} parent=61 // pred_fallthru
          _
        %v382 = vld [vmem:[#allocation2] sm:$0xff]
        %v383 = vld [vmem:[#allocation2 + $0x8] sm:$0xff]
        %v384 = vld [vmem:[#allocation2 + $0x10] sm:$0xff]
        %v385 = vld [vmem:[#allocation2 + $0x18] sm:$0xff]
        %v386 = vld [vmem:[#allocation2 + $0x20] sm:$0xff]
        %v387 = vld [vmem:[#allocation2 + $0x28] sm:$0xff]
        %v388 = vld [vmem:[#allocation2 + $0x30] sm:$0xff]
        %v389 = vld [vmem:[#allocation2 + $0x38] sm:$0xff]
        %v390 = vld [vmem:[#allocation2 + $0x40] sm:$0xff]
        %v391 = vld [vmem:[#allocation2 + $0x48] sm:$0xff]
        %v392 = vld [vmem:[#allocation2 + $0x50] sm:$0xff]
        %v393 = vld [vmem:[#allocation2 + $0x58] sm:$0xff]
        %v394 = vld [vmem:[#allocation2 + $0x60] sm:$0xff]
        %v395 = vld [vmem:[#allocation2 + $0x68] sm:$0xff]
        %v396 = vld [vmem:[#allocation2 + $0x70] sm:$0xff]
        %v397 = vld [vmem:[#allocation2 + $0x78] sm:$0xff]
        %v398 = vld [vmem:[#allocation2 + $0x80] sm:$0xff]
        %v399 = vld [vmem:[#allocation2 + $0x88] sm:$0xff]
        %v400 = vld [vmem:[#allocation2 + $0x90] sm:$0xff]
        %v401 = vld [vmem:[#allocation2 + $0x98] sm:$0xff]
        %v402 = vld [vmem:[#allocation2 + $0xa0] sm:$0xff]
        %v403 = vld [vmem:[#allocation2 + $0xa8] sm:$0xff]
        %v404 = vld [vmem:[#allocation2 + $0xb0] sm:$0xff]
        %v405 = vld [vmem:[#allocation2 + $0xb8] sm:$0xff]
        %v406 = vld [vmem:[#allocation2 + $0xc0] sm:$0xff]
        %v407 = vld [vmem:[#allocation2 + $0xc8] sm:$0xff]
        %v408 = vld [vmem:[#allocation2 + $0xd0] sm:$0xff]
        %v409 = vld [vmem:[#allocation2 + $0xd8] sm:$0xff]
        %v410 = vld [vmem:[#allocation2 + $0xe0] sm:$0xff]
        %v411 = vld [vmem:[#allocation2 + $0xe8] sm:$0xff]
        %v412 = vld [vmem:[#allocation2 + $0xf0] sm:$0xff]
        %v413 = vld [vmem:[#allocation2 + $0xf8] sm:$0xff]
        %v414 = vld [vmem:[%s307] sm:$0xff]
        %v415 = vld [vmem:[%s307 + $0x8] sm:$0xff]
        %v416 = vld [vmem:[%s307 + $0x10] sm:$0xff]
        %v417 = vld [vmem:[%s307 + $0x18] sm:$0xff]
        %v418 = vld [vmem:[%s307 + $0x20] sm:$0xff]
        %v419 = vld [vmem:[%s307 + $0x28] sm:$0xff]
        %v420 = vld [vmem:[%s307 + $0x30] sm:$0xff]
        %v421 = vld [vmem:[%s307 + $0x38] sm:$0xff]
        %v422 = vld [vmem:[%s307 + $0x40] sm:$0xff]
        %v423 = vld [vmem:[%s307 + $0x48] sm:$0xff]
        %v424 = vld [vmem:[%s307 + $0x50] sm:$0xff]
        %v425 = vld [vmem:[%s307 + $0x58] sm:$0xff]
        %v426 = vld [vmem:[%s307 + $0x60] sm:$0xff]
        %v427 = vld [vmem:[%s307 + $0x68] sm:$0xff]
        %v428 = vld [vmem:[%s307 + $0x70] sm:$0xff]
        %v429 = vld [vmem:[%s307 + $0x78] sm:$0xff]
        %v430 = vld [vmem:[%s307 + $0x80] sm:$0xff]
        %v431 = vld [vmem:[%s307 + $0x88] sm:$0xff]
        %v432 = vld [vmem:[%s307 + $0x90] sm:$0xff]
        %v433 = vld [vmem:[%s307 + $0x98] sm:$0xff]
        %v434 = vld [vmem:[%s307 + $0xa0] sm:$0xff]
        %v435 = vld [vmem:[%s307 + $0xa8] sm:$0xff]
        %v436 = vld [vmem:[%s307 + $0xb0] sm:$0xff]
        %v437 = vld [vmem:[%s307 + $0xb8] sm:$0xff]
        %v438 = vld [vmem:[%s307 + $0xc0] sm:$0xff]
        %v439 = vld [vmem:[%s307 + $0xc8] sm:$0xff]
        %v440 = vld [vmem:[%s307 + $0xd0] sm:$0xff]
        %v441 = vld [vmem:[%s307 + $0xd8] sm:$0xff]
        %v442 = vld [vmem:[%s307 + $0xe0] sm:$0xff]
        %v443 = vld [vmem:[%s307 + $0xe8] sm:$0xff]
        %v444 = vld [vmem:[%s307 + $0xf0] sm:$0xff]
        %v445 = vld [vmem:[%s307 + $0xf8] sm:$0xff]
        %v446 = vld [vmem:[%s337] sm:$0xf]
        %v447 = vld [vmem:[%s337 + $0x4] sm:$0xf]
        %v448 = vld [vmem:[%s337 + $0x8] sm:$0xf]
        %v449 = vld [vmem:[%s337 + $0xc] sm:$0xf]
        %v450 = vld [vmem:[%s337 + $0x10] sm:$0xf]
        %v451 = vld [vmem:[%s337 + $0x14] sm:$0xf]
        %v452 = vld [vmem:[%s337 + $0x18] sm:$0xf]
        %v453 = vld [vmem:[%s337 + $0x1c] sm:$0xf]
        %v454 = vld [vmem:[%s337 + $0x20] sm:$0xf]
        %v455 = vld [vmem:[%s337 + $0x24] sm:$0xf]
        %v456 = vld [vmem:[%s337 + $0x28] sm:$0xf]
        %v457 = vld [vmem:[%s337 + $0x2c] sm:$0xf]
        %v458 = vld [vmem:[%s337 + $0x30] sm:$0xf]
        %v459 = vld [vmem:[%s337 + $0x34] sm:$0xf]
        %v460 = vld [vmem:[%s337 + $0x38] sm:$0xf]
        %v461 = vld [vmem:[%s337 + $0x3c] sm:$0xf]
        %v462 = vld [vmem:[%s337 + $0x40] sm:$0xf]
        %v463 = vld [vmem:[%s337 + $0x44] sm:$0xf]
        %v464 = vld [vmem:[%s337 + $0x48] sm:$0xf]
        %v465 = vld [vmem:[%s337 + $0x4c] sm:$0xf]
        %v466 = vld [vmem:[%s337 + $0x50] sm:$0xf]
        %v467 = vld [vmem:[%s337 + $0x54] sm:$0xf]
        %v468 = vld [vmem:[%s337 + $0x58] sm:$0xf]
        %v469 = vld [vmem:[%s337 + $0x5c] sm:$0xf]
        %v470 = vld [vmem:[%s337 + $0x60] sm:$0xf]
        %v471 = vld [vmem:[%s337 + $0x64] sm:$0xf]
        %v472 = vld [vmem:[%s337 + $0x68] sm:$0xf]
        %v473 = vld [vmem:[%s337 + $0x6c] sm:$0xf]
        %v474 = vld [vmem:[%s337 + $0x70] sm:$0xf]
        %v475 = vld [vmem:[%s337 + $0x74] sm:$0xf]
        %v476 = vld [vmem:[%s337 + $0x78] sm:$0xf]
        %v477 = vld [vmem:[%s337 + $0x7c] sm:$0xf]
        %v510 = vunpack.c.l.b16 %v414
        %v511 = vunpack.c.h.b16 %v414
        %v512 = vunpack.c.l.b16 %v415
        %v513 = vunpack.c.h.b16 %v415
        %v514 = vunpack.c.l.b16 %v416
        %v515 = vunpack.c.h.b16 %v416
        %v516 = vunpack.c.l.b16 %v417
        %v517 = vunpack.c.h.b16 %v417
        %v518 = vunpack.c.l.b16 %v418
        %v519 = vunpack.c.h.b16 %v418
        %v520 = vunpack.c.l.b16 %v419
        %v521 = vunpack.c.h.b16 %v419
        %v522 = vunpack.c.l.b16 %v420
        %v523 = vunpack.c.h.b16 %v420
        %v524 = vunpack.c.l.b16 %v421
        %v525 = vunpack.c.h.b16 %v421
        %v526 = vunpack.c.l.b16 %v422
        %v527 = vunpack.c.h.b16 %v422
        %v528 = vunpack.c.l.b16 %v423
        %v529 = vunpack.c.h.b16 %v423
        %v530 = vunpack.c.l.b16 %v424
        %v531 = vunpack.c.h.b16 %v424
        %v532 = vunpack.c.l.b16 %v425
        %v533 = vunpack.c.h.b16 %v425
        %v534 = vunpack.c.l.b16 %v426
        %v535 = vunpack.c.h.b16 %v426
        %v536 = vunpack.c.l.b16 %v427
        %v537 = vunpack.c.h.b16 %v427
        %v538 = vunpack.c.l.b16 %v428
        %v539 = vunpack.c.h.b16 %v428
        %v540 = vunpack.c.l.b16 %v429
        %v541 = vunpack.c.h.b16 %v429
        %v542 = vunpack.c.l.b16 %v430
        %v543 = vunpack.c.h.b16 %v430
        %v544 = vunpack.c.l.b16 %v431
        %v545 = vunpack.c.h.b16 %v431
        %v546 = vunpack.c.l.b16 %v432
        %v547 = vunpack.c.h.b16 %v432
        %v548 = vunpack.c.l.b16 %v433
        %v549 = vunpack.c.h.b16 %v433
        %v550 = vunpack.c.l.b16 %v434
        %v551 = vunpack.c.h.b16 %v434
        %v552 = vunpack.c.l.b16 %v435
        %v553 = vunpack.c.h.b16 %v435
        %v554 = vunpack.c.l.b16 %v436
        %v555 = vunpack.c.h.b16 %v436
        %v556 = vunpack.c.l.b16 %v437
        %v557 = vunpack.c.h.b16 %v437
        %v558 = vunpack.c.l.b16 %v438
        %v559 = vunpack.c.h.b16 %v438
        %v560 = vunpack.c.l.b16 %v439
        %v561 = vunpack.c.h.b16 %v439
        %v562 = vunpack.c.l.b16 %v440
        %v563 = vunpack.c.h.b16 %v440
        %v564 = vunpack.c.l.b16 %v441
        %v565 = vunpack.c.h.b16 %v441
        %v566 = vunpack.c.l.b16 %v442
        %v567 = vunpack.c.h.b16 %v442
        %v568 = vunpack.c.l.b16 %v443
        %v569 = vunpack.c.h.b16 %v443
        %v570 = vunpack.c.l.b16 %v444
        %v571 = vunpack.c.h.b16 %v444
        %v572 = vunpack.c.l.b16 %v445
        %v573 = vunpack.c.h.b16 %v445
        %v574 = vpack.c.b16 %v512, %v510
        %v575 = vpack.c.b16 %v513, %v511
        %v576 = vpack.c.b16 %v516, %v514
        %v577 = vpack.c.b16 %v517, %v515
        %v578 = vpack.c.b16 %v520, %v518
        %v579 = vpack.c.b16 %v521, %v519
        %v580 = vpack.c.b16 %v524, %v522
        %v581 = vpack.c.b16 %v525, %v523
        %v582 = vpack.c.b16 %v528, %v526
        %v583 = vpack.c.b16 %v529, %v527
        %v584 = vpack.c.b16 %v532, %v530
        %v585 = vpack.c.b16 %v533, %v531
        %v586 = vpack.c.b16 %v536, %v534
        %v587 = vpack.c.b16 %v537, %v535
        %v588 = vpack.c.b16 %v540, %v538
        %v589 = vpack.c.b16 %v541, %v539
        %v590 = vpack.c.b16 %v544, %v542
        %v591 = vpack.c.b16 %v545, %v543
        %v592 = vpack.c.b16 %v548, %v546
        %v593 = vpack.c.b16 %v549, %v547
        %v594 = vpack.c.b16 %v552, %v550
        %v595 = vpack.c.b16 %v553, %v551
        %v596 = vpack.c.b16 %v556, %v554
        %v597 = vpack.c.b16 %v557, %v555
        %v598 = vpack.c.b16 %v560, %v558
        %v599 = vpack.c.b16 %v561, %v559
        %v600 = vpack.c.b16 %v564, %v562
        %v601 = vpack.c.b16 %v565, %v563
        %v602 = vpack.c.b16 %v568, %v566
        %v603 = vpack.c.b16 %v569, %v567
        %v604 = vpack.c.b16 %v572, %v570
        %v605 = vpack.c.b16 %v573, %v571
        %v670 = vunpack.c.l.b16 %v446
        %v671 = vunpack.c.l.b16 %v447
        %v672 = vunpack.c.l.b16 %v448
        %v673 = vunpack.c.l.b16 %v449
        %v674 = vunpack.c.l.b16 %v450
        %v675 = vunpack.c.l.b16 %v451
        %v676 = vunpack.c.l.b16 %v452
        %v677 = vunpack.c.l.b16 %v453
        %v678 = vunpack.c.l.b16 %v454
        %v679 = vunpack.c.l.b16 %v455
        %v680 = vunpack.c.l.b16 %v456
        %v681 = vunpack.c.l.b16 %v457
        %v682 = vunpack.c.l.b16 %v458
        %v683 = vunpack.c.l.b16 %v459
        %v684 = vunpack.c.l.b16 %v460
        %v685 = vunpack.c.l.b16 %v461
        %v686 = vunpack.c.l.b16 %v462
        %v687 = vunpack.c.l.b16 %v463
        %v688 = vunpack.c.l.b16 %v464
        %v689 = vunpack.c.l.b16 %v465
        %v690 = vunpack.c.l.b16 %v466
        %v691 = vunpack.c.l.b16 %v467
        %v692 = vunpack.c.l.b16 %v468
        %v693 = vunpack.c.l.b16 %v469
        %v694 = vunpack.c.l.b16 %v470
        %v695 = vunpack.c.l.b16 %v471
        %v696 = vunpack.c.l.b16 %v472
        %v697 = vunpack.c.l.b16 %v473
        %v698 = vunpack.c.l.b16 %v474
        %v699 = vunpack.c.l.b16 %v475
        %v700 = vunpack.c.l.b16 %v476
        %v701 = vunpack.c.l.b16 %v477
        %v702 = vpack.c.b16 %v671, %v670
        %v703 = vpack.c.b16 %v673, %v672
        %v704 = vpack.c.b16 %v675, %v674
        %v705 = vpack.c.b16 %v677, %v676
        %v706 = vpack.c.b16 %v679, %v678
        %v707 = vpack.c.b16 %v681, %v680
        %v708 = vpack.c.b16 %v683, %v682
        %v709 = vpack.c.b16 %v685, %v684
        %v710 = vpack.c.b16 %v687, %v686
        %v711 = vpack.c.b16 %v689, %v688
        %v712 = vpack.c.b16 %v691, %v690
        %v713 = vpack.c.b16 %v693, %v692
        %v714 = vpack.c.b16 %v695, %v694
        %v715 = vpack.c.b16 %v697, %v696
        %v716 = vpack.c.b16 %v699, %v698
        %v717 = vpack.c.b16 %v701, %v700
        %734 = vmatprep.subr.bf16.mxu0 0
        %735 = vmatpush1.bf16.msra.mxu0 %v702
        %736 = vmatprep.subr.bf16.mxu0 0
        %737 = vmatpush1.bf16.msra.mxu0 %v703
        %738 = vmatprep.subr.bf16.mxu0 0
        %739 = vmatpush1.bf16.msra.mxu0 %v704
        %740 = vmatprep.subr.bf16.mxu0 0
        %741 = vmatpush1.bf16.msra.mxu0 %v705
        %742 = vmatprep.subr.bf16.mxu0 0
        %743 = vmatpush1.bf16.msra.mxu0 %v706
        %744 = vmatprep.subr.bf16.mxu0 0
        %745 = vmatpush1.bf16.msra.mxu0 %v707
        %746 = vmatprep.subr.bf16.mxu0 0
        %747 = vmatpush1.bf16.msra.mxu0 %v708
        %748 = vmatprep.subr.bf16.mxu0 0
        %749 = vmatpush1.bf16.msra.mxu0 %v709
        %750 = vmatprep.subr.bf16.mxu0 0
        %751 = vmatpush1.bf16.msra.mxu0 %v710
        %752 = vmatprep.subr.bf16.mxu0 0
        %753 = vmatpush1.bf16.msra.mxu0 %v711
        %754 = vmatprep.subr.bf16.mxu0 0
        %755 = vmatpush1.bf16.msra.mxu0 %v712
        %756 = vmatprep.subr.bf16.mxu0 0
        %757 = vmatpush1.bf16.msra.mxu0 %v713
        %758 = vmatprep.subr.bf16.mxu0 0
        %759 = vmatpush1.bf16.msra.mxu0 %v714
        %760 = vmatprep.subr.bf16.mxu0 0
        %761 = vmatpush1.bf16.msra.mxu0 %v715
        %762 = vmatprep.subr.bf16.mxu0 0
        %763 = vmatpush1.bf16.msra.mxu0 %v716
        %764 = vmatprep.subr.bf16.mxu0 0
        %765 = vmatpush1.bf16.msra.mxu0 %v717
        %766 = vmatprep.mubr.bf16.mxu0 %v575
        %767 = vmatmul.mubr.bf16.gmra.mrb[0].mxu0 %v574
        %v768 = vpop.f32.mrb[0].mxu0
        %v769 = vadd.f32 0.0, %v768
        %v770 = vpop.f32.mrb[0].mxu0
        %v771 = vpop.f32.mrb[0].mxu0
        %v772 = vadd.f32 0.0, %v771
        %v773 = vpop.f32.mrb[0].mxu0
        %774 = vmatprep.mubr.bf16.mxu0 %v577
        %775 = vmatmul.mubr.bf16.gmra.mrb[0].mxu0 %v576
        %v776 = vpop.f32.mrb[0].mxu0
        %v777 = vadd.f32 0.0, %v776
        %v778 = vpop.f32.mrb[0].mxu0
        %v779 = vpop.f32.mrb[0].mxu0
        %v780 = vadd.f32 0.0, %v779
        %v781 = vpop.f32.mrb[0].mxu0
        %782 = vmatprep.mubr.bf16.mxu0 %v579
        %783 = vmatmul.mubr.bf16.gmra.mrb[0].mxu0 %v578
        %v784 = vpop.f32.mrb[0].mxu0
        %v785 = vadd.f32 0.0, %v784
        %v786 = vpop.f32.mrb[0].mxu0
        %v787 = vpop.f32.mrb[0].mxu0
        %v788 = vadd.f32 0.0, %v787
        %v789 = vpop.f32.mrb[0].mxu0
        %790 = vmatprep.mubr.bf16.mxu0 %v581
        %791 = vmatmul.mubr.bf16.gmra.mrb[0].mxu0 %v580
        %v792 = vpop.f32.mrb[0].mxu0
        %v793 = vadd.f32 0.0, %v792
        %v794 = vpop.f32.mrb[0].mxu0
        %v795 = vpop.f32.mrb[0].mxu0
        %v796 = vadd.f32 0.0, %v795
        %v797 = vpop.f32.mrb[0].mxu0
        %798 = vmatprep.mubr.bf16.mxu0 %v583
        %799 = vmatmul.mubr.bf16.gmra.mrb[0].mxu0 %v582
        %v800 = vpop.f32.mrb[0].mxu0
        %v801 = vadd.f32 0.0, %v800
        %v802 = vpop.f32.mrb[0].mxu0
        %v803 = vpop.f32.mrb[0].mxu0
        %v804 = vadd.f32 0.0, %v803
        %v805 = vpop.f32.mrb[0].mxu0
        %806 = vmatprep.mubr.bf16.mxu0 %v585
        %807 = vmatmul.mubr.bf16.gmra.mrb[0].mxu0 %v584
        %v808 = vpop.f32.mrb[0].mxu0
        %v809 = vadd.f32 0.0, %v808
        %v810 = vpop.f32.mrb[0].mxu0
        %v811 = vpop.f32.mrb[0].mxu0
        %v812 = vadd.f32 0.0, %v811
        %v813 = vpop.f32.mrb[0].mxu0
        %814 = vmatprep.mubr.bf16.mxu0 %v587
        %815 = vmatmul.mubr.bf16.gmra.mrb[0].mxu0 %v586
        %v816 = vpop.f32.mrb[0].mxu0
        %v817 = vadd.f32 0.0, %v816
        %v818 = vpop.f32.mrb[0].mxu0
        %v819 = vpop.f32.mrb[0].mxu0
        %v820 = vadd.f32 0.0, %v819
        %v821 = vpop.f32.mrb[0].mxu0
        %822 = vmatprep.mubr.bf16.mxu0 %v589
        %823 = vmatmul.mubr.bf16.gmra.mrb[0].mxu0 %v588
        %v824 = vpop.f32.mrb[0].mxu0
        %v825 = vadd.f32 0.0, %v824
        %v826 = vpop.f32.mrb[0].mxu0
        %v827 = vpop.f32.mrb[0].mxu0
        %v828 = vadd.f32 0.0, %v827
        %v829 = vpop.f32.mrb[0].mxu0
        %830 = vmatprep.mubr.bf16.mxu0 %v591
        %831 = vmatmul.mubr.bf16.gmra.mrb[0].mxu0 %v590
        %v832 = vpop.f32.mrb[0].mxu0
        %v833 = vadd.f32 0.0, %v832
        %v834 = vpop.f32.mrb[0].mxu0
        %v835 = vpop.f32.mrb[0].mxu0
        %v836 = vadd.f32 0.0, %v835
        %v837 = vpop.f32.mrb[0].mxu0
        %838 = vmatprep.mubr.bf16.mxu0 %v593
        %839 = vmatmul.mubr.bf16.gmra.mrb[0].mxu0 %v592
        %v840 = vpop.f32.mrb[0].mxu0
        %v841 = vadd.f32 0.0, %v840
        %v842 = vpop.f32.mrb[0].mxu0
        %v843 = vpop.f32.mrb[0].mxu0
        %v844 = vadd.f32 0.0, %v843
        %v845 = vpop.f32.mrb[0].mxu0
        %846 = vmatprep.mubr.bf16.mxu0 %v595
        %847 = vmatmul.mubr.bf16.gmra.mrb[0].mxu0 %v594
        %v848 = vpop.f32.mrb[0].mxu0
        %v849 = vadd.f32 0.0, %v848
        %v850 = vpop.f32.mrb[0].mxu0
        %v851 = vpop.f32.mrb[0].mxu0
        %v852 = vadd.f32 0.0, %v851
        %v853 = vpop.f32.mrb[0].mxu0
        %854 = vmatprep.mubr.bf16.mxu0 %v597
        %855 = vmatmul.mubr.bf16.gmra.mrb[0].mxu0 %v596
        %v856 = vpop.f32.mrb[0].mxu0
        %v857 = vadd.f32 0.0, %v856
        %v858 = vpop.f32.mrb[0].mxu0
        %v859 = vpop.f32.mrb[0].mxu0
        %v860 = vadd.f32 0.0, %v859
        %v861 = vpop.f32.mrb[0].mxu0
        %862 = vmatprep.mubr.bf16.mxu0 %v599
        %863 = vmatmul.mubr.bf16.gmra.mrb[0].mxu0 %v598
        %v864 = vpop.f32.mrb[0].mxu0
        %v865 = vadd.f32 0.0, %v864
        %v866 = vpop.f32.mrb[0].mxu0
        %v867 = vpop.f32.mrb[0].mxu0
        %v868 = vadd.f32 0.0, %v867
        %v869 = vpop.f32.mrb[0].mxu0
        %870 = vmatprep.mubr.bf16.mxu0 %v601
        %871 = vmatmul.mubr.bf16.gmra.mrb[0].mxu0 %v600
        %v872 = vpop.f32.mrb[0].mxu0
        %v873 = vadd.f32 0.0, %v872
        %v874 = vpop.f32.mrb[0].mxu0
        %v875 = vpop.f32.mrb[0].mxu0
        %v876 = vadd.f32 0.0, %v875
        %v877 = vpop.f32.mrb[0].mxu0
        %878 = vmatprep.mubr.bf16.mxu0 %v603
        %879 = vmatmul.mubr.bf16.gmra.mrb[0].mxu0 %v602
        %v880 = vpop.f32.mrb[0].mxu0
        %v881 = vadd.f32 0.0, %v880
        %v882 = vpop.f32.mrb[0].mxu0
        %v883 = vpop.f32.mrb[0].mxu0
        %v884 = vadd.f32 0.0, %v883
        %v885 = vpop.f32.mrb[0].mxu0
        %886 = vmatprep.mubr.bf16.mxu0 %v605
        %887 = vmatmul.mubr.bf16.gmra.mrb[0].mxu0 %v604
        %v888 = vpop.f32.mrb[0].mxu0
        %v889 = vadd.f32 0.0, %v888
        %v890 = vpop.f32.mrb[0].mxu0
        %v891 = vpop.f32.mrb[0].mxu0
        %v892 = vadd.f32 0.0, %v891
        %v893 = vpop.f32.mrb[0].mxu0
        %894 = vdwg.mxu0
        %v895 = vadd.f32 %v382, %v769
        %v896 = vadd.f32 %v383, %v772
        %v897 = vadd.f32 %v384, %v777
        %v898 = vadd.f32 %v385, %v780
        %v899 = vadd.f32 %v386, %v785
        %v900 = vadd.f32 %v387, %v788
        %v901 = vadd.f32 %v388, %v793
        %v902 = vadd.f32 %v389, %v796
        %v903 = vadd.f32 %v390, %v801
        %v904 = vadd.f32 %v391, %v804
        %v905 = vadd.f32 %v392, %v809
        %v906 = vadd.f32 %v393, %v812
        %v907 = vadd.f32 %v394, %v817
        %v908 = vadd.f32 %v395, %v820
        %v909 = vadd.f32 %v396, %v825
        %v910 = vadd.f32 %v397, %v828
        %v911 = vadd.f32 %v398, %v833
        %v912 = vadd.f32 %v399, %v836
        %v913 = vadd.f32 %v400, %v841
        %v914 = vadd.f32 %v401, %v844
        %v915 = vadd.f32 %v402, %v849
        %v916 = vadd.f32 %v403, %v852
        %v917 = vadd.f32 %v404, %v857
        %v918 = vadd.f32 %v405, %v860
        %v919 = vadd.f32 %v406, %v865
        %v920 = vadd.f32 %v407, %v868
        %v921 = vadd.f32 %v408, %v873
        %v922 = vadd.f32 %v409, %v876
        %v923 = vadd.f32 %v410, %v881
        %v924 = vadd.f32 %v411, %v884
        %v925 = vadd.f32 %v412, %v889
        %v926 = vadd.f32 %v413, %v892
        %927 = vst [vmem:[#allocation2] sm:$0xff] %v895
        %928 = vst [vmem:[#allocation2 + $0x8] sm:$0xff] %v896
        %929 = vst [vmem:[#allocation2 + $0x10] sm:$0xff] %v897
        %930 = vst [vmem:[#allocation2 + $0x18] sm:$0xff] %v898
        %931 = vst [vmem:[#allocation2 + $0x20] sm:$0xff] %v899
        %932 = vst [vmem:[#allocation2 + $0x28] sm:$0xff] %v900
        %933 = vst [vmem:[#allocation2 + $0x30] sm:$0xff] %v901
        %934 = vst [vmem:[#allocation2 + $0x38] sm:$0xff] %v902
        %935 = vst [vmem:[#allocation2 + $0x40] sm:$0xff] %v903
        %936 = vst [vmem:[#allocation2 + $0x48] sm:$0xff] %v904
        %937 = vst [vmem:[#allocation2 + $0x50] sm:$0xff] %v905
        %938 = vst [vmem:[#allocation2 + $0x58] sm:$0xff] %v906
        %939 = vst [vmem:[#allocation2 + $0x60] sm:$0xff] %v907
        %940 = vst [vmem:[#allocation2 + $0x68] sm:$0xff] %v908
        %941 = vst [vmem:[#allocation2 + $0x70] sm:$0xff] %v909
        %942 = vst [vmem:[#allocation2 + $0x78] sm:$0xff] %v910
        %943 = vst [vmem:[#allocation2 + $0x80] sm:$0xff] %v911
        %944 = vst [vmem:[#allocation2 + $0x88] sm:$0xff] %v912
        %945 = vst [vmem:[#allocation2 + $0x90] sm:$0xff] %v913
        %946 = vst [vmem:[#allocation2 + $0x98] sm:$0xff] %v914
        %947 = vst [vmem:[#allocation2 + $0xa0] sm:$0xff] %v915
        %948 = vst [vmem:[#allocation2 + $0xa8] sm:$0xff] %v916
        %949 = vst [vmem:[#allocation2 + $0xb0] sm:$0xff] %v917
        %950 = vst [vmem:[#allocation2 + $0xb8] sm:$0xff] %v918
        %951 = vst [vmem:[#allocation2 + $0xc0] sm:$0xff] %v919
        %952 = vst [vmem:[#allocation2 + $0xc8] sm:$0xff] %v920
        %953 = vst [vmem:[#allocation2 + $0xd0] sm:$0xff] %v921
        %954 = vst [vmem:[#allocation2 + $0xd8] sm:$0xff] %v922
        %955 = vst [vmem:[#allocation2 + $0xe0] sm:$0xff] %v923
        %956 = vst [vmem:[#allocation2 + $0xe8] sm:$0xff] %v924
        %957 = vst [vmem:[#allocation2 + $0xf0] sm:$0xff] %v925
        %958 = vst [vmem:[#allocation2 + $0xf8] sm:$0xff] %v926
        %p959 = scmp.eq.s32.totalorder %s18, 1
        // Predicated region
        $region71: #{classifier_forward.3} parent=61 // pred_check
          %p960 = pneg %p959
        $region72: #{classifier_forward.3} parent=61 // pred_check_branch
          %962 = sbr.rel (%p960) target = $region74
        $region73: #{classifier_forward.3} parent=61 // pred_region
          %v963 = vld [vmem:[#allocation2] sm:$0xff]
          %v964 = vld [vmem:[#allocation2 + $0x8] sm:$0xff]
          %v965 = vld [vmem:[#allocation2 + $0x10] sm:$0xff]
          %v966 = vld [vmem:[#allocation2 + $0x18] sm:$0xff]
          %v967 = vld [vmem:[#allocation2 + $0x20] sm:$0xff]
          %v968 = vld [vmem:[#allocation2 + $0x28] sm:$0xff]
          %v969 = vld [vmem:[#allocation2 + $0x30] sm:$0xff]
          %v970 = vld [vmem:[#allocation2 + $0x38] sm:$0xff]
          %v971 = vld [vmem:[#allocation2 + $0x40] sm:$0xff]
          %v972 = vld [vmem:[#allocation2 + $0x48] sm:$0xff]
          %v973 = vld [vmem:[#allocation2 + $0x50] sm:$0xff]
          %v974 = vld [vmem:[#allocation2 + $0x58] sm:$0xff]
          %v975 = vld [vmem:[#allocation2 + $0x60] sm:$0xff]
          %v976 = vld [vmem:[#allocation2 + $0x68] sm:$0xff]
          %v977 = vld [vmem:[#allocation2 + $0x70] sm:$0xff]
          %v978 = vld [vmem:[#allocation2 + $0x78] sm:$0xff]
          %v979 = vld [vmem:[#allocation2 + $0x80] sm:$0xff]
          %v980 = vld [vmem:[#allocation2 + $0x88] sm:$0xff]
          %v981 = vld [vmem:[#allocation2 + $0x90] sm:$0xff]
          %v982 = vld [vmem:[#allocation2 + $0x98] sm:$0xff]
          %v983 = vld [vmem:[#allocation2 + $0xa0] sm:$0xff]
          %v984 = vld [vmem:[#allocation2 + $0xa8] sm:$0xff]
          %v985 = vld [vmem:[#allocation2 + $0xb0] sm:$0xff]
          %v986 = vld [vmem:[#allocation2 + $0xb8] sm:$0xff]
          %v987 = vld [vmem:[#allocation2 + $0xc0] sm:$0xff]
          %v988 = vld [vmem:[#allocation2 + $0xc8] sm:$0xff]
          %v989 = vld [vmem:[#allocation2 + $0xd0] sm:$0xff]
          %v990 = vld [vmem:[#allocation2 + $0xd8] sm:$0xff]
          %v991 = vld [vmem:[#allocation2 + $0xe0] sm:$0xff]
          %v992 = vld [vmem:[#allocation2 + $0xe8] sm:$0xff]
          %v993 = vld [vmem:[#allocation2 + $0xf0] sm:$0xff]
          %v994 = vld [vmem:[#allocation2 + $0xf8] sm:$0xff]
          %v995 = vlaneseq
          %v996 = vand.u32 %v995, 127
          %vm997 = vcmp.lt.s32.totalorder %v996, 8
          %v998 = vsel %vm997, %v963, -1e+30
          %v999 = vsel %vm997, %v964, -1e+30
          %v1000 = vsel %vm997, %v965, -1e+30
          %v1001 = vsel %vm997, %v966, -1e+30
          %v1002 = vsel %vm997, %v967, -1e+30
          %v1003 = vsel %vm997, %v968, -1e+30
          %v1004 = vsel %vm997, %v969, -1e+30
          %v1005 = vsel %vm997, %v970, -1e+30
          %v1006 = vsel %vm997, %v971, -1e+30
          %v1007 = vsel %vm997, %v972, -1e+30
          %v1008 = vsel %vm997, %v973, -1e+30
          %v1009 = vsel %vm997, %v974, -1e+30
          %v1010 = vsel %vm997, %v975, -1e+30
          %v1011 = vsel %vm997, %v976, -1e+30
          %v1012 = vsel %vm997, %v977, -1e+30
          %v1013 = vsel %vm997, %v978, -1e+30
          %v1014 = vsel %vm997, %v979, -1e+30
          %v1015 = vsel %vm997, %v980, -1e+30
          %v1016 = vsel %vm997, %v981, -1e+30
          %v1017 = vsel %vm997, %v982, -1e+30
          %v1018 = vsel %vm997, %v983, -1e+30
          %v1019 = vsel %vm997, %v984, -1e+30
          %v1020 = vsel %vm997, %v985, -1e+30
          %v1021 = vsel %vm997, %v986, -1e+30
          %v1022 = vsel %vm997, %v987, -1e+30
          %v1023 = vsel %vm997, %v988, -1e+30
          %v1024 = vsel %vm997, %v989, -1e+30
          %v1025 = vsel %vm997, %v990, -1e+30
          %v1026 = vsel %vm997, %v991, -1e+30
          %v1027 = vsel %vm997, %v992, -1e+30
          %v1028 = vsel %vm997, %v993, -1e+30
          %v1029 = vsel %vm997, %v994, -1e+30
          %1030 = vmax.xlane.f32.xlu0 %v998
          %v1031 = vpop.xlane.xlu0 %1030
          %1032 = vmax.xlane.f32.xlu0 %v999
          %v1033 = vpop.xlane.xlu0 %1032
          %1034 = vmax.xlane.f32.xlu0 %v1000
          %v1035 = vpop.xlane.xlu0 %1034
          %1036 = vmax.xlane.f32.xlu0 %v1001
          %v1037 = vpop.xlane.xlu0 %1036
          %1038 = vmax.xlane.f32.xlu0 %v1002
          %v1039 = vpop.xlane.xlu0 %1038
          %1040 = vmax.xlane.f32.xlu0 %v1003
          %v1041 = vpop.xlane.xlu0 %1040
          %1042 = vmax.xlane.f32.xlu0 %v1004
          %v1043 = vpop.xlane.xlu0 %1042
          %1044 = vmax.xlane.f32.xlu0 %v1005
          %v1045 = vpop.xlane.xlu0 %1044
          %1046 = vmax.xlane.f32.xlu0 %v1006
          %v1047 = vpop.xlane.xlu0 %1046
          %1048 = vmax.xlane.f32.xlu0 %v1007
          %v1049 = vpop.xlane.xlu0 %1048
          %1050 = vmax.xlane.f32.xlu0 %v1008
          %v1051 = vpop.xlane.xlu0 %1050
          %1052 = vmax.xlane.f32.xlu0 %v1009
          %v1053 = vpop.xlane.xlu0 %1052
          %1054 = vmax.xlane.f32.xlu0 %v1010
          %v1055 = vpop.xlane.xlu0 %1054
          %1056 = vmax.xlane.f32.xlu0 %v1011
          %v1057 = vpop.xlane.xlu0 %1056
          %1058 = vmax.xlane.f32.xlu0 %v1012
          %v1059 = vpop.xlane.xlu0 %1058
          %1060 = vmax.xlane.f32.xlu0 %v1013
          %v1061 = vpop.xlane.xlu0 %1060
          %1062 = vmax.xlane.f32.xlu0 %v1014
          %v1063 = vpop.xlane.xlu0 %1062
          %1064 = vmax.xlane.f32.xlu0 %v1015
          %v1065 = vpop.xlane.xlu0 %1064
          %1066 = vmax.xlane.f32.xlu0 %v1016
          %v1067 = vpop.xlane.xlu0 %1066
          %1068 = vmax.xlane.f32.xlu0 %v1017
          %v1069 = vpop.xlane.xlu0 %1068
          %1070 = vmax.xlane.f32.xlu0 %v1018
          %v1071 = vpop.xlane.xlu0 %1070
          %1072 = vmax.xlane.f32.xlu0 %v1019
          %v1073 = vpop.xlane.xlu0 %1072
          %1074 = vmax.xlane.f32.xlu0 %v1020
          %v1075 = vpop.xlane.xlu0 %1074
          %1076 = vmax.xlane.f32.xlu0 %v1021
          %v1077 = vpop.xlane.xlu0 %1076
          %1078 = vmax.xlane.f32.xlu0 %v1022
          %v1079 = vpop.xlane.xlu0 %1078
          %1080 = vmax.xlane.f32.xlu0 %v1023
          %v1081 = vpop.xlane.xlu0 %1080
          %1082 = vmax.xlane.f32.xlu0 %v1024
          %v1083 = vpop.xlane.xlu0 %1082
          %1084 = vmax.xlane.f32.xlu0 %v1025
          %v1085 = vpop.xlane.xlu0 %1084
          %1086 = vmax.xlane.f32.xlu0 %v1026
          %v1087 = vpop.xlane.xlu0 %1086
          %1088 = vmax.xlane.f32.xlu0 %v1027
          %v1089 = vpop.xlane.xlu0 %1088
          %1090 = vmax.xlane.f32.xlu0 %v1028
          %v1091 = vpop.xlane.xlu0 %1090
          %1092 = vmax.xlane.f32.xlu0 %v1029
          %v1093 = vpop.xlane.xlu0 %1092
          %v1094 = vsub.f32 %v998, %v1031
          %v1095 = vsub.f32 %v999, %v1033
          %v1096 = vsub.f32 %v1000, %v1035
          %v1097 = vsub.f32 %v1001, %v1037
          %v1098 = vsub.f32 %v1002, %v1039
          %v1099 = vsub.f32 %v1003, %v1041
          %v1100 = vsub.f32 %v1004, %v1043
          %v1101 = vsub.f32 %v1005, %v1045
          %v1102 = vsub.f32 %v1006, %v1047
          %v1103 = vsub.f32 %v1007, %v1049
          %v1104 = vsub.f32 %v1008, %v1051
          %v1105 = vsub.f32 %v1009, %v1053
          %v1106 = vsub.f32 %v1010, %v1055
          %v1107 = vsub.f32 %v1011, %v1057
          %v1108 = vsub.f32 %v1012, %v1059
          %v1109 = vsub.f32 %v1013, %v1061
          %v1110 = vsub.f32 %v1014, %v1063
          %v1111 = vsub.f32 %v1015, %v1065
          %v1112 = vsub.f32 %v1016, %v1067
          %v1113 = vsub.f32 %v1017, %v1069
          %v1114 = vsub.f32 %v1018, %v1071
          %v1115 = vsub.f32 %v1019, %v1073
          %v1116 = vsub.f32 %v1020, %v1075
          %v1117 = vsub.f32 %v1021, %v1077
          %v1118 = vsub.f32 %v1022, %v1079
          %v1119 = vsub.f32 %v1023, %v1081
          %v1120 = vsub.f32 %v1024, %v1083
          %v1121 = vsub.f32 %v1025, %v1085
          %v1122 = vsub.f32 %v1026, %v1087
          %v1123 = vsub.f32 %v1027, %v1089
          %v1124 = vsub.f32 %v1028, %v1091
          %v1125 = vsub.f32 %v1029, %v1093
          %v1126 = vmul.f32 %v1094, 1.442695
          %v1127 = vpow.pop %v1126
          %v1128 = vmul.f32 %v1095, 1.442695
          %v1129 = vpow.pop %v1128
          %v1130 = vmul.f32 %v1096, 1.442695
          %v1131 = vpow.pop %v1130
          %v1132 = vmul.f32 %v1097, 1.442695
          %v1133 = vpow.pop %v1132
          %v1134 = vmul.f32 %v1098, 1.442695
          %v1135 = vpow.pop %v1134
          %v1136 = vmul.f32 %v1099, 1.442695
          %v1137 = vpow.pop %v1136
          %v1138 = vmul.f32 %v1100, 1.442695
          %v1139 = vpow.pop %v1138
          %v1140 = vmul.f32 %v1101, 1.442695
          %v1141 = vpow.pop %v1140
          %v1142 = vmul.f32 %v1102, 1.442695
          %v1143 = vpow.pop %v1142
          %v1144 = vmul.f32 %v1103, 1.442695
          %v1145 = vpow.pop %v1144
          %v1146 = vmul.f32 %v1104, 1.442695
          %v1147 = vpow.pop %v1146
          %v1148 = vmul.f32 %v1105, 1.442695
          %v1149 = vpow.pop %v1148
          %v1150 = vmul.f32 %v1106, 1.442695
          %v1151 = vpow.pop %v1150
          %v1152 = vmul.f32 %v1107, 1.442695
          %v1153 = vpow.pop %v1152
          %v1154 = vmul.f32 %v1108, 1.442695
          %v1155 = vpow.pop %v1154
          %v1156 = vmul.f32 %v1109, 1.442695
          %v1157 = vpow.pop %v1156
          %v1158 = vmul.f32 %v1110, 1.442695
          %v1159 = vpow.pop %v1158
          %v1160 = vmul.f32 %v1111, 1.442695
          %v1161 = vpow.pop %v1160
          %v1162 = vmul.f32 %v1112, 1.442695
          %v1163 = vpow.pop %v1162
          %v1164 = vmul.f32 %v1113, 1.442695
          %v1165 = vpow.pop %v1164
          %v1166 = vmul.f32 %v1114, 1.442695
          %v1167 = vpow.pop %v1166
          %v1168 = vmul.f32 %v1115, 1.442695
          %v1169 = vpow.pop %v1168
          %v1170 = vmul.f32 %v1116, 1.442695
          %v1171 = vpow.pop %v1170
          %v1172 = vmul.f32 %v1117, 1.442695
          %v1173 = vpow.pop %v1172
          %v1174 = vmul.f32 %v1118, 1.442695
          %v1175 = vpow.pop %v1174
          %v1176 = vmul.f32 %v1119, 1.442695
          %v1177 = vpow.pop %v1176
          %v1178 = vmul.f32 %v1120, 1.442695
          %v1179 = vpow.pop %v1178
          %v1180 = vmul.f32 %v1121, 1.442695
          %v1181 = vpow.pop %v1180
          %v1182 = vmul.f32 %v1122, 1.442695
          %v1183 = vpow.pop %v1182
          %v1184 = vmul.f32 %v1123, 1.442695
          %v1185 = vpow.pop %v1184
          %v1186 = vmul.f32 %v1124, 1.442695
          %v1187 = vpow.pop %v1186
          %v1188 = vmul.f32 %v1125, 1.442695
          %v1189 = vpow.pop %v1188
          %1190 = vadd.xlane.f32.xlu0 %v1127
          %v1191 = vpop.xlane.xlu0 %1190
          %1192 = vadd.xlane.f32.xlu0 %v1129
          %v1193 = vpop.xlane.xlu0 %1192
          %1194 = vadd.xlane.f32.xlu0 %v1131
          %v1195 = vpop.xlane.xlu0 %1194
          %1196 = vadd.xlane.f32.xlu0 %v1133
          %v1197 = vpop.xlane.xlu0 %1196
          %1198 = vadd.xlane.f32.xlu0 %v1135
          %v1199 = vpop.xlane.xlu0 %1198
          %1200 = vadd.xlane.f32.xlu0 %v1137
          %v1201 = vpop.xlane.xlu0 %1200
          %1202 = vadd.xlane.f32.xlu0 %v1139
          %v1203 = vpop.xlane.xlu0 %1202
          %1204 = vadd.xlane.f32.xlu0 %v1141
          %v1205 = vpop.xlane.xlu0 %1204
          %1206 = vadd.xlane.f32.xlu0 %v1143
          %v1207 = vpop.xlane.xlu0 %1206
          %1208 = vadd.xlane.f32.xlu0 %v1145
          %v1209 = vpop.xlane.xlu0 %1208
          %1210 = vadd.xlane.f32.xlu0 %v1147
          %v1211 = vpop.xlane.xlu0 %1210
          %1212 = vadd.xlane.f32.xlu0 %v1149
          %v1213 = vpop.xlane.xlu0 %1212
          %1214 = vadd.xlane.f32.xlu0 %v1151
          %v1215 = vpop.xlane.xlu0 %1214
          %1216 = vadd.xlane.f32.xlu0 %v1153
          %v1217 = vpop.xlane.xlu0 %1216
          %1218 = vadd.xlane.f32.xlu0 %v1155
          %v1219 = vpop.xlane.xlu0 %1218
          %1220 = vadd.xlane.f32.xlu0 %v1157
          %v1221 = vpop.xlane.xlu0 %1220
          %1222 = vadd.xlane.f32.xlu0 %v1159
          %v1223 = vpop.xlane.xlu0 %1222
          %1224 = vadd.xlane.f32.xlu0 %v1161
          %v1225 = vpop.xlane.xlu0 %1224
          %1226 = vadd.xlane.f32.xlu0 %v1163
          %v1227 = vpop.xlane.xlu0 %1226
          %1228 = vadd.xlane.f32.xlu0 %v1165
          %v1229 = vpop.xlane.xlu0 %1228
          %1230 = vadd.xlane.f32.xlu0 %v1167
          %v1231 = vpop.xlane.xlu0 %1230
          %1232 = vadd.xlane.f32.xlu0 %v1169
          %v1233 = vpop.xlane.xlu0 %1232
          %1234 = vadd.xlane.f32.xlu0 %v1171
          %v1235 = vpop.xlane.xlu0 %1234
          %1236 = vadd.xlane.f32.xlu0 %v1173
          %v1237 = vpop.xlane.xlu0 %1236
          %1238 = vadd.xlane.f32.xlu0 %v1175
          %v1239 = vpop.xlane.xlu0 %1238
          %1240 = vadd.xlane.f32.xlu0 %v1177
          %v1241 = vpop.xlane.xlu0 %1240
          %1242 = vadd.xlane.f32.xlu0 %v1179
          %v1243 = vpop.xlane.xlu0 %1242
          %1244 = vadd.xlane.f32.xlu0 %v1181
          %v1245 = vpop.xlane.xlu0 %1244
          %1246 = vadd.xlane.f32.xlu0 %v1183
          %v1247 = vpop.xlane.xlu0 %1246
          %1248 = vadd.xlane.f32.xlu0 %v1185
          %v1249 = vpop.xlane.xlu0 %1248
          %1250 = vadd.xlane.f32.xlu0 %v1187
          %v1251 = vpop.xlane.xlu0 %1250
          %1252 = vadd.xlane.f32.xlu0 %v1189
          %v1253 = vpop.xlane.xlu0 %1252
          %v1254 = vrcp.pop %v1191
          %v1255 = vmul.f32 %v1127, %v1254
          %v1256 = vrcp.pop %v1193
          %v1257 = vmul.f32 %v1129, %v1256
          %v1258 = vrcp.pop %v1195
          %v1259 = vmul.f32 %v1131, %v1258
          %v1260 = vrcp.pop %v1197
          %v1261 = vmul.f32 %v1133, %v1260
          %v1262 = vrcp.pop %v1199
          %v1263 = vmul.f32 %v1135, %v1262
          %v1264 = vrcp.pop %v1201
          %v1265 = vmul.f32 %v1137, %v1264
          %v1266 = vrcp.pop %v1203
          %v1267 = vmul.f32 %v1139, %v1266
          %v1268 = vrcp.pop %v1205
          %v1269 = vmul.f32 %v1141, %v1268
          %v1270 = vrcp.pop %v1207
          %v1271 = vmul.f32 %v1143, %v1270
          %v1272 = vrcp.pop %v1209
          %v1273 = vmul.f32 %v1145, %v1272
          %v1274 = vrcp.pop %v1211
          %v1275 = vmul.f32 %v1147, %v1274
          %v1276 = vrcp.pop %v1213
          %v1277 = vmul.f32 %v1149, %v1276
          %v1278 = vrcp.pop %v1215
          %v1279 = vmul.f32 %v1151, %v1278
          %v1280 = vrcp.pop %v1217
          %v1281 = vmul.f32 %v1153, %v1280
          %v1282 = vrcp.pop %v1219
          %v1283 = vmul.f32 %v1155, %v1282
          %v1284 = vrcp.pop %v1221
          %v1285 = vmul.f32 %v1157, %v1284
          %v1286 = vrcp.pop %v1223
          %v1287 = vmul.f32 %v1159, %v1286
          %v1288 = vrcp.pop %v1225
          %v1289 = vmul.f32 %v1161, %v1288
          %v1290 = vrcp.pop %v1227
          %v1291 = vmul.f32 %v1163, %v1290
          %v1292 = vrcp.pop %v1229
          %v1293 = vmul.f32 %v1165, %v1292
          %v1294 = vrcp.pop %v1231
          %v1295 = vmul.f32 %v1167, %v1294
          %v1296 = vrcp.pop %v1233
          %v1297 = vmul.f32 %v1169, %v1296
          %v1298 = vrcp.pop %v1235
          %v1299 = vmul.f32 %v1171, %v1298
          %v1300 = vrcp.pop %v1237
          %v1301 = vmul.f32 %v1173, %v1300
          %v1302 = vrcp.pop %v1239
          %v1303 = vmul.f32 %v1175, %v1302
          %v1304 = vrcp.pop %v1241
          %v1305 = vmul.f32 %v1177, %v1304
          %v1306 = vrcp.pop %v1243
          %v1307 = vmul.f32 %v1179, %v1306
          %v1308 = vrcp.pop %v1245
          %v1309 = vmul.f32 %v1181, %v1308
          %v1310 = vrcp.pop %v1247
          %v1311 = vmul.f32 %v1183, %v1310
          %v1312 = vrcp.pop %v1249
          %v1313 = vmul.f32 %v1185, %v1312
          %v1314 = vrcp.pop %v1251
          %v1315 = vmul.f32 %v1187, %v1314
          %v1316 = vrcp.pop %v1253
          %v1317 = vmul.f32 %v1189, %v1316
          %1318 = vst [vmem:[%s343] sm:$0xff] %v1255
          %1319 = vst [vmem:[%s343 + $0x8] sm:$0xff] %v1257
          %1320 = vst [vmem:[%s343 + $0x10] sm:$0xff] %v1259
          %1321 = vst [vmem:[%s343 + $0x18] sm:$0xff] %v1261
          %1322 = vst [vmem:[%s343 + $0x20] sm:$0xff] %v1263
          %1323 = vst [vmem:[%s343 + $0x28] sm:$0xff] %v1265
          %1324 = vst [vmem:[%s343 + $0x30] sm:$0xff] %v1267
          %1325 = vst [vmem:[%s343 + $0x38] sm:$0xff] %v1269
          %1326 = vst [vmem:[%s343 + $0x40] sm:$0xff] %v1271
          %1327 = vst [vmem:[%s343 + $0x48] sm:$0xff] %v1273
          %1328 = vst [vmem:[%s343 + $0x50] sm:$0xff] %v1275
          %1329 = vst [vmem:[%s343 + $0x58] sm:$0xff] %v1277
          %1330 = vst [vmem:[%s343 + $0x60] sm:$0xff] %v1279
          %1331 = vst [vmem:[%s343 + $0x68] sm:$0xff] %v1281
          %1332 = vst [vmem:[%s343 + $0x70] sm:$0xff] %v1283
          %1333 = vst [vmem:[%s343 + $0x78] sm:$0xff] %v1285
          %1334 = vst [vmem:[%s343 + $0x80] sm:$0xff] %v1287
          %1335 = vst [vmem:[%s343 + $0x88] sm:$0xff] %v1289
          %1336 = vst [vmem:[%s343 + $0x90] sm:$0xff] %v1291
          %1337 = vst [vmem:[%s343 + $0x98] sm:$0xff] %v1293
          %1338 = vst [vmem:[%s343 + $0xa0] sm:$0xff] %v1295
          %1339 = vst [vmem:[%s343 + $0xa8] sm:$0xff] %v1297
          %1340 = vst [vmem:[%s343 + $0xb0] sm:$0xff] %v1299
          %1341 = vst [vmem:[%s343 + $0xb8] sm:$0xff] %v1301
          %1342 = vst [vmem:[%s343 + $0xc0] sm:$0xff] %v1303
          %1343 = vst [vmem:[%s343 + $0xc8] sm:$0xff] %v1305
          %1344 = vst [vmem:[%s343 + $0xd0] sm:$0xff] %v1307
          %1345 = vst [vmem:[%s343 + $0xd8] sm:$0xff] %v1309
          %1346 = vst [vmem:[%s343 + $0xe0] sm:$0xff] %v1311
          %1347 = vst [vmem:[%s343 + $0xe8] sm:$0xff] %v1313
          %1348 = vst [vmem:[%s343 + $0xf0] sm:$0xff] %v1315
          %1349 = vst [vmem:[%s343 + $0xf8] sm:$0xff] %v1317
        $region74: #{classifier_forward.3} parent=61 // pred_fallthru
          _
        %s1350 = smul.u32 32, %s17
        %p1351 = scmp.lt.s32.totalorder %s1350, 63
        %s1352 = scalar_select %p1351, %s1350, 63
        %s1353 = smul.addr %s1352, 8
        %s1354 = scalar_lea.vmem %s2, %s1353
        // Predicated region
        $region75: #{classifier_forward.3} parent=61 // pred_check
          %p1355 = pneg %p97
        $region76: #{classifier_forward.3} parent=61 // pred_check_branch
          %1357 = sbr.rel (%p1355) target = $region78
        $region77: #{classifier_forward.3} parent=61 // pred_region
          %s1358 = smul.u32 32, %s17
        $region78: #{classifier_forward.3} parent=61 // pred_fallthru
          _
      $region62: #{classifier_forward.3} parent=5 // pred_fallthru
        _
      %p1359 = scmp.le.s32.totalorder 2, %s8
      // Predicated region
      $region79: #{classifier_forward.3} parent=5 // pred_check
        %p1360 = pneg %p1359
      $region80: #{classifier_forward.3} parent=5 // pred_check_branch
        %1362 = sbr.rel (%p1360) target = $region82
      $region81: #{classifier_forward.3} parent=5 // pred_region
        %s1363 = ssub.s32 %s8, 2
        // Predicated region
        $region83: #{classifier_forward.3} parent=81 // pred_check
          %p1364 = pneg %p103
        $region84: #{classifier_forward.3} parent=81 // pred_check_branch
          %1366 = sbr.rel (%p1364) target = $region86
        $region85: #{classifier_forward.3} parent=81 // pred_region
          %s1367 = smul.u32 32, %s19
          %p1368 = scmp.lt.s32.totalorder %s1367, 63
          %s1369 = scalar_select %p1368, %s1367, 63
          %s1370 = smul.addr %s1369, 8
          %s1371 = scalar_lea.vmem %s2, %s1370
        $region86: #{classifier_forward.3} parent=81 // pred_fallthru
          _
      $region82: #{classifier_forward.3} parent=5 // pred_fallthru
        _
    $region6: #{classifier_forward.3} parent=1 // loop_footer
      %s12 = sadd.s32 1, %s8
    $region7: #{classifier_forward.3} parent=1 // loop_footer_branch
      %7 = sbr.rel target = $region3
    $region8: #{classifier_forward.3} parent=1 // loop_exit
      _

// kernel: classifier_forward.2
$region0: #{classifier_forward.2}
  #allocation0 [shape = 'u32[]', space=smem, size = 0x4, offset = 0x4, fixed_abs, tag = 'smem constant byte address 0x4 - core index']
  #allocation1 [shape = 'u32[144,128]{1,0:T(1,128)}', space=vmem, size = 0x12000, scoped, tag = 'internal scratch']
  #allocation2 [shape = 'f32[256,128]{1,0:T(8,128)}', space=vmem, size = 0x20000, scoped, tag = 'scratch operand']
  %s0 = inlined_call_operand.hbm [shape: bf16[512,512], index: 0, kind: input, shape index: {}]
  %s1 = inlined_call_operand.hbm [shape: bf16[512,128], index: 1, kind: input, shape index: {}]
  %s2 = inlined_call_operand.hbm [shape: bf16[128,128], index: 2, kind: input, shape index: {}]
  %s3 = inlined_call_operand.hbm [shape: bf16[128,128], index: 3, kind: input, shape index: {}]
  %s4 = inlined_call_operand.vmem [shape: bf16[512,128], index: 4, kind: output, shape index: {}]
  %s5 = sld [smem:[#allocation0]]
  $region73: #{classifier_forward.2} parent=0
    _
  %s7 = ssub.s32 1, %s5
  %s8 = scalar_select 0, %s7, %s5
  $region1: #{classifier_forward.2} parent=0
    #allocation3 [shape = 'u8[262144]{0}', space=vmem, size = 0x40000, scoped, tag = 'input window, operand 0']
    #allocation4 [shape = 's32[2]{0}', space=sflag, size = 0x8, scoped, tag = 'scoped memory for classifier_forward.2']
    #allocation5 [shape = 'u8[131072]{0}', space=vmem, size = 0x20000, scoped, tag = 'input window, operand 1']
    #allocation6 [shape = 's32[2]{0}', space=sflag, size = 0x8, scoped, tag = 'scoped memory for classifier_forward.2']
    #allocation7 [shape = 'u8[32768]{0}', space=vmem, size = 0x8000, scoped, tag = 'input window, operand 2, single buffered']
    #allocation8 [shape = 'u8[32768]{0}', space=vmem, size = 0x8000, scoped, tag = 'input window, operand 3, single buffered']
    #allocation9 [shape = 's32[1]{0}', space=sflag, size = 0x4, scoped, tag = 'scoped memory for classifier_forward.2']
    %9 = vsyncpa [#allocation4], 0
    %s10 = scalar_lea.sflag [#allocation4], 1
    %11 = vsyncpa %s10, 0
    %12 = vsyncpa [#allocation6], 0
    %s13 = scalar_lea.sflag [#allocation6], 1
    %14 = vsyncpa %s13, 0
    %15 = vsyncpa [#allocation9], 0
    loop: start=0, step=1, limit=6
    $region2: #{classifier_forward.2} parent=1 // loop_pre_header
      _
    $region3: #{classifier_forward.2} parent=1 // loop_header
      %s17 = sphi 0, %s21
      %p18 = scmp.ge.s32.totalorder %s17, 6
      %s24 = sphi 0, %s36
      %s25 = sphi 0, %s32
      %s26 = sphi 0, %s24
      %s27 = sphi 0, %s25
      %s28 = sphi 0, %s26
      %s29 = sphi 0, %s27
      %s41 = sphi 0, %s43
      %s44 = sphi 0, %s41
      %s45 = sphi 0, %s44
      %s61 = sphi 0, %s45
      %s67 = sphi 0, %s69
      %s70 = sphi 0, %s67
      %s71 = sphi 0, %s70
      %s87 = sphi 0, %s71
      %s91 = sphi 0, %s91
      %s93 = sphi 0, %s91
      %s94 = sphi 0, %s93
      %s108 = sphi 0, %s94
      %s112 = sphi 0, %s112
      %s114 = sphi 0, %s112
      %s115 = sphi 0, %s114
      %s129 = sphi 0, %s115
      %s135 = sphi 0, %s137
      %s138 = sphi 0, %s135
      %s139 = sphi 0, %s138
      %s155 = sphi 0, %s139
    $region4: #{classifier_forward.2} parent=1 // loop_header_branch
      %20 = sbr.rel (%p18) target = $region8
    $region5: #{classifier_forward.2} parent=1 // loop_body
      %s22 = ssub.s32 %s17, 1
      %s23 = ssub.s32 %s17, 2
      %s30 = sadd.s32 1, %s25
      %p31 = scmp.ge.s32.totalorder %s30, 2
      %s32 = scalar_select %p31, 0, %s30
      %s33 = sadd.s32 1, %s24
      %s34 = scalar_select %p31, %s33, %s24
      %p35 = scmp.ge.s32.totalorder %s34, 2
      %s36 = scalar_select %p35, 0, %s34
      %s37 = ssub.s32 %s24, %s36
      %s38 = ssub.s32 %s25, %s32
      %s39 = sor.u32 %s37, %s38
      %p40 = scmp.eq.s32.totalorder %s39, 0
      %s42 = sadd.s32 %s41, 1
      %s43 = scalar_select %p40, %s41, %s42
      %p46 = pneg %p40
      %p47 = scmp.eq.s32.totalorder %s17, 3
      %p48 = por %p46, %p47
      %p49 = scmp.ne.s32.totalorder %s41, %s44
      %p50 = scmp.eq.s32.totalorder %s17, 0
      %p51 = por %p49, %p50
      %p52 = scmp.ne.s32.totalorder %s41, %s44
      %p53 = scmp.eq.s32.totalorder %s22, 3
      %p54 = por %p52, %p53
      %p55 = scmp.ne.s32.totalorder %s44, %s45
      %p56 = scmp.eq.s32.totalorder %s22, 0
      %p57 = por %p55, %p56
      %p58 = scmp.ne.s32.totalorder %s44, %s45
      %p59 = scmp.eq.s32.totalorder %s23, 3
      %p60 = por %p58, %p59
      %p62 = scmp.ne.s32.totalorder %s45, %s61
      %p63 = scmp.eq.s32.totalorder %s23, 0
      %p64 = por %p62, %p63
      %s65 = ssub.s32 %s25, %s32
      %p66 = scmp.eq.s32.totalorder %s65, 0
      %s68 = sadd.s32 %s67, 1
      %s69 = scalar_select %p66, %s67, %s68
      %p72 = pneg %p66
      %p73 = scmp.eq.s32.totalorder %s17, 3
      %p74 = por %p72, %p73
      %p75 = scmp.ne.s32.totalorder %s67, %s70
      %p76 = scmp.eq.s32.totalorder %s17, 0
      %p77 = por %p75, %p76
      %p78 = scmp.ne.s32.totalorder %s67, %s70
      %p79 = scmp.eq.s32.totalorder %s22, 3
      %p80 = por %p78, %p79
      %p81 = scmp.ne.s32.totalorder %s70, %s71
      %p82 = scmp.eq.s32.totalorder %s22, 0
      %p83 = por %p81, %p82
      %p84 = scmp.ne.s32.totalorder %s70, %s71
      %p85 = scmp.eq.s32.totalorder %s23, 3
      %p86 = por %p84, %p85
      %p88 = scmp.ne.s32.totalorder %s71, %s87
      %p89 = scmp.eq.s32.totalorder %s23, 0
      %p90 = por %p88, %p89
      %s92 = sadd.s32 %s91, 1
      %p95 = scmp.eq.s32.totalorder %s17, 3
      %p96 = scmp.ne.s32.totalorder %s91, %s93
      %p97 = scmp.eq.s32.totalorder %s17, 0
      %p98 = por %p96, %p97
      %p99 = scmp.ne.s32.totalorder %s91, %s93
      %p100 = scmp.eq.s32.totalorder %s22, 3
      %p101 = por %p99, %p100
      %p102 = scmp.ne.s32.totalorder %s93, %s94
      %p103 = scmp.eq.s32.totalorder %s22, 0
      %p104 = por %p102, %p103
      %p105 = scmp.ne.s32.totalorder %s93, %s94
      %p106 = scmp.eq.s32.totalorder %s23, 3
      %p107 = por %p105, %p106
      %p109 = scmp.ne.s32.totalorder %s94, %s108
      %p110 = scmp.eq.s32.totalorder %s23, 0
      %p111 = por %p109, %p110
      %s113 = sadd.s32 %s112, 1
      %p116 = scmp.eq.s32.totalorder %s17, 3
      %p117 = scmp.ne.s32.totalorder %s112, %s114
      %p118 = scmp.eq.s32.totalorder %s17, 0
      %p119 = por %p117, %p118
      %p120 = scmp.ne.s32.totalorder %s112, %s114
      %p121 = scmp.eq.s32.totalorder %s22, 3
      %p122 = por %p120, %p121
      %p123 = scmp.ne.s32.totalorder %s114, %s115
      %p124 = scmp.eq.s32.totalorder %s22, 0
      %p125 = por %p123, %p124
      %p126 = scmp.ne.s32.totalorder %s114, %s115
      %p127 = scmp.eq.s32.totalorder %s23, 3
      %p128 = por %p126, %p127
      %p130 = scmp.ne.s32.totalorder %s115, %s129
      %p131 = scmp.eq.s32.totalorder %s23, 0
      %p132 = por %p130, %p131
      %s133 = ssub.s32 %s24, %s36
      %p134 = scmp.eq.s32.totalorder %s133, 0
      %s136 = sadd.s32 %s135, 1
      %s137 = scalar_select %p134, %s135, %s136
      %p140 = pneg %p134
      %p141 = scmp.eq.s32.totalorder %s17, 3
      %p142 = por %p140, %p141
      %p143 = scmp.ne.s32.totalorder %s135, %s138
      %p144 = scmp.eq.s32.totalorder %s17, 0
      %p145 = por %p143, %p144
      %p146 = scmp.ne.s32.totalorder %s135, %s138
      %p147 = scmp.eq.s32.totalorder %s22, 3
      %p148 = por %p146, %p147
      %p149 = scmp.ne.s32.totalorder %s138, %s139
      %p150 = scmp.eq.s32.totalorder %s22, 0
      %p151 = por %p149, %p150
      %p152 = scmp.ne.s32.totalorder %s138, %s139
      %p153 = scmp.eq.s32.totalorder %s23, 3
      %p154 = por %p152, %p153
      %p156 = scmp.ne.s32.totalorder %s139, %s155
      %p157 = scmp.eq.s32.totalorder %s23, 0
      %p158 = por %p156, %p157
      %p159 = scmp.le.s32.totalorder 1, %s17
      %p160 = scmp.lt.s32.totalorder %s17, 5
      %p161 = pnand %p159, %p160
      %p162 = pneg %p161
      // Predicated region
      $region9: #{classifier_forward.2} parent=5 // pred_check
        _
      $region10: #{classifier_forward.2} parent=5 // pred_check_branch
        %164 = sbr.rel (%p161) target = $region12
      $region11: #{classifier_forward.2} parent=5 // pred_region
        %s165 = ssub.s32 %s17, 1
        // Predicated region
        $region13: #{classifier_forward.2} parent=11 // pred_check
          %p166 = pneg %p104
        $region14: #{classifier_forward.2} parent=11 // pred_check_branch
          %168 = sbr.rel (%p166) target = $region16
        $region15: #{classifier_forward.2} parent=11 // pred_region
          %s170 = ssub.s32 1024, 1024
          %171 = vsyncadd [#allocation6], %s170
          %s172 = sshll.u32 [#allocation7], 4
          %s173 = int_to_ptr.vmem [resolvable:$true] %s172
          %178 = dma.hbm_to_vmem [thread:$0]  %s2, 1024, %s173, [#allocation6], 64, 64, 4
        $region16: #{classifier_forward.2} parent=11 // pred_fallthru
          _
        // Predicated region
        $region17: #{classifier_forward.2} parent=11 // pred_check
          %p179 = pneg %p125
        $region18: #{classifier_forward.2} parent=11 // pred_check_branch
          %181 = sbr.rel (%p179) target = $region20
        $region19: #{classifier_forward.2} parent=11 // pred_region
          %s183 = ssub.s32 1024, 1024
          %184 = vsyncadd [#allocation9], %s183
          %s185 = sshll.u32 [#allocation8], 4
          %s186 = int_to_ptr.vmem [resolvable:$true] %s185
          %191 = dma.hbm_to_vmem [thread:$0]  %s3, 1024, %s186, [#allocation9], 64, 64, 4
        $region20: #{classifier_forward.2} parent=11 // pred_fallthru
          _
      $region12: #{classifier_forward.2} parent=5 // pred_fallthru
        _
      %p192 = scmp.lt.s32.totalorder %s17, 4
      // Predicated region
      $region21: #{classifier_forward.2} parent=5 // pred_check
        %p193 = pneg %p192
      $region22: #{classifier_forward.2} parent=5 // pred_check_branch
        %195 = sbr.rel (%p193) target = $region24
      $region23: #{classifier_forward.2} parent=5 // pred_region
        // Predicated region
        $region25: #{classifier_forward.2} parent=23 // pred_check
          %p196 = pneg %p51
        $region26: #{classifier_forward.2} parent=23 // pred_check_branch
          %198 = sbr.rel (%p196) target = $region28
        $region27: #{classifier_forward.2} parent=23 // pred_region
          %s199 = sand.u32 %s41, 1
          %s200 = scalar_lea.sflag [#allocation4], %s199
          %s201 = sand.u32 %s41, 1
          %s202 = smul.addr %s201, 256
          %s203 = scalar_lea.vmem [#allocation3], %s202
          %s204 = smul.u32 32, %s24
          %s205 = smul.u32 2, %s25
          %s207 = ssub.s32 4096, 4096
          %208 = vsyncadd %s200, %s207
          %s209 = smul.addr %s204, 4
          %s210 = sadd.s32 %s205, %s209
          %s211 = smul.addr %s210, 64
          %s212 = scalar_lea.hbm %s0, %s211
          %s213 = sshll.u32 %s203, 4
          %s214 = int_to_ptr.vmem [resolvable:$true] %s213
          %219 = dma.hbm_to_vmem [thread:$0]  %s212, 4096, %s214, %s200, 256, 128, 8
        $region28: #{classifier_forward.2} parent=23 // pred_fallthru
          _
        // Predicated region
        $region29: #{classifier_forward.2} parent=23 // pred_check
          %p220 = pneg %p77
        $region30: #{classifier_forward.2} parent=23 // pred_check_branch
          %222 = sbr.rel (%p220) target = $region32
        $region31: #{classifier_forward.2} parent=23 // pred_region
          %s223 = sand.u32 %s17, 1
          %s224 = scalar_lea.sflag [#allocation6], %s223
          %s225 = sand.u32 %s67, 1
          %s226 = smul.addr %s225, 128
          %s227 = scalar_lea.vmem [#allocation5], %s226
          %s228 = smul.u32 32, %s25
          %s230 = ssub.s32 2048, 2048
          %231 = vsyncadd %s224, %s230
          %s232 = smul.addr %s228, 64
          %s233 = scalar_lea.hbm %s1, %s232
          %s234 = sshll.u32 %s227, 4
          %s235 = int_to_ptr.vmem [resolvable:$true] %s234
          %240 = dma.hbm_to_vmem [thread:$0]  %s233, 2048, %s235, %s224, 64, 64, 4
        $region32: #{classifier_forward.2} parent=23 // pred_fallthru
          _
      $region24: #{classifier_forward.2} parent=5 // pred_fallthru
        _
      %p241 = scmp.le.s32.totalorder 1, %s17
      %p242 = scmp.lt.s32.totalorder %s17, 5
      %p243 = pnand %p241, %p242
      %p244 = pneg %p243
      // Predicated region
      $region33: #{classifier_forward.2} parent=5 // pred_check
        _
      $region34: #{classifier_forward.2} parent=5 // pred_check_branch
        %246 = sbr.rel (%p243) target = $region36
      $region35: #{classifier_forward.2} parent=5 // pred_region
        %s247 = ssub.s32 %s17, 1
        %s248 = sand.u32 %s44, 1
        %s249 = scalar_lea.sflag [#allocation4], %s248
        %s250 = sand.u32 %s44, 1
        %s251 = smul.addr %s250, 256
        %s252 = scalar_lea.vmem [#allocation3], %s251
        // Predicated region
        $region37: #{classifier_forward.2} parent=35 // pred_check
          %p253 = pneg %p57
        $region38: #{classifier_forward.2} parent=35 // pred_check_branch
          %255 = sbr.rel (%p253) target = $region40
        $region39: #{classifier_forward.2} parent=35 // pred_region
          %256 = dma.done %s249, 4096
        $region40: #{classifier_forward.2} parent=35 // pred_fallthru
          _
        %s257 = sand.u32 %s22, 1
        %s258 = scalar_lea.sflag [#allocation6], %s257
        %s259 = sand.u32 %s70, 1
        %s260 = smul.addr %s259, 128
        %s261 = scalar_lea.vmem [#allocation5], %s260
        // Predicated region
        $region41: #{classifier_forward.2} parent=35 // pred_check
          %p262 = pneg %p83
        $region42: #{classifier_forward.2} parent=35 // pred_check_branch
          %264 = sbr.rel (%p262) target = $region44
        $region43: #{classifier_forward.2} parent=35 // pred_region
          %265 = dma.done %s258, 2048
        $region44: #{classifier_forward.2} parent=35 // pred_fallthru
          _
        // Predicated region
        $region45: #{classifier_forward.2} parent=35 // pred_check
          %p266 = pneg %p104
        $region46: #{classifier_forward.2} parent=35 // pred_check_branch
          %268 = sbr.rel (%p266) target = $region48
        $region47: #{classifier_forward.2} parent=35 // pred_region
          %269 = dma.done [#allocation6], 1024
        $region48: #{classifier_forward.2} parent=35 // pred_fallthru
          _
        // Predicated region
        $region49: #{classifier_forward.2} parent=35 // pred_check
          %p270 = pneg %p125
        $region50: #{classifier_forward.2} parent=35 // pred_check_branch
          %272 = sbr.rel (%p270) target = $region52
        $region51: #{classifier_forward.2} parent=35 // pred_region
          %273 = dma.done [#allocation9], 1024
        $region52: #{classifier_forward.2} parent=35 // pred_fallthru
          _
        %s274 = sand.u32 %s44, 1
        %s275 = scalar_lea.sflag [#allocation4], %s274
        %s276 = sand.u32 %s44, 1
        %s277 = smul.addr %s276, 256
        %s278 = scalar_lea.vmem [#allocation3], %s277
        %p279 = pneg %p57
        %p280 = pneg %p54
        %s281 = sand.u32 %s22, 1
        %s282 = scalar_lea.sflag [#allocation6], %s281
        %s283 = sand.u32 %s70, 1
        %s284 = smul.addr %s283, 128
        %s285 = scalar_lea.vmem [#allocation5], %s284
        %p286 = pneg %p83
        %p287 = pneg %p80
        %p288 = pneg %p104
        %p289 = pneg %p101
        %p290 = pneg %p125
        %p291 = pneg %p122
        %p292 = pneg %p151
        %p293 = pneg %p148
        %s294 = smul.u32 32, %s26
        %p295 = scmp.lt.s32.totalorder %s294, 63
        %s296 = scalar_select %p295, %s294, 63
        %s297 = smul.addr %s296, 4
        %s298 = scalar_lea.vmem %s4, %s297
        %s299 = smul.u32 32, %s26
        %s300 = smul.u32 2, %s27
        %s301 = smul.u32 32, %s27
        %s302 = smul.u32 32, %s26
        %p303 = scmp.lt.s32.totalorder %s302, 63
        %s304 = scalar_select %p303, %s302, 63
        %s305 = smul.addr %s304, 4
        %s306 = scalar_lea.vmem %s4, %s305
        %s307 = smul.u32 32, %s26
        %p309 = scmp.eq.s32.totalorder %s27, 0
        // Predicated region
        $region53: #{classifier_forward.2} parent=35 // pred_check
          %p310 = pneg %p309
        $region54: #{classifier_forward.2} parent=35 // pred_check_branch
          %312 = sbr.rel (%p310) target = $region56
        $region55: #{classifier_forward.2} parent=35 // pred_region
          %313 = vst [vmem:[#allocation2] sm:$0xff] 0.0
          %314 = vst [vmem:[#allocation2 + $0x8] sm:$0xff] 0.0
          %315 = vst [vmem:[#allocation2 + $0x10] sm:$0xff] 0.0
          %316 = vst [vmem:[#allocation2 + $0x18] sm:$0xff] 0.0
          %317 = vst [vmem:[#allocation2 + $0x20] sm:$0xff] 0.0
          %318 = vst [vmem:[#allocation2 + $0x28] sm:$0xff] 0.0
          %319 = vst [vmem:[#allocation2 + $0x30] sm:$0xff] 0.0
          %320 = vst [vmem:[#allocation2 + $0x38] sm:$0xff] 0.0
          %321 = vst [vmem:[#allocation2 + $0x40] sm:$0xff] 0.0
          %322 = vst [vmem:[#allocation2 + $0x48] sm:$0xff] 0.0
          %323 = vst [vmem:[#allocation2 + $0x50] sm:$0xff] 0.0
          %324 = vst [vmem:[#allocation2 + $0x58] sm:$0xff] 0.0
          %325 = vst [vmem:[#allocation2 + $0x60] sm:$0xff] 0.0
          %326 = vst [vmem:[#allocation2 + $0x68] sm:$0xff] 0.0
          %327 = vst [vmem:[#allocation2 + $0x70] sm:$0xff] 0.0
          %328 = vst [vmem:[#allocation2 + $0x78] sm:$0xff] 0.0
          %329 = vst [vmem:[#allocation2 + $0x80] sm:$0xff] 0.0
          %330 = vst [vmem:[#allocation2 + $0x88] sm:$0xff] 0.0
          %331 = vst [vmem:[#allocation2 + $0x90] sm:$0xff] 0.0
          %332 = vst [vmem:[#allocation2 + $0x98] sm:$0xff] 0.0
          %333 = vst [vmem:[#allocation2 + $0xa0] sm:$0xff] 0.0
          %334 = vst [vmem:[#allocation2 + $0xa8] sm:$0xff] 0.0
          %335 = vst [vmem:[#allocation2 + $0xb0] sm:$0xff] 0.0
          %336 = vst [vmem:[#allocation2 + $0xb8] sm:$0xff] 0.0
          %337 = vst [vmem:[#allocation2 + $0xc0] sm:$0xff] 0.0
          %338 = vst [vmem:[#allocation2 + $0xc8] sm:$0xff] 0.0
          %339 = vst [vmem:[#allocation2 + $0xd0] sm:$0xff] 0.0
          %340 = vst [vmem:[#allocation2 + $0xd8] sm:$0xff] 0.0
          %341 = vst [vmem:[#allocation2 + $0xe0] sm:$0xff] 0.0
          %342 = vst [vmem:[#allocation2 + $0xe8] sm:$0xff] 0.0
          %343 = vst [vmem:[#allocation2 + $0xf0] sm:$0xff] 0.0
          %344 = vst [vmem:[#allocation2 + $0xf8] sm:$0xff] 0.0
        $region56: #{classifier_forward.2} parent=35 // pred_fallthru
          _
        %v345 = vld [vmem:[#allocation2] sm:$0xff]
        %v346 = vld [vmem:[#allocation2 + $0x8] sm:$0xff]
        %v347 = vld [vmem:[#allocation2 + $0x10] sm:$0xff]
        %v348 = vld [vmem:[#allocation2 + $0x18] sm:$0xff]
        %v349 = vld [vmem:[#allocation2 + $0x20] sm:$0xff]
        %v350 = vld [vmem:[#allocation2 + $0x28] sm:$0xff]
        %v351 = vld [vmem:[#allocation2 + $0x30] sm:$0xff]
        %v352 = vld [vmem:[#allocation2 + $0x38] sm:$0xff]
        %v353 = vld [vmem:[#allocation2 + $0x40] sm:$0xff]
        %v354 = vld [vmem:[#allocation2 + $0x48] sm:$0xff]
        %v355 = vld [vmem:[#allocation2 + $0x50] sm:$0xff]
        %v356 = vld [vmem:[#allocation2 + $0x58] sm:$0xff]
        %v357 = vld [vmem:[#allocation2 + $0x60] sm:$0xff]
        %v358 = vld [vmem:[#allocation2 + $0x68] sm:$0xff]
        %v359 = vld [vmem:[#allocation2 + $0x70] sm:$0xff]
        %v360 = vld [vmem:[#allocation2 + $0x78] sm:$0xff]
        %v361 = vld [vmem:[#allocation2 + $0x80] sm:$0xff]
        %v362 = vld [vmem:[#allocation2 + $0x88] sm:$0xff]
        %v363 = vld [vmem:[#allocation2 + $0x90] sm:$0xff]
        %v364 = vld [vmem:[#allocation2 + $0x98] sm:$0xff]
        %v365 = vld [vmem:[#allocation2 + $0xa0] sm:$0xff]
        %v366 = vld [vmem:[#allocation2 + $0xa8] sm:$0xff]
        %v367 = vld [vmem:[#allocation2 + $0xb0] sm:$0xff]
        %v368 = vld [vmem:[#allocation2 + $0xb8] sm:$0xff]
        %v369 = vld [vmem:[#allocation2 + $0xc0] sm:$0xff]
        %v370 = vld [vmem:[#allocation2 + $0xc8] sm:$0xff]
        %v371 = vld [vmem:[#allocation2 + $0xd0] sm:$0xff]
        %v372 = vld [vmem:[#allocation2 + $0xd8] sm:$0xff]
        %v373 = vld [vmem:[#allocation2 + $0xe0] sm:$0xff]
        %v374 = vld [vmem:[#allocation2 + $0xe8] sm:$0xff]
        %v375 = vld [vmem:[#allocation2 + $0xf0] sm:$0xff]
        %v376 = vld [vmem:[#allocation2 + $0xf8] sm:$0xff]
        %v377 = vld [vmem:[%s252] sm:$0xff]
        %v378 = vld [vmem:[%s252 + $0x8] sm:$0xff]
        %v379 = vld [vmem:[%s252 + $0x10] sm:$0xff]
        %v380 = vld [vmem:[%s252 + $0x18] sm:$0xff]
        %v381 = vld [vmem:[%s252 + $0x20] sm:$0xff]
        %v382 = vld [vmem:[%s252 + $0x28] sm:$0xff]
        %v383 = vld [vmem:[%s252 + $0x30] sm:$0xff]
        %v384 = vld [vmem:[%s252 + $0x38] sm:$0xff]
        %v385 = vld [vmem:[%s252 + $0x40] sm:$0xff]
        %v386 = vld [vmem:[%s252 + $0x48] sm:$0xff]
        %v387 = vld [vmem:[%s252 + $0x50] sm:$0xff]
        %v388 = vld [vmem:[%s252 + $0x58] sm:$0xff]
        %v389 = vld [vmem:[%s252 + $0x60] sm:$0xff]
        %v390 = vld [vmem:[%s252 + $0x68] sm:$0xff]
        %v391 = vld [vmem:[%s252 + $0x70] sm:$0xff]
        %v392 = vld [vmem:[%s252 + $0x78] sm:$0xff]
        %v393 = vld [vmem:[%s252 + $0x80] sm:$0xff]
        %v394 = vld [vmem:[%s252 + $0x88] sm:$0xff]
        %v395 = vld [vmem:[%s252 + $0x90] sm:$0xff]
        %v396 = vld [vmem:[%s252 + $0x98] sm:$0xff]
        %v397 = vld [vmem:[%s252 + $0xa0] sm:$0xff]
        %v398 = vld [vmem:[%s252 + $0xa8] sm:$0xff]
        %v399 = vld [vmem:[%s252 + $0xb0] sm:$0xff]
        %v400 = vld [vmem:[%s252 + $0xb8] sm:$0xff]
        %v401 = vld [vmem:[%s252 + $0xc0] sm:$0xff]
        %v402 = vld [vmem:[%s252 + $0xc8] sm:$0xff]
        %v403 = vld [vmem:[%s252 + $0xd0] sm:$0xff]
        %v404 = vld [vmem:[%s252 + $0xd8] sm:$0xff]
        %v405 = vld [vmem:[%s252 + $0xe0] sm:$0xff]
        %v406 = vld [vmem:[%s252 + $0xe8] sm:$0xff]
        %v407 = vld [vmem:[%s252 + $0xf0] sm:$0xff]
        %v408 = vld [vmem:[%s252 + $0xf8] sm:$0xff]
        %v409 = vld [vmem:[%s261] sm:$0xf]
        %v410 = vld [vmem:[%s261 + $0x4] sm:$0xf]
        %v411 = vld [vmem:[%s261 + $0x8] sm:$0xf]
        %v412 = vld [vmem:[%s261 + $0xc] sm:$0xf]
        %v413 = vld [vmem:[%s261 + $0x10] sm:$0xf]
        %v414 = vld [vmem:[%s261 + $0x14] sm:$0xf]
        %v415 = vld [vmem:[%s261 + $0x18] sm:$0xf]
        %v416 = vld [vmem:[%s261 + $0x1c] sm:$0xf]
        %v417 = vld [vmem:[%s261 + $0x20] sm:$0xf]
        %v418 = vld [vmem:[%s261 + $0x24] sm:$0xf]
        %v419 = vld [vmem:[%s261 + $0x28] sm:$0xf]
        %v420 = vld [vmem:[%s261 + $0x2c] sm:$0xf]
        %v421 = vld [vmem:[%s261 + $0x30] sm:$0xf]
        %v422 = vld [vmem:[%s261 + $0x34] sm:$0xf]
        %v423 = vld [vmem:[%s261 + $0x38] sm:$0xf]
        %v424 = vld [vmem:[%s261 + $0x3c] sm:$0xf]
        %v425 = vld [vmem:[%s261 + $0x40] sm:$0xf]
        %v426 = vld [vmem:[%s261 + $0x44] sm:$0xf]
        %v427 = vld [vmem:[%s261 + $0x48] sm:$0xf]
        %v428 = vld [vmem:[%s261 + $0x4c] sm:$0xf]
        %v429 = vld [vmem:[%s261 + $0x50] sm:$0xf]
        %v430 = vld [vmem:[%s261 + $0x54] sm:$0xf]
        %v431 = vld [vmem:[%s261 + $0x58] sm:$0xf]
        %v432 = vld [vmem:[%s261 + $0x5c] sm:$0xf]
        %v433 = vld [vmem:[%s261 + $0x60] sm:$0xf]
        %v434 = vld [vmem:[%s261 + $0x64] sm:$0xf]
        %v435 = vld [vmem:[%s261 + $0x68] sm:$0xf]
        %v436 = vld [vmem:[%s261 + $0x6c] sm:$0xf]
        %v437 = vld [vmem:[%s261 + $0x70] sm:$0xf]
        %v438 = vld [vmem:[%s261 + $0x74] sm:$0xf]
        %v439 = vld [vmem:[%s261 + $0x78] sm:$0xf]
        %v440 = vld [vmem:[%s261 + $0x7c] sm:$0xf]
        %v473 = vunpack.c.l.b16 %v377
        %v474 = vunpack.c.h.b16 %v377
        %v475 = vunpack.c.l.b16 %v378
        %v476 = vunpack.c.h.b16 %v378
        %v477 = vunpack.c.l.b16 %v379
        %v478 = vunpack.c.h.b16 %v379
        %v479 = vunpack.c.l.b16 %v380
        %v480 = vunpack.c.h.b16 %v380
        %v481 = vunpack.c.l.b16 %v381
        %v482 = vunpack.c.h.b16 %v381
        %v483 = vunpack.c.l.b16 %v382
        %v484 = vunpack.c.h.b16 %v382
        %v485 = vunpack.c.l.b16 %v383
        %v486 = vunpack.c.h.b16 %v383
        %v487 = vunpack.c.l.b16 %v384
        %v488 = vunpack.c.h.b16 %v384
        %v489 = vunpack.c.l.b16 %v385
        %v490 = vunpack.c.h.b16 %v385
        %v491 = vunpack.c.l.b16 %v386
        %v492 = vunpack.c.h.b16 %v386
        %v493 = vunpack.c.l.b16 %v387
        %v494 = vunpack.c.h.b16 %v387
        %v495 = vunpack.c.l.b16 %v388
        %v496 = vunpack.c.h.b16 %v388
        %v497 = vunpack.c.l.b16 %v389
        %v498 = vunpack.c.h.b16 %v389
        %v499 = vunpack.c.l.b16 %v390
        %v500 = vunpack.c.h.b16 %v390
        %v501 = vunpack.c.l.b16 %v391
        %v502 = vunpack.c.h.b16 %v391
        %v503 = vunpack.c.l.b16 %v392
        %v504 = vunpack.c.h.b16 %v392
        %v505 = vunpack.c.l.b16 %v393
        %v506 = vunpack.c.h.b16 %v393
        %v507 = vunpack.c.l.b16 %v394
        %v508 = vunpack.c.h.b16 %v394
        %v509 = vunpack.c.l.b16 %v395
        %v510 = vunpack.c.h.b16 %v395
        %v511 = vunpack.c.l.b16 %v396
        %v512 = vunpack.c.h.b16 %v396
        %v513 = vunpack.c.l.b16 %v397
        %v514 = vunpack.c.h.b16 %v397
        %v515 = vunpack.c.l.b16 %v398
        %v516 = vunpack.c.h.b16 %v398
        %v517 = vunpack.c.l.b16 %v399
        %v518 = vunpack.c.h.b16 %v399
        %v519 = vunpack.c.l.b16 %v400
        %v520 = vunpack.c.h.b16 %v400
        %v521 = vunpack.c.l.b16 %v401
        %v522 = vunpack.c.h.b16 %v401
        %v523 = vunpack.c.l.b16 %v402
        %v524 = vunpack.c.h.b16 %v402
        %v525 = vunpack.c.l.b16 %v403
        %v526 = vunpack.c.h.b16 %v403
        %v527 = vunpack.c.l.b16 %v404
        %v528 = vunpack.c.h.b16 %v404
        %v529 = vunpack.c.l.b16 %v405
        %v530 = vunpack.c.h.b16 %v405
        %v531 = vunpack.c.l.b16 %v406
        %v532 = vunpack.c.h.b16 %v406
        %v533 = vunpack.c.l.b16 %v407
        %v534 = vunpack.c.h.b16 %v407
        %v535 = vunpack.c.l.b16 %v408
        %v536 = vunpack.c.h.b16 %v408
        %v537 = vpack.c.b16 %v475, %v473
        %v538 = vpack.c.b16 %v476, %v474
        %v539 = vpack.c.b16 %v479, %v477
        %v540 = vpack.c.b16 %v480, %v478
        %v541 = vpack.c.b16 %v483, %v481
        %v542 = vpack.c.b16 %v484, %v482
        %v543 = vpack.c.b16 %v487, %v485
        %v544 = vpack.c.b16 %v488, %v486
        %v545 = vpack.c.b16 %v491, %v489
        %v546 = vpack.c.b16 %v492, %v490
        %v547 = vpack.c.b16 %v495, %v493
        %v548 = vpack.c.b16 %v496, %v494
        %v549 = vpack.c.b16 %v499, %v497
        %v550 = vpack.c.b16 %v500, %v498
        %v551 = vpack.c.b16 %v503, %v501
        %v552 = vpack.c.b16 %v504, %v502
        %v553 = vpack.c.b16 %v507, %v505
        %v554 = vpack.c.b16 %v508, %v506
        %v555 = vpack.c.b16 %v511, %v509
        %v556 = vpack.c.b16 %v512, %v510
        %v557 = vpack.c.b16 %v515, %v513
        %v558 = vpack.c.b16 %v516, %v514
        %v559 = vpack.c.b16 %v519, %v517
        %v560 = vpack.c.b16 %v520, %v518
        %v561 = vpack.c.b16 %v523, %v521
        %v562 = vpack.c.b16 %v524, %v522
        %v563 = vpack.c.b16 %v527, %v525
        %v564 = vpack.c.b16 %v528, %v526
        %v565 = vpack.c.b16 %v531, %v529
        %v566 = vpack.c.b16 %v532, %v530
        %v567 = vpack.c.b16 %v535, %v533
        %v568 = vpack.c.b16 %v536, %v534
        %v633 = vunpack.c.l.b16 %v409
        %v634 = vunpack.c.l.b16 %v410
        %v635 = vunpack.c.l.b16 %v411
        %v636 = vunpack.c.l.b16 %v412
        %v637 = vunpack.c.l.b16 %v413
        %v638 = vunpack.c.l.b16 %v414
        %v639 = vunpack.c.l.b16 %v415
        %v640 = vunpack.c.l.b16 %v416
        %v641 = vunpack.c.l.b16 %v417
        %v642 = vunpack.c.l.b16 %v418
        %v643 = vunpack.c.l.b16 %v419
        %v644 = vunpack.c.l.b16 %v420
        %v645 = vunpack.c.l.b16 %v421
        %v646 = vunpack.c.l.b16 %v422
        %v647 = vunpack.c.l.b16 %v423
        %v648 = vunpack.c.l.b16 %v424
        %v649 = vunpack.c.l.b16 %v425
        %v650 = vunpack.c.l.b16 %v426
        %v651 = vunpack.c.l.b16 %v427
        %v652 = vunpack.c.l.b16 %v428
        %v653 = vunpack.c.l.b16 %v429
        %v654 = vunpack.c.l.b16 %v430
        %v655 = vunpack.c.l.b16 %v431
        %v656 = vunpack.c.l.b16 %v432
        %v657 = vunpack.c.l.b16 %v433
        %v658 = vunpack.c.l.b16 %v434
        %v659 = vunpack.c.l.b16 %v435
        %v660 = vunpack.c.l.b16 %v436
        %v661 = vunpack.c.l.b16 %v437
        %v662 = vunpack.c.l.b16 %v438
        %v663 = vunpack.c.l.b16 %v439
        %v664 = vunpack.c.l.b16 %v440
        %v665 = vpack.c.b16 %v634, %v633
        %v666 = vpack.c.b16 %v636, %v635
        %v667 = vpack.c.b16 %v638, %v637
        %v668 = vpack.c.b16 %v640, %v639
        %v669 = vpack.c.b16 %v642, %v641
        %v670 = vpack.c.b16 %v644, %v643
        %v671 = vpack.c.b16 %v646, %v645
        %v672 = vpack.c.b16 %v648, %v647
        %v673 = vpack.c.b16 %v650, %v649
        %v674 = vpack.c.b16 %v652, %v651
        %v675 = vpack.c.b16 %v654, %v653
        %v676 = vpack.c.b16 %v656, %v655
        %v677 = vpack.c.b16 %v658, %v657
        %v678 = vpack.c.b16 %v660, %v659
        %v679 = vpack.c.b16 %v662, %v661
        %v680 = vpack.c.b16 %v664, %v663
        %697 = vmatprep.subr.bf16.mxu0 0
        %698 = vmatpush1.bf16.msra.mxu0 %v665
        %699 = vmatprep.subr.bf16.mxu0 0
        %700 = vmatpush1.bf16.msra.mxu0 %v666
        %701 = vmatprep.subr.bf16.mxu0 0
        %702 = vmatpush1.bf16.msra.mxu0 %v667
        %703 = vmatprep.subr.bf16.mxu0 0
        %704 = vmatpush1.bf16.msra.mxu0 %v668
        %705 = vmatprep.subr.bf16.mxu0 0
        %706 = vmatpush1.bf16.msra.mxu0 %v669
        %707 = vmatprep.subr.bf16.mxu0 0
        %708 = vmatpush1.bf16.msra.mxu0 %v670
        %709 = vmatprep.subr.bf16.mxu0 0
        %710 = vmatpush1.bf16.msra.mxu0 %v671
        %711 = vmatprep.subr.bf16.mxu0 0
        %712 = vmatpush1.bf16.msra.mxu0 %v672
        %713 = vmatprep.subr.bf16.mxu0 0
        %714 = vmatpush1.bf16.msra.mxu0 %v673
        %715 = vmatprep.subr.bf16.mxu0 0
        %716 = vmatpush1.bf16.msra.mxu0 %v674
        %717 = vmatprep.subr.bf16.mxu0 0
        %718 = vmatpush1.bf16.msra.mxu0 %v675
        %719 = vmatprep.subr.bf16.mxu0 0
        %720 = vmatpush1.bf16.msra.mxu0 %v676
        %721 = vmatprep.subr.bf16.mxu0 0
        %722 = vmatpush1.bf16.msra.mxu0 %v677
        %723 = vmatprep.subr.bf16.mxu0 0
        %724 = vmatpush1.bf16.msra.mxu0 %v678
        %725 = vmatprep.subr.bf16.mxu0 0
        %726 = vmatpush1.bf16.msra.mxu0 %v679
        %727 = vmatprep.subr.bf16.mxu0 0
        %728 = vmatpush1.bf16.msra.mxu0 %v680
        %729 = vmatprep.mubr.bf16.mxu0 %v538
        %730 = vmatmul.mubr.bf16.gmra.mrb[0].mxu0 %v537
        %v731 = vpop.f32.mrb[0].mxu0
        %v732 = vadd.f32 0.0, %v731
        %v733 = vpop.f32.mrb[0].mxu0
        %v734 = vpop.f32.mrb[0].mxu0
        %v735 = vadd.f32 0.0, %v734
        %v736 = vpop.f32.mrb[0].mxu0
        %737 = vmatprep.mubr.bf16.mxu0 %v540
        %738 = vmatmul.mubr.bf16.gmra.mrb[0].mxu0 %v539
        %v739 = vpop.f32.mrb[0].mxu0
        %v740 = vadd.f32 0.0, %v739
        %v741 = vpop.f32.mrb[0].mxu0
        %v742 = vpop.f32.mrb[0].mxu0
        %v743 = vadd.f32 0.0, %v742
        %v744 = vpop.f32.mrb[0].mxu0
        %745 = vmatprep.mubr.bf16.mxu0 %v542
        %746 = vmatmul.mubr.bf16.gmra.mrb[0].mxu0 %v541
        %v747 = vpop.f32.mrb[0].mxu0
        %v748 = vadd.f32 0.0, %v747
        %v749 = vpop.f32.mrb[0].mxu0
        %v750 = vpop.f32.mrb[0].mxu0
        %v751 = vadd.f32 0.0, %v750
        %v752 = vpop.f32.mrb[0].mxu0
        %753 = vmatprep.mubr.bf16.mxu0 %v544
        %754 = vmatmul.mubr.bf16.gmra.mrb[0].mxu0 %v543
        %v755 = vpop.f32.mrb[0].mxu0
        %v756 = vadd.f32 0.0, %v755
        %v757 = vpop.f32.mrb[0].mxu0
        %v758 = vpop.f32.mrb[0].mxu0
        %v759 = vadd.f32 0.0, %v758
        %v760 = vpop.f32.mrb[0].mxu0
        %761 = vmatprep.mubr.bf16.mxu0 %v546
        %762 = vmatmul.mubr.bf16.gmra.mrb[0].mxu0 %v545
        %v763 = vpop.f32.mrb[0].mxu0
        %v764 = vadd.f32 0.0, %v763
        %v765 = vpop.f32.mrb[0].mxu0
        %v766 = vpop.f32.mrb[0].mxu0
        %v767 = vadd.f32 0.0, %v766
        %v768 = vpop.f32.mrb[0].mxu0
        %769 = vmatprep.mubr.bf16.mxu0 %v548
        %770 = vmatmul.mubr.bf16.gmra.mrb[0].mxu0 %v547
        %v771 = vpop.f32.mrb[0].mxu0
        %v772 = vadd.f32 0.0, %v771
        %v773 = vpop.f32.mrb[0].mxu0
        %v774 = vpop.f32.mrb[0].mxu0
        %v775 = vadd.f32 0.0, %v774
        %v776 = vpop.f32.mrb[0].mxu0
        %777 = vmatprep.mubr.bf16.mxu0 %v550
        %778 = vmatmul.mubr.bf16.gmra.mrb[0].mxu0 %v549
        %v779 = vpop.f32.mrb[0].mxu0
        %v780 = vadd.f32 0.0, %v779
        %v781 = vpop.f32.mrb[0].mxu0
        %v782 = vpop.f32.mrb[0].mxu0
        %v783 = vadd.f32 0.0, %v782
        %v784 = vpop.f32.mrb[0].mxu0
        %785 = vmatprep.mubr.bf16.mxu0 %v552
        %786 = vmatmul.mubr.bf16.gmra.mrb[0].mxu0 %v551
        %v787 = vpop.f32.mrb[0].mxu0
        %v788 = vadd.f32 0.0, %v787
        %v789 = vpop.f32.mrb[0].mxu0
        %v790 = vpop.f32.mrb[0].mxu0
        %v791 = vadd.f32 0.0, %v790
        %v792 = vpop.f32.mrb[0].mxu0
        %793 = vmatprep.mubr.bf16.mxu0 %v554
        %794 = vmatmul.mubr.bf16.gmra.mrb[0].mxu0 %v553
        %v795 = vpop.f32.mrb[0].mxu0
        %v796 = vadd.f32 0.0, %v795
        %v797 = vpop.f32.mrb[0].mxu0
        %v798 = vpop.f32.mrb[0].mxu0
        %v799 = vadd.f32 0.0, %v798
        %v800 = vpop.f32.mrb[0].mxu0
        %801 = vmatprep.mubr.bf16.mxu0 %v556
        %802 = vmatmul.mubr.bf16.gmra.mrb[0].mxu0 %v555
        %v803 = vpop.f32.mrb[0].mxu0
        %v804 = vadd.f32 0.0, %v803
        %v805 = vpop.f32.mrb[0].mxu0
        %v806 = vpop.f32.mrb[0].mxu0
        %v807 = vadd.f32 0.0, %v806
        %v808 = vpop.f32.mrb[0].mxu0
        %809 = vmatprep.mubr.bf16.mxu0 %v558
        %810 = vmatmul.mubr.bf16.gmra.mrb[0].mxu0 %v557
        %v811 = vpop.f32.mrb[0].mxu0
        %v812 = vadd.f32 0.0, %v811
        %v813 = vpop.f32.mrb[0].mxu0
        %v814 = vpop.f32.mrb[0].mxu0
        %v815 = vadd.f32 0.0, %v814
        %v816 = vpop.f32.mrb[0].mxu0
        %817 = vmatprep.mubr.bf16.mxu0 %v560
        %818 = vmatmul.mubr.bf16.gmra.mrb[0].mxu0 %v559
        %v819 = vpop.f32.mrb[0].mxu0
        %v820 = vadd.f32 0.0, %v819
        %v821 = vpop.f32.mrb[0].mxu0
        %v822 = vpop.f32.mrb[0].mxu0
        %v823 = vadd.f32 0.0, %v822
        %v824 = vpop.f32.mrb[0].mxu0
        %825 = vmatprep.mubr.bf16.mxu0 %v562
        %826 = vmatmul.mubr.bf16.gmra.mrb[0].mxu0 %v561
        %v827 = vpop.f32.mrb[0].mxu0
        %v828 = vadd.f32 0.0, %v827
        %v829 = vpop.f32.mrb[0].mxu0
        %v830 = vpop.f32.mrb[0].mxu0
        %v831 = vadd.f32 0.0, %v830
        %v832 = vpop.f32.mrb[0].mxu0
        %833 = vmatprep.mubr.bf16.mxu0 %v564
        %834 = vmatmul.mubr.bf16.gmra.mrb[0].mxu0 %v563
        %v835 = vpop.f32.mrb[0].mxu0
        %v836 = vadd.f32 0.0, %v835
        %v837 = vpop.f32.mrb[0].mxu0
        %v838 = vpop.f32.mrb[0].mxu0
        %v839 = vadd.f32 0.0, %v838
        %v840 = vpop.f32.mrb[0].mxu0
        %841 = vmatprep.mubr.bf16.mxu0 %v566
        %842 = vmatmul.mubr.bf16.gmra.mrb[0].mxu0 %v565
        %v843 = vpop.f32.mrb[0].mxu0
        %v844 = vadd.f32 0.0, %v843
        %v845 = vpop.f32.mrb[0].mxu0
        %v846 = vpop.f32.mrb[0].mxu0
        %v847 = vadd.f32 0.0, %v846
        %v848 = vpop.f32.mrb[0].mxu0
        %849 = vmatprep.mubr.bf16.mxu0 %v568
        %850 = vmatmul.mubr.bf16.gmra.mrb[0].mxu0 %v567
        %v851 = vpop.f32.mrb[0].mxu0
        %v852 = vadd.f32 0.0, %v851
        %v853 = vpop.f32.mrb[0].mxu0
        %v854 = vpop.f32.mrb[0].mxu0
        %v855 = vadd.f32 0.0, %v854
        %v856 = vpop.f32.mrb[0].mxu0
        %857 = vdwg.mxu0
        %v858 = vadd.f32 %v345, %v732
        %v859 = vadd.f32 %v346, %v735
        %v860 = vadd.f32 %v347, %v740
        %v861 = vadd.f32 %v348, %v743
        %v862 = vadd.f32 %v349, %v748
        %v863 = vadd.f32 %v350, %v751
        %v864 = vadd.f32 %v351, %v756
        %v865 = vadd.f32 %v352, %v759
        %v866 = vadd.f32 %v353, %v764
        %v867 = vadd.f32 %v354, %v767
        %v868 = vadd.f32 %v355, %v772
        %v869 = vadd.f32 %v356, %v775
        %v870 = vadd.f32 %v357, %v780
        %v871 = vadd.f32 %v358, %v783
        %v872 = vadd.f32 %v359, %v788
        %v873 = vadd.f32 %v360, %v791
        %v874 = vadd.f32 %v361, %v796
        %v875 = vadd.f32 %v362, %v799
        %v876 = vadd.f32 %v363, %v804
        %v877 = vadd.f32 %v364, %v807
        %v878 = vadd.f32 %v365, %v812
        %v879 = vadd.f32 %v366, %v815
        %v880 = vadd.f32 %v367, %v820
        %v881 = vadd.f32 %v368, %v823
        %v882 = vadd.f32 %v369, %v828
        %v883 = vadd.f32 %v370, %v831
        %v884 = vadd.f32 %v371, %v836
        %v885 = vadd.f32 %v372, %v839
        %v886 = vadd.f32 %v373, %v844
        %v887 = vadd.f32 %v374, %v847
        %v888 = vadd.f32 %v375, %v852
        %v889 = vadd.f32 %v376, %v855
        %890 = vst [vmem:[#allocation2] sm:$0xff] %v858
        %891 = vst [vmem:[#allocation2 + $0x8] sm:$0xff] %v859
        %892 = vst [vmem:[#allocation2 + $0x10] sm:$0xff] %v860
        %893 = vst [vmem:[#allocation2 + $0x18] sm:$0xff] %v861
        %894 = vst [vmem:[#allocation2 + $0x20] sm:$0xff] %v862
        %895 = vst [vmem:[#allocation2 + $0x28] sm:$0xff] %v863
        %896 = vst [vmem:[#allocation2 + $0x30] sm:$0xff] %v864
        %897 = vst [vmem:[#allocation2 + $0x38] sm:$0xff] %v865
        %898 = vst [vmem:[#allocation2 + $0x40] sm:$0xff] %v866
        %899 = vst [vmem:[#allocation2 + $0x48] sm:$0xff] %v867
        %900 = vst [vmem:[#allocation2 + $0x50] sm:$0xff] %v868
        %901 = vst [vmem:[#allocation2 + $0x58] sm:$0xff] %v869
        %902 = vst [vmem:[#allocation2 + $0x60] sm:$0xff] %v870
        %903 = vst [vmem:[#allocation2 + $0x68] sm:$0xff] %v871
        %904 = vst [vmem:[#allocation2 + $0x70] sm:$0xff] %v872
        %905 = vst [vmem:[#allocation2 + $0x78] sm:$0xff] %v873
        %906 = vst [vmem:[#allocation2 + $0x80] sm:$0xff] %v874
        %907 = vst [vmem:[#allocation2 + $0x88] sm:$0xff] %v875
        %908 = vst [vmem:[#allocation2 + $0x90] sm:$0xff] %v876
        %909 = vst [vmem:[#allocation2 + $0x98] sm:$0xff] %v877
        %910 = vst [vmem:[#allocation2 + $0xa0] sm:$0xff] %v878
        %911 = vst [vmem:[#allocation2 + $0xa8] sm:$0xff] %v879
        %912 = vst [vmem:[#allocation2 + $0xb0] sm:$0xff] %v880
        %913 = vst [vmem:[#allocation2 + $0xb8] sm:$0xff] %v881
        %914 = vst [vmem:[#allocation2 + $0xc0] sm:$0xff] %v882
        %915 = vst [vmem:[#allocation2 + $0xc8] sm:$0xff] %v883
        %916 = vst [vmem:[#allocation2 + $0xd0] sm:$0xff] %v884
        %917 = vst [vmem:[#allocation2 + $0xd8] sm:$0xff] %v885
        %918 = vst [vmem:[#allocation2 + $0xe0] sm:$0xff] %v886
        %919 = vst [vmem:[#allocation2 + $0xe8] sm:$0xff] %v887
        %920 = vst [vmem:[#allocation2 + $0xf0] sm:$0xff] %v888
        %921 = vst [vmem:[#allocation2 + $0xf8] sm:$0xff] %v889
        %p922 = scmp.eq.s32.totalorder %s27, 1
        // Predicated region
        $region57: #{classifier_forward.2} parent=35 // pred_check
          %p923 = pneg %p922
        $region58: #{classifier_forward.2} parent=35 // pred_check_branch
          %925 = sbr.rel (%p923) target = $region60
        $region59: #{classifier_forward.2} parent=35 // pred_region
          %v926 = vld [vmem:[#allocation2] sm:$0xff]
          %v927 = vld [vmem:[#allocation2 + $0x8] sm:$0xff]
          %v928 = vld [vmem:[#allocation2 + $0x10] sm:$0xff]
          %v929 = vld [vmem:[#allocation2 + $0x18] sm:$0xff]
          %v930 = vld [vmem:[#allocation2 + $0x20] sm:$0xff]
          %v931 = vld [vmem:[#allocation2 + $0x28] sm:$0xff]
          %v932 = vld [vmem:[#allocation2 + $0x30] sm:$0xff]
          %v933 = vld [vmem:[#allocation2 + $0x38] sm:$0xff]
          %v934 = vld [vmem:[#allocation2 + $0x40] sm:$0xff]
          %v935 = vld [vmem:[#allocation2 + $0x48] sm:$0xff]
          %v936 = vld [vmem:[#allocation2 + $0x50] sm:$0xff]
          %v937 = vld [vmem:[#allocation2 + $0x58] sm:$0xff]
          %v938 = vld [vmem:[#allocation2 + $0x60] sm:$0xff]
          %v939 = vld [vmem:[#allocation2 + $0x68] sm:$0xff]
          %v940 = vld [vmem:[#allocation2 + $0x70] sm:$0xff]
          %v941 = vld [vmem:[#allocation2 + $0x78] sm:$0xff]
          %v942 = vld [vmem:[#allocation2 + $0x80] sm:$0xff]
          %v943 = vld [vmem:[#allocation2 + $0x88] sm:$0xff]
          %v944 = vld [vmem:[#allocation2 + $0x90] sm:$0xff]
          %v945 = vld [vmem:[#allocation2 + $0x98] sm:$0xff]
          %v946 = vld [vmem:[#allocation2 + $0xa0] sm:$0xff]
          %v947 = vld [vmem:[#allocation2 + $0xa8] sm:$0xff]
          %v948 = vld [vmem:[#allocation2 + $0xb0] sm:$0xff]
          %v949 = vld [vmem:[#allocation2 + $0xb8] sm:$0xff]
          %v950 = vld [vmem:[#allocation2 + $0xc0] sm:$0xff]
          %v951 = vld [vmem:[#allocation2 + $0xc8] sm:$0xff]
          %v952 = vld [vmem:[#allocation2 + $0xd0] sm:$0xff]
          %v953 = vld [vmem:[#allocation2 + $0xd8] sm:$0xff]
          %v954 = vld [vmem:[#allocation2 + $0xe0] sm:$0xff]
          %v955 = vld [vmem:[#allocation2 + $0xe8] sm:$0xff]
          %v956 = vld [vmem:[#allocation2 + $0xf0] sm:$0xff]
          %v957 = vld [vmem:[#allocation2 + $0xf8] sm:$0xff]
          %v958 = vpack.c.bf16 %v927, %v926
          %v959 = vpack.c.bf16 %v929, %v928
          %v960 = vpack.c.bf16 %v931, %v930
          %v961 = vpack.c.bf16 %v933, %v932
          %v962 = vpack.c.bf16 %v935, %v934
          %v963 = vpack.c.bf16 %v937, %v936
          %v964 = vpack.c.bf16 %v939, %v938
          %v965 = vpack.c.bf16 %v941, %v940
          %v966 = vpack.c.bf16 %v943, %v942
          %v967 = vpack.c.bf16 %v945, %v944
          %v968 = vpack.c.bf16 %v947, %v946
          %v969 = vpack.c.bf16 %v949, %v948
          %v970 = vpack.c.bf16 %v951, %v950
          %v971 = vpack.c.bf16 %v953, %v952
          %v972 = vpack.c.bf16 %v955, %v954
          %v973 = vpack.c.bf16 %v957, %v956
          %v974 = vld [vmem:[#allocation7] sm:$0xf]
          %v975 = vld [vmem:[#allocation7 + $0x4] sm:$0xf]
          %v976 = vld [vmem:[#allocation7 + $0x8] sm:$0xf]
          %v977 = vld [vmem:[#allocation7 + $0xc] sm:$0xf]
          %v978 = vld [vmem:[#allocation7 + $0x10] sm:$0xf]
          %v979 = vld [vmem:[#allocation7 + $0x14] sm:$0xf]
          %v980 = vld [vmem:[#allocation7 + $0x18] sm:$0xf]
          %v981 = vld [vmem:[#allocation7 + $0x1c] sm:$0xf]
          %v982 = vld [vmem:[#allocation7 + $0x20] sm:$0xf]
          %v983 = vld [vmem:[#allocation7 + $0x24] sm:$0xf]
          %v984 = vld [vmem:[#allocation7 + $0x28] sm:$0xf]
          %v985 = vld [vmem:[#allocation7 + $0x2c] sm:$0xf]
          %v986 = vld [vmem:[#allocation7 + $0x30] sm:$0xf]
          %v987 = vld [vmem:[#allocation7 + $0x34] sm:$0xf]
          %v988 = vld [vmem:[#allocation7 + $0x38] sm:$0xf]
          %v989 = vld [vmem:[#allocation7 + $0x3c] sm:$0xf]
          %v1006 = vunpack.c.l.b16 %v974
          %v1007 = vunpack.c.l.b16 %v975
          %v1008 = vunpack.c.l.b16 %v976
          %v1009 = vunpack.c.l.b16 %v977
          %v1010 = vunpack.c.l.b16 %v978
          %v1011 = vunpack.c.l.b16 %v979
          %v1012 = vunpack.c.l.b16 %v980
          %v1013 = vunpack.c.l.b16 %v981
          %v1014 = vunpack.c.l.b16 %v982
          %v1015 = vunpack.c.l.b16 %v983
          %v1016 = vunpack.c.l.b16 %v984
          %v1017 = vunpack.c.l.b16 %v985
          %v1018 = vunpack.c.l.b16 %v986
          %v1019 = vunpack.c.l.b16 %v987
          %v1020 = vunpack.c.l.b16 %v988
          %v1021 = vunpack.c.l.b16 %v989
          %v1022 = vpack.c.b16 %v1007, %v1006
          %v1023 = vpack.c.b16 %v1009, %v1008
          %v1024 = vpack.c.b16 %v1011, %v1010
          %v1025 = vpack.c.b16 %v1013, %v1012
          %v1026 = vpack.c.b16 %v1015, %v1014
          %v1027 = vpack.c.b16 %v1017, %v1016
          %v1028 = vpack.c.b16 %v1019, %v1018
          %v1029 = vpack.c.b16 %v1021, %v1020
          %1038 = vmatprep.subr.bf16.mxu0 0
          %1039 = vmatpush1.bf16.msra.mxu0 %v1022
          %1040 = vmatprep.subr.bf16.mxu0 0
          %1041 = vmatpush1.bf16.msra.mxu0 %v1023
          %1042 = vmatprep.subr.bf16.mxu0 0
          %1043 = vmatpush1.bf16.msra.mxu0 %v1024
          %1044 = vmatprep.subr.bf16.mxu0 0
          %1045 = vmatpush1.bf16.msra.mxu0 %v1025
          %1046 = vmatprep.subr.bf16.mxu0 0
          %1047 = vmatpush1.bf16.msra.mxu0 %v1026
          %1048 = vmatprep.subr.bf16.mxu0 0
          %1049 = vmatpush1.bf16.msra.mxu0 %v1027
          %1050 = vmatprep.subr.bf16.mxu0 0
          %1051 = vmatpush1.bf16.msra.mxu0 %v1028
          %1052 = vmatprep.subr.bf16.mxu0 0
          %1053 = vmatpush1.bf16.msra.mxu0 %v1029
          %1054 = vmatprep.subr.bf16.mxu0 0
          %1055 = vmatpush1.bf16.msra.mxu0 0
          %1056 = vmatprep.subr.bf16.mxu0 0
          %1057 = vmatpush1.bf16.msra.mxu0 0
          %1058 = vmatprep.subr.bf16.mxu0 0
          %1059 = vmatpush1.bf16.msra.mxu0 0
          %1060 = vmatprep.subr.bf16.mxu0 0
          %1061 = vmatpush1.bf16.msra.mxu0 0
          %1062 = vmatprep.subr.bf16.mxu0 0
          %1063 = vmatpush1.bf16.msra.mxu0 0
          %1064 = vmatprep.subr.bf16.mxu0 0
          %1065 = vmatpush1.bf16.msra.mxu0 0
          %1066 = vmatprep.subr.bf16.mxu0 0
          %1067 = vmatpush1.bf16.msra.mxu0 0
          %1068 = vmatprep.subr.bf16.mxu0 0
          %1069 = vmatpush1.bf16.msra.mxu0 0
          %1070 = vmatprep.mubr.bf16.mxu0 0
          %1071 = vmatmul.mubr.bf16.gmra.mrb[0].mxu0 %v958
          %v1072 = vpop.f32.mrb[0].mxu0
          %v1073 = vadd.f32 0.0, %v1072
          %v1074 = vpop.f32.mrb[0].mxu0
          %v1075 = vpop.f32.mrb[0].mxu0
          %v1076 = vadd.f32 0.0, %v1075
          %v1077 = vpop.f32.mrb[0].mxu0
          %1078 = vmatprep.mubr.bf16.mxu0 0
          %1079 = vmatmul.mubr.bf16.gmra.mrb[0].mxu0 %v959
          %v1080 = vpop.f32.mrb[0].mxu0
          %v1081 = vadd.f32 0.0, %v1080
          %v1082 = vpop.f32.mrb[0].mxu0
          %v1083 = vpop.f32.mrb[0].mxu0
          %v1084 = vadd.f32 0.0, %v1083
          %v1085 = vpop.f32.mrb[0].mxu0
          %1086 = vmatprep.mubr.bf16.mxu0 0
          %1087 = vmatmul.mubr.bf16.gmra.mrb[0].mxu0 %v960
          %v1088 = vpop.f32.mrb[0].mxu0
          %v1089 = vadd.f32 0.0, %v1088
          %v1090 = vpop.f32.mrb[0].mxu0
          %v1091 = vpop.f32.mrb[0].mxu0
          %v1092 = vadd.f32 0.0, %v1091
          %v1093 = vpop.f32.mrb[0].mxu0
          %1094 = vmatprep.mubr.bf16.mxu0 0
          %1095 = vmatmul.mubr.bf16.gmra.mrb[0].mxu0 %v961
          %v1096 = vpop.f32.mrb[0].mxu0
          %v1097 = vadd.f32 0.0, %v1096
          %v1098 = vpop.f32.mrb[0].mxu0
          %v1099 = vpop.f32.mrb[0].mxu0
          %v1100 = vadd.f32 0.0, %v1099
          %v1101 = vpop.f32.mrb[0].mxu0
          %1102 = vmatprep.mubr.bf16.mxu0 0
          %1103 = vmatmul.mubr.bf16.gmra.mrb[0].mxu0 %v962
          %v1104 = vpop.f32.mrb[0].mxu0
          %v1105 = vadd.f32 0.0, %v1104
          %v1106 = vpop.f32.mrb[0].mxu0
          %v1107 = vpop.f32.mrb[0].mxu0
          %v1108 = vadd.f32 0.0, %v1107
          %v1109 = vpop.f32.mrb[0].mxu0
          %1110 = vmatprep.mubr.bf16.mxu0 0
          %1111 = vmatmul.mubr.bf16.gmra.mrb[0].mxu0 %v963
          %v1112 = vpop.f32.mrb[0].mxu0
          %v1113 = vadd.f32 0.0, %v1112
          %v1114 = vpop.f32.mrb[0].mxu0
          %v1115 = vpop.f32.mrb[0].mxu0
          %v1116 = vadd.f32 0.0, %v1115
          %v1117 = vpop.f32.mrb[0].mxu0
          %1118 = vmatprep.mubr.bf16.mxu0 0
          %1119 = vmatmul.mubr.bf16.gmra.mrb[0].mxu0 %v964
          %v1120 = vpop.f32.mrb[0].mxu0
          %v1121 = vadd.f32 0.0, %v1120
          %v1122 = vpop.f32.mrb[0].mxu0
          %v1123 = vpop.f32.mrb[0].mxu0
          %v1124 = vadd.f32 0.0, %v1123
          %v1125 = vpop.f32.mrb[0].mxu0
          %1126 = vmatprep.mubr.bf16.mxu0 0
          %1127 = vmatmul.mubr.bf16.gmra.mrb[0].mxu0 %v965
          %v1128 = vpop.f32.mrb[0].mxu0
          %v1129 = vadd.f32 0.0, %v1128
          %v1130 = vpop.f32.mrb[0].mxu0
          %v1131 = vpop.f32.mrb[0].mxu0
          %v1132 = vadd.f32 0.0, %v1131
          %v1133 = vpop.f32.mrb[0].mxu0
          %1134 = vmatprep.mubr.bf16.mxu0 0
          %1135 = vmatmul.mubr.bf16.gmra.mrb[0].mxu0 %v966
          %v1136 = vpop.f32.mrb[0].mxu0
          %v1137 = vadd.f32 0.0, %v1136
          %v1138 = vpop.f32.mrb[0].mxu0
          %v1139 = vpop.f32.mrb[0].mxu0
          %v1140 = vadd.f32 0.0, %v1139
          %v1141 = vpop.f32.mrb[0].mxu0
          %1142 = vmatprep.mubr.bf16.mxu0 0
          %1143 = vmatmul.mubr.bf16.gmra.mrb[0].mxu0 %v967
          %v1144 = vpop.f32.mrb[0].mxu0
          %v1145 = vadd.f32 0.0, %v1144
          %v1146 = vpop.f32.mrb[0].mxu0
          %v1147 = vpop.f32.mrb[0].mxu0
          %v1148 = vadd.f32 0.0, %v1147
          %v1149 = vpop.f32.mrb[0].mxu0
          %1150 = vmatprep.mubr.bf16.mxu0 0
          %1151 = vmatmul.mubr.bf16.gmra.mrb[0].mxu0 %v968
          %v1152 = vpop.f32.mrb[0].mxu0
          %v1153 = vadd.f32 0.0, %v1152
          %v1154 = vpop.f32.mrb[0].mxu0
          %v1155 = vpop.f32.mrb[0].mxu0
          %v1156 = vadd.f32 0.0, %v1155
          %v1157 = vpop.f32.mrb[0].mxu0
          %1158 = vmatprep.mubr.bf16.mxu0 0
          %1159 = vmatmul.mubr.bf16.gmra.mrb[0].mxu0 %v969
          %v1160 = vpop.f32.mrb[0].mxu0
          %v1161 = vadd.f32 0.0, %v1160
          %v1162 = vpop.f32.mrb[0].mxu0
          %v1163 = vpop.f32.mrb[0].mxu0
          %v1164 = vadd.f32 0.0, %v1163
          %v1165 = vpop.f32.mrb[0].mxu0
          %1166 = vmatprep.mubr.bf16.mxu0 0
          %1167 = vmatmul.mubr.bf16.gmra.mrb[0].mxu0 %v970
          %v1168 = vpop.f32.mrb[0].mxu0
          %v1169 = vadd.f32 0.0, %v1168
          %v1170 = vpop.f32.mrb[0].mxu0
          %v1171 = vpop.f32.mrb[0].mxu0
          %v1172 = vadd.f32 0.0, %v1171
          %v1173 = vpop.f32.mrb[0].mxu0
          %1174 = vmatprep.mubr.bf16.mxu0 0
          %1175 = vmatmul.mubr.bf16.gmra.mrb[0].mxu0 %v971
          %v1176 = vpop.f32.mrb[0].mxu0
          %v1177 = vadd.f32 0.0, %v1176
          %v1178 = vpop.f32.mrb[0].mxu0
          %v1179 = vpop.f32.mrb[0].mxu0
          %v1180 = vadd.f32 0.0, %v1179
          %v1181 = vpop.f32.mrb[0].mxu0
          %1182 = vmatprep.mubr.bf16.mxu0 0
          %1183 = vmatmul.mubr.bf16.gmra.mrb[0].mxu0 %v972
          %v1184 = vpop.f32.mrb[0].mxu0
          %v1185 = vadd.f32 0.0, %v1184
          %v1186 = vpop.f32.mrb[0].mxu0
          %v1187 = vpop.f32.mrb[0].mxu0
          %v1188 = vadd.f32 0.0, %v1187
          %v1189 = vpop.f32.mrb[0].mxu0
          %1190 = vmatprep.mubr.bf16.mxu0 0
          %1191 = vmatmul.mubr.bf16.gmra.mrb[0].mxu0 %v973
          %v1192 = vpop.f32.mrb[0].mxu0
          %v1193 = vadd.f32 0.0, %v1192
          %v1194 = vpop.f32.mrb[0].mxu0
          %v1195 = vpop.f32.mrb[0].mxu0
          %v1196 = vadd.f32 0.0, %v1195
          %v1197 = vpop.f32.mrb[0].mxu0
          %1198 = vdwg.mxu0
          %v1199 = vmax.f32 %v1073, 0.0
          %v1200 = vmax.f32 %v1076, 0.0
          %v1201 = vmax.f32 %v1081, 0.0
          %v1202 = vmax.f32 %v1084, 0.0
          %v1203 = vmax.f32 %v1089, 0.0
          %v1204 = vmax.f32 %v1092, 0.0
          %v1205 = vmax.f32 %v1097, 0.0
          %v1206 = vmax.f32 %v1100, 0.0
          %v1207 = vmax.f32 %v1105, 0.0
          %v1208 = vmax.f32 %v1108, 0.0
          %v1209 = vmax.f32 %v1113, 0.0
          %v1210 = vmax.f32 %v1116, 0.0
          %v1211 = vmax.f32 %v1121, 0.0
          %v1212 = vmax.f32 %v1124, 0.0
          %v1213 = vmax.f32 %v1129, 0.0
          %v1214 = vmax.f32 %v1132, 0.0
          %v1215 = vmax.f32 %v1137, 0.0
          %v1216 = vmax.f32 %v1140, 0.0
          %v1217 = vmax.f32 %v1145, 0.0
          %v1218 = vmax.f32 %v1148, 0.0
          %v1219 = vmax.f32 %v1153, 0.0
          %v1220 = vmax.f32 %v1156, 0.0
          %v1221 = vmax.f32 %v1161, 0.0
          %v1222 = vmax.f32 %v1164, 0.0
          %v1223 = vmax.f32 %v1169, 0.0
          %v1224 = vmax.f32 %v1172, 0.0
          %v1225 = vmax.f32 %v1177, 0.0
          %v1226 = vmax.f32 %v1180, 0.0
          %v1227 = vmax.f32 %v1185, 0.0
          %v1228 = vmax.f32 %v1188, 0.0
          %v1229 = vmax.f32 %v1193, 0.0
          %v1230 = vmax.f32 %v1196, 0.0
          %v1231 = vpack.c.bf16 %v1200, %v1199
          %v1232 = vpack.c.bf16 %v1202, %v1201
          %v1233 = vpack.c.bf16 %v1204, %v1203
          %v1234 = vpack.c.bf16 %v1206, %v1205
          %v1235 = vpack.c.bf16 %v1208, %v1207
          %v1236 = vpack.c.bf16 %v1210, %v1209
          %v1237 = vpack.c.bf16 %v1212, %v1211
          %v1238 = vpack.c.bf16 %v1214, %v1213
          %v1239 = vpack.c.bf16 %v1216, %v1215
          %v1240 = vpack.c.bf16 %v1218, %v1217
          %v1241 = vpack.c.bf16 %v1220, %v1219
          %v1242 = vpack.c.bf16 %v1222, %v1221
          %v1243 = vpack.c.bf16 %v1224, %v1223
          %v1244 = vpack.c.bf16 %v1226, %v1225
          %v1245 = vpack.c.bf16 %v1228, %v1227
          %v1246 = vpack.c.bf16 %v1230, %v1229
          %v1247 = vld [vmem:[#allocation8] sm:$0xf]
          %v1248 = vld [vmem:[#allocation8 + $0x4] sm:$0xf]
          %v1249 = vld [vmem:[#allocation8 + $0x8] sm:$0xf]
          %v1250 = vld [vmem:[#allocation8 + $0xc] sm:$0xf]
          %v1251 = vld [vmem:[#allocation8 + $0x10] sm:$0xf]
          %v1252 = vld [vmem:[#allocation8 + $0x14] sm:$0xf]
          %v1253 = vld [vmem:[#allocation8 + $0x18] sm:$0xf]
          %v1254 = vld [vmem:[#allocation8 + $0x1c] sm:$0xf]
          %v1255 = vld [vmem:[#allocation8 + $0x20] sm:$0xf]
          %v1256 = vld [vmem:[#allocation8 + $0x24] sm:$0xf]
          %v1257 = vld [vmem:[#allocation8 + $0x28] sm:$0xf]
          %v1258 = vld [vmem:[#allocation8 + $0x2c] sm:$0xf]
          %v1259 = vld [vmem:[#allocation8 + $0x30] sm:$0xf]
          %v1260 = vld [vmem:[#allocation8 + $0x34] sm:$0xf]
          %v1261 = vld [vmem:[#allocation8 + $0x38] sm:$0xf]
          %v1262 = vld [vmem:[#allocation8 + $0x3c] sm:$0xf]
          %v1279 = vunpack.c.l.b16 %v1247
          %v1280 = vunpack.c.l.b16 %v1248
          %v1281 = vunpack.c.l.b16 %v1249
          %v1282 = vunpack.c.l.b16 %v1250
          %v1283 = vunpack.c.l.b16 %v1251
          %v1284 = vunpack.c.l.b16 %v1252
          %v1285 = vunpack.c.l.b16 %v1253
          %v1286 = vunpack.c.l.b16 %v1254
          %v1287 = vunpack.c.l.b16 %v1255
          %v1288 = vunpack.c.l.b16 %v1256
          %v1289 = vunpack.c.l.b16 %v1257
          %v1290 = vunpack.c.l.b16 %v1258
          %v1291 = vunpack.c.l.b16 %v1259
          %v1292 = vunpack.c.l.b16 %v1260
          %v1293 = vunpack.c.l.b16 %v1261
          %v1294 = vunpack.c.l.b16 %v1262
          %v1295 = vpack.c.b16 %v1280, %v1279
          %v1296 = vpack.c.b16 %v1282, %v1281
          %v1297 = vpack.c.b16 %v1284, %v1283
          %v1298 = vpack.c.b16 %v1286, %v1285
          %v1299 = vpack.c.b16 %v1288, %v1287
          %v1300 = vpack.c.b16 %v1290, %v1289
          %v1301 = vpack.c.b16 %v1292, %v1291
          %v1302 = vpack.c.b16 %v1294, %v1293
          %1311 = vmatprep.subr.bf16.mxu0 0
          %1312 = vmatpush1.bf16.msra.mxu0 %v1295
          %1313 = vmatprep.subr.bf16.mxu0 0
          %1314 = vmatpush1.bf16.msra.mxu0 %v1296
          %1315 = vmatprep.subr.bf16.mxu0 0
          %1316 = vmatpush1.bf16.msra.mxu0 %v1297
          %1317 = vmatprep.subr.bf16.mxu0 0
          %1318 = vmatpush1.bf16.msra.mxu0 %v1298
          %1319 = vmatprep.subr.bf16.mxu0 0
          %1320 = vmatpush1.bf16.msra.mxu0 %v1299
          %1321 = vmatprep.subr.bf16.mxu0 0
          %1322 = vmatpush1.bf16.msra.mxu0 %v1300
          %1323 = vmatprep.subr.bf16.mxu0 0
          %1324 = vmatpush1.bf16.msra.mxu0 %v1301
          %1325 = vmatprep.subr.bf16.mxu0 0
          %1326 = vmatpush1.bf16.msra.mxu0 %v1302
          %1327 = vmatprep.subr.bf16.mxu0 0
          %1328 = vmatpush1.bf16.msra.mxu0 0
          %1329 = vmatprep.subr.bf16.mxu0 0
          %1330 = vmatpush1.bf16.msra.mxu0 0
          %1331 = vmatprep.subr.bf16.mxu0 0
          %1332 = vmatpush1.bf16.msra.mxu0 0
          %1333 = vmatprep.subr.bf16.mxu0 0
          %1334 = vmatpush1.bf16.msra.mxu0 0
          %1335 = vmatprep.subr.bf16.mxu0 0
          %1336 = vmatpush1.bf16.msra.mxu0 0
          %1337 = vmatprep.subr.bf16.mxu0 0
          %1338 = vmatpush1.bf16.msra.mxu0 0
          %1339 = vmatprep.subr.bf16.mxu0 0
          %1340 = vmatpush1.bf16.msra.mxu0 0
          %1341 = vmatprep.subr.bf16.mxu0 0
          %1342 = vmatpush1.bf16.msra.mxu0 0
          %1343 = vmatprep.mubr.bf16.mxu0 0
          %1344 = vmatmul.mubr.bf16.gmra.mrb[0].mxu0 %v1231
          %v1345 = vpop.f32.mrb[0].mxu0
          %v1346 = vadd.f32 0.0, %v1345
          %v1347 = vpop.f32.mrb[0].mxu0
          %v1348 = vpop.f32.mrb[0].mxu0
          %v1349 = vadd.f32 0.0, %v1348
          %v1350 = vpop.f32.mrb[0].mxu0
          %1351 = vmatprep.mubr.bf16.mxu0 0
          %1352 = vmatmul.mubr.bf16.gmra.mrb[0].mxu0 %v1232
          %v1353 = vpop.f32.mrb[0].mxu0
          %v1354 = vadd.f32 0.0, %v1353
          %v1355 = vpop.f32.mrb[0].mxu0
          %v1356 = vpop.f32.mrb[0].mxu0
          %v1357 = vadd.f32 0.0, %v1356
          %v1358 = vpop.f32.mrb[0].mxu0
          %1359 = vmatprep.mubr.bf16.mxu0 0
          %1360 = vmatmul.mubr.bf16.gmra.mrb[0].mxu0 %v1233
          %v1361 = vpop.f32.mrb[0].mxu0
          %v1362 = vadd.f32 0.0, %v1361
          %v1363 = vpop.f32.mrb[0].mxu0
          %v1364 = vpop.f32.mrb[0].mxu0
          %v1365 = vadd.f32 0.0, %v1364
          %v1366 = vpop.f32.mrb[0].mxu0
          %1367 = vmatprep.mubr.bf16.mxu0 0
          %1368 = vmatmul.mubr.bf16.gmra.mrb[0].mxu0 %v1234
          %v1369 = vpop.f32.mrb[0].mxu0
          %v1370 = vadd.f32 0.0, %v1369
          %v1371 = vpop.f32.mrb[0].mxu0
          %v1372 = vpop.f32.mrb[0].mxu0
          %v1373 = vadd.f32 0.0, %v1372
          %v1374 = vpop.f32.mrb[0].mxu0
          %1375 = vmatprep.mubr.bf16.mxu0 0
          %1376 = vmatmul.mubr.bf16.gmra.mrb[0].mxu0 %v1235
          %v1377 = vpop.f32.mrb[0].mxu0
          %v1378 = vadd.f32 0.0, %v1377
          %v1379 = vpop.f32.mrb[0].mxu0
          %v1380 = vpop.f32.mrb[0].mxu0
          %v1381 = vadd.f32 0.0, %v1380
          %v1382 = vpop.f32.mrb[0].mxu0
          %1383 = vmatprep.mubr.bf16.mxu0 0
          %1384 = vmatmul.mubr.bf16.gmra.mrb[0].mxu0 %v1236
          %v1385 = vpop.f32.mrb[0].mxu0
          %v1386 = vadd.f32 0.0, %v1385
          %v1387 = vpop.f32.mrb[0].mxu0
          %v1388 = vpop.f32.mrb[0].mxu0
          %v1389 = vadd.f32 0.0, %v1388
          %v1390 = vpop.f32.mrb[0].mxu0
          %1391 = vmatprep.mubr.bf16.mxu0 0
          %1392 = vmatmul.mubr.bf16.gmra.mrb[0].mxu0 %v1237
          %v1393 = vpop.f32.mrb[0].mxu0
          %v1394 = vadd.f32 0.0, %v1393
          %v1395 = vpop.f32.mrb[0].mxu0
          %v1396 = vpop.f32.mrb[0].mxu0
          %v1397 = vadd.f32 0.0, %v1396
          %v1398 = vpop.f32.mrb[0].mxu0
          %1399 = vmatprep.mubr.bf16.mxu0 0
          %1400 = vmatmul.mubr.bf16.gmra.mrb[0].mxu0 %v1238
          %v1401 = vpop.f32.mrb[0].mxu0
          %v1402 = vadd.f32 0.0, %v1401
          %v1403 = vpop.f32.mrb[0].mxu0
          %v1404 = vpop.f32.mrb[0].mxu0
          %v1405 = vadd.f32 0.0, %v1404
          %v1406 = vpop.f32.mrb[0].mxu0
          %1407 = vmatprep.mubr.bf16.mxu0 0
          %1408 = vmatmul.mubr.bf16.gmra.mrb[0].mxu0 %v1239
          %v1409 = vpop.f32.mrb[0].mxu0
          %v1410 = vadd.f32 0.0, %v1409
          %v1411 = vpop.f32.mrb[0].mxu0
          %v1412 = vpop.f32.mrb[0].mxu0
          %v1413 = vadd.f32 0.0, %v1412
          %v1414 = vpop.f32.mrb[0].mxu0
          %1415 = vmatprep.mubr.bf16.mxu0 0
          %1416 = vmatmul.mubr.bf16.gmra.mrb[0].mxu0 %v1240
          %v1417 = vpop.f32.mrb[0].mxu0
          %v1418 = vadd.f32 0.0, %v1417
          %v1419 = vpop.f32.mrb[0].mxu0
          %v1420 = vpop.f32.mrb[0].mxu0
          %v1421 = vadd.f32 0.0, %v1420
          %v1422 = vpop.f32.mrb[0].mxu0
          %1423 = vmatprep.mubr.bf16.mxu0 0
          %1424 = vmatmul.mubr.bf16.gmra.mrb[0].mxu0 %v1241
          %v1425 = vpop.f32.mrb[0].mxu0
          %v1426 = vadd.f32 0.0, %v1425
          %v1427 = vpop.f32.mrb[0].mxu0
          %v1428 = vpop.f32.mrb[0].mxu0
          %v1429 = vadd.f32 0.0, %v1428
          %v1430 = vpop.f32.mrb[0].mxu0
          %1431 = vmatprep.mubr.bf16.mxu0 0
          %1432 = vmatmul.mubr.bf16.gmra.mrb[0].mxu0 %v1242
          %v1433 = vpop.f32.mrb[0].mxu0
          %v1434 = vadd.f32 0.0, %v1433
          %v1435 = vpop.f32.mrb[0].mxu0
          %v1436 = vpop.f32.mrb[0].mxu0
          %v1437 = vadd.f32 0.0, %v1436
          %v1438 = vpop.f32.mrb[0].mxu0
          %1439 = vmatprep.mubr.bf16.mxu0 0
          %1440 = vmatmul.mubr.bf16.gmra.mrb[0].mxu0 %v1243
          %v1441 = vpop.f32.mrb[0].mxu0
          %v1442 = vadd.f32 0.0, %v1441
          %v1443 = vpop.f32.mrb[0].mxu0
          %v1444 = vpop.f32.mrb[0].mxu0
          %v1445 = vadd.f32 0.0, %v1444
          %v1446 = vpop.f32.mrb[0].mxu0
          %1447 = vmatprep.mubr.bf16.mxu0 0
          %1448 = vmatmul.mubr.bf16.gmra.mrb[0].mxu0 %v1244
          %v1449 = vpop.f32.mrb[0].mxu0
          %v1450 = vadd.f32 0.0, %v1449
          %v1451 = vpop.f32.mrb[0].mxu0
          %v1452 = vpop.f32.mrb[0].mxu0
          %v1453 = vadd.f32 0.0, %v1452
          %v1454 = vpop.f32.mrb[0].mxu0
          %1455 = vmatprep.mubr.bf16.mxu0 0
          %1456 = vmatmul.mubr.bf16.gmra.mrb[0].mxu0 %v1245
          %v1457 = vpop.f32.mrb[0].mxu0
          %v1458 = vadd.f32 0.0, %v1457
          %v1459 = vpop.f32.mrb[0].mxu0
          %v1460 = vpop.f32.mrb[0].mxu0
          %v1461 = vadd.f32 0.0, %v1460
          %v1462 = vpop.f32.mrb[0].mxu0
          %1463 = vmatprep.mubr.bf16.mxu0 0
          %1464 = vmatmul.mubr.bf16.gmra.mrb[0].mxu0 %v1246
          %v1465 = vpop.f32.mrb[0].mxu0
          %v1466 = vadd.f32 0.0, %v1465
          %v1467 = vpop.f32.mrb[0].mxu0
          %v1468 = vpop.f32.mrb[0].mxu0
          %v1469 = vadd.f32 0.0, %v1468
          %v1470 = vpop.f32.mrb[0].mxu0
          %1471 = vdwg.mxu0
          %v1472 = vpack.c.bf16 %v1349, %v1346
          %v1473 = vpack.c.bf16 %v1357, %v1354
          %v1474 = vpack.c.bf16 %v1365, %v1362
          %v1475 = vpack.c.bf16 %v1373, %v1370
          %v1476 = vpack.c.bf16 %v1381, %v1378
          %v1477 = vpack.c.bf16 %v1389, %v1386
          %v1478 = vpack.c.bf16 %v1397, %v1394
          %v1479 = vpack.c.bf16 %v1405, %v1402
          %v1480 = vpack.c.bf16 %v1413, %v1410
          %v1481 = vpack.c.bf16 %v1421, %v1418
          %v1482 = vpack.c.bf16 %v1429, %v1426
          %v1483 = vpack.c.bf16 %v1437, %v1434
          %v1484 = vpack.c.bf16 %v1445, %v1442
          %v1485 = vpack.c.bf16 %v1453, %v1450
          %v1486 = vpack.c.bf16 %v1461, %v1458
          %v1487 = vpack.c.bf16 %v1469, %v1466
          %v1504 = vunpack.c.l.b16 %v1472
          %v1505 = vunpack.c.h.b16 %v1472
          %v1506 = vunpack.c.l.b16 %v1473
          %v1507 = vunpack.c.h.b16 %v1473
          %v1508 = vunpack.c.l.b16 %v1474
          %v1509 = vunpack.c.h.b16 %v1474
          %v1510 = vunpack.c.l.b16 %v1475
          %v1511 = vunpack.c.h.b16 %v1475
          %v1512 = vunpack.c.l.b16 %v1476
          %v1513 = vunpack.c.h.b16 %v1476
          %v1514 = vunpack.c.l.b16 %v1477
          %v1515 = vunpack.c.h.b16 %v1477
          %v1516 = vunpack.c.l.b16 %v1478
          %v1517 = vunpack.c.h.b16 %v1478
          %v1518 = vunpack.c.l.b16 %v1479
          %v1519 = vunpack.c.h.b16 %v1479
          %v1520 = vunpack.c.l.b16 %v1480
          %v1521 = vunpack.c.h.b16 %v1480
          %v1522 = vunpack.c.l.b16 %v1481
          %v1523 = vunpack.c.h.b16 %v1481
          %v1524 = vunpack.c.l.b16 %v1482
          %v1525 = vunpack.c.h.b16 %v1482
          %v1526 = vunpack.c.l.b16 %v1483
          %v1527 = vunpack.c.h.b16 %v1483
          %v1528 = vunpack.c.l.b16 %v1484
          %v1529 = vunpack.c.h.b16 %v1484
          %v1530 = vunpack.c.l.b16 %v1485
          %v1531 = vunpack.c.h.b16 %v1485
          %v1532 = vunpack.c.l.b16 %v1486
          %v1533 = vunpack.c.h.b16 %v1486
          %v1534 = vunpack.c.l.b16 %v1487
          %v1535 = vunpack.c.h.b16 %v1487
          %v1536 = vpack.c.b16 %v1504, %v1504
          %v1537 = vpack.c.b16 %v1505, %v1505
          %v1538 = vpack.c.b16 %v1506, %v1506
          %v1539 = vpack.c.b16 %v1507, %v1507
          %v1540 = vpack.c.b16 %v1508, %v1508
          %v1541 = vpack.c.b16 %v1509, %v1509
          %v1542 = vpack.c.b16 %v1510, %v1510
          %v1543 = vpack.c.b16 %v1511, %v1511
          %v1544 = vpack.c.b16 %v1512, %v1512
          %v1545 = vpack.c.b16 %v1513, %v1513
          %v1546 = vpack.c.b16 %v1514, %v1514
          %v1547 = vpack.c.b16 %v1515, %v1515
          %v1548 = vpack.c.b16 %v1516, %v1516
          %v1549 = vpack.c.b16 %v1517, %v1517
          %v1550 = vpack.c.b16 %v1518, %v1518
          %v1551 = vpack.c.b16 %v1519, %v1519
          %v1552 = vpack.c.b16 %v1520, %v1520
          %v1553 = vpack.c.b16 %v1521, %v1521
          %v1554 = vpack.c.b16 %v1522, %v1522
          %v1555 = vpack.c.b16 %v1523, %v1523
          %v1556 = vpack.c.b16 %v1524, %v1524
          %v1557 = vpack.c.b16 %v1525, %v1525
          %v1558 = vpack.c.b16 %v1526, %v1526
          %v1559 = vpack.c.b16 %v1527, %v1527
          %v1560 = vpack.c.b16 %v1528, %v1528
          %v1561 = vpack.c.b16 %v1529, %v1529
          %v1562 = vpack.c.b16 %v1530, %v1530
          %v1563 = vpack.c.b16 %v1531, %v1531
          %v1564 = vpack.c.b16 %v1532, %v1532
          %v1565 = vpack.c.b16 %v1533, %v1533
          %v1566 = vpack.c.b16 %v1534, %v1534
          %v1567 = vpack.c.b16 %v1535, %v1535
          %1600 = vst [vmem:[%s306] sm:$0xf] %v1536
          %1601 = vst [vmem:[%s306 + $0x4] sm:$0xf] %v1537
          %1602 = vst [vmem:[%s306 + $0x8] sm:$0xf] %v1538
          %1603 = vst [vmem:[%s306 + $0xc] sm:$0xf] %v1539
          %1604 = vst [vmem:[%s306 + $0x10] sm:$0xf] %v1540
          %1605 = vst [vmem:[%s306 + $0x14] sm:$0xf] %v1541
          %1606 = vst [vmem:[%s306 + $0x18] sm:$0xf] %v1542
          %1607 = vst [vmem:[%s306 + $0x1c] sm:$0xf] %v1543
          %1608 = vst [vmem:[%s306 + $0x20] sm:$0xf] %v1544
          %1609 = vst [vmem:[%s306 + $0x24] sm:$0xf] %v1545
          %1610 = vst [vmem:[%s306 + $0x28] sm:$0xf] %v1546
          %1611 = vst [vmem:[%s306 + $0x2c] sm:$0xf] %v1547
          %1612 = vst [vmem:[%s306 + $0x30] sm:$0xf] %v1548
          %1613 = vst [vmem:[%s306 + $0x34] sm:$0xf] %v1549
          %1614 = vst [vmem:[%s306 + $0x38] sm:$0xf] %v1550
          %1615 = vst [vmem:[%s306 + $0x3c] sm:$0xf] %v1551
          %1616 = vst [vmem:[%s306 + $0x40] sm:$0xf] %v1552
          %1617 = vst [vmem:[%s306 + $0x44] sm:$0xf] %v1553
          %1618 = vst [vmem:[%s306 + $0x48] sm:$0xf] %v1554
          %1619 = vst [vmem:[%s306 + $0x4c] sm:$0xf] %v1555
          %1620 = vst [vmem:[%s306 + $0x50] sm:$0xf] %v1556
          %1621 = vst [vmem:[%s306 + $0x54] sm:$0xf] %v1557
          %1622 = vst [vmem:[%s306 + $0x58] sm:$0xf] %v1558
          %1623 = vst [vmem:[%s306 + $0x5c] sm:$0xf] %v1559
          %1624 = vst [vmem:[%s306 + $0x60] sm:$0xf] %v1560
          %1625 = vst [vmem:[%s306 + $0x64] sm:$0xf] %v1561
          %1626 = vst [vmem:[%s306 + $0x68] sm:$0xf] %v1562
          %1627 = vst [vmem:[%s306 + $0x6c] sm:$0xf] %v1563
          %1628 = vst [vmem:[%s306 + $0x70] sm:$0xf] %v1564
          %1629 = vst [vmem:[%s306 + $0x74] sm:$0xf] %v1565
          %1630 = vst [vmem:[%s306 + $0x78] sm:$0xf] %v1566
          %1631 = vst [vmem:[%s306 + $0x7c] sm:$0xf] %v1567
        $region60: #{classifier_forward.2} parent=35 // pred_fallthru
          _
        %s1632 = smul.u32 32, %s26
        %p1633 = scmp.lt.s32.totalorder %s1632, 63
        %s1634 = scalar_select %p1633, %s1632, 63
        %s1635 = smul.addr %s1634, 4
        %s1636 = scalar_lea.vmem %s4, %s1635
        // Predicated region
        $region61: #{classifier_forward.2} parent=35 // pred_check
          %p1637 = pneg %p148
        $region62: #{classifier_forward.2} parent=35 // pred_check_branch
          %1639 = sbr.rel (%p1637) target = $region64
        $region63: #{classifier_forward.2} parent=35 // pred_region
          %s1640 = smul.u32 32, %s26
        $region64: #{classifier_forward.2} parent=35 // pred_fallthru
          _
      $region36: #{classifier_forward.2} parent=5 // pred_fallthru
        _
      %p1641 = scmp.le.s32.totalorder 2, %s17
      // Predicated region
      $region65: #{classifier_forward.2} parent=5 // pred_check
        %p1642 = pneg %p1641
      $region66: #{classifier_forward.2} parent=5 // pred_check_branch
        %1644 = sbr.rel (%p1642) target = $region68
      $region67: #{classifier_forward.2} parent=5 // pred_region
        %s1645 = ssub.s32 %s17, 2
        // Predicated region
        $region69: #{classifier_forward.2} parent=67 // pred_check
          %p1646 = pneg %p154
        $region70: #{classifier_forward.2} parent=67 // pred_check_branch
          %1648 = sbr.rel (%p1646) target = $region72
        $region71: #{classifier_forward.2} parent=67 // pred_region
          %s1649 = smul.u32 32, %s28
          %p1650 = scmp.lt.s32.totalorder %s1649, 63
          %s1651 = scalar_select %p1650, %s1649, 63
          %s1652 = smul.addr %s1651, 4
          %s1653 = scalar_lea.vmem %s4, %s1652
        $region72: #{classifier_forward.2} parent=67 // pred_fallthru
          _
      $region68: #{classifier_forward.2} parent=5 // pred_fallthru
        _
    $region6: #{classifier_forward.2} parent=1 // loop_footer
      %s21 = sadd.s32 1, %s17
    $region7: #{classifier_forward.2} parent=1 // loop_footer_branch
      %16 = sbr.rel target = $region3
    $region8: #{classifier_forward.2} parent=1 // loop_exit
      _
    %1654 = vsyncpa [#allocation4], 1
    %s1655 = scalar_lea.sflag [#allocation4], 1
    %1656 = vsyncpa %s1655, 1
    %1657 = vsyncpa [#allocation6], 1
    %s1658 = scalar_lea.sflag [#allocation6], 1
    %1659 = vsyncpa %s1658, 1
    %1660 = vsyncpa [#allocation9], 1

</llo_original>
